<compile_context>
chip_gen: v7x
topology: tpu7x:2x2x1
jax: 0.10.0
libtpu: 0.0.40
codegen_flags: <defaults>
</compile_context>

<pallas_src>
import jax
import jax.numpy as jnp
from jax import lax
from jax.experimental import pallas as pl
from jax.experimental.pallas import tpu as pltpu

EPS = 1e-5       # torch.nn.BatchNorm1d default eps
F_IN = 1000      # input features (kept at 1000 inside the kernel; no K pad)
D1 = 512
D2 = 256
D_OUT = 65       # true output width
D_PAD = 128      # lane-dense, padded output width


# --------------------------------------------------------------------------- #
# Kernel: three fused (matmul + bias + ReLU) layers; BN already folded into W/b.
# --------------------------------------------------------------------------- #
def classifier_kernel(x_ref, w1_ref, b1_ref, w2_ref, b2_ref, w3_ref, b3_ref, o_ref):
    # Cast x to the compute dtype on the VPU (negligible vs. the matmuls);
    # this keeps the x DMA at the caller's dtype with no wrapper-side copy.
    x = x_ref[...].astype(w1_ref.dtype)

    # Linear(1000 -> 512) [BN folded] + ReLU   (Dropout = identity in eval)
    h = jnp.dot(x, w1_ref[...], preferred_element_type=jnp.float32) + b1_ref[...]
    h = jnp.maximum(h, 0.0).astype(w2_ref.dtype)

    # Linear(512 -> 256) [BN folded] + ReLU    (Dropout = identity in eval)
    h = jnp.dot(h, w2_ref[...], preferred_element_type=jnp.float32) + b2_ref[...]
    h = jnp.maximum(h, 0.0).astype(w3_ref.dtype)

    # Linear(256 -> 128 padded); columns 65..127 are zero weights/bias.
    o_ref[...] = (
        jnp.dot(h, w3_ref[...], preferred_element_type=jnp.float32) + b3_ref[...]
    ).astype(o_ref.dtype)


# --------------------------------------------------------------------------- #
# One-time (model-load-time) parameter preparation: BN fold + pad + cast.
# --------------------------------------------------------------------------- #
def prepare_params(params, compute_dtype=jnp.bfloat16):
    """Fold eval-mode BatchNorm into the preceding Linear, zero-pad the last layer
    to 128 output lanes, and cast weights to compute_dtype (biases stay f32).
    Call once at model-load time; the result is reused for every forward call."""
    (w1, b1, g1, be1, m1, v1,
     w2, b2, g2, be2, m2, v2,
     w3, b3) = params

    def fold(w, b, g, be, m, v):
        s = g * lax.rsqrt(v + EPS)          # (1, out)
        return w * s, (b - m) * s + be      # (in, out), (1, out)

    w1f, b1f = fold(w1, b1, g1, be1, m1, v1)
    w2f, b2f = fold(w2, b2, g2, be2, m2, v2)

    w3p = jnp.zeros((D2, D_PAD), jnp.float32).at[:, :D_OUT].set(w3)
    b3p = jnp.zeros((1, D_PAD), jnp.float32).at[:, :D_OUT].set(b3)

    return (w1f.astype(compute_dtype), b1f.astype(jnp.float32),
            w2f.astype(compute_dtype), b2f.astype(jnp.float32),
            w3p.astype(compute_dtype), b3p.astype(jnp.float32))


def _choose_tb(n, target=512):
    """Batch tile: multiple of 8, <= target, and small enough that the grid has
    >= 2 steps when possible (v7x shards the 'parallel' axis across its 2 TCs)."""
    tb = min(target, ((pl.cdiv(n, 2) + 7) // 8) * 8)
    tb = max(tb, 8)
    if tb >= n:          # tiny batch: single full-extent block (always legal)
        tb = n
    return tb


# --------------------------------------------------------------------------- #
# Wrapper: BlockSpecs + pallas_call (no per-call weight work, no x copy).
# --------------------------------------------------------------------------- #
def classifier_forward(x, prepared_params, *, tb=None):
    """x: (N, 1000) float32 (or bfloat16). prepared_params: from prepare_params().
    Returns (N, 65) float32."""
    n, f_in = x.shape
    assert f_in == F_IN
    w1, b1, w2, b2, w3, b3 = prepared_params

    if tb is None:
        tb = _choose_tb(n)
    grid = (pl.cdiv(n, tb),)

    def const(shape):
        # Grid-invariant block: fetched once; single-buffered to save VMEM.
        return pl.BlockSpec(shape, lambda i: (0, 0),
                            pipeline_mode=pl.Buffered(1))

    in_specs = [
        pl.BlockSpec((tb, F_IN), lambda i: (i, 0)),   # x, tiled over batch only
        const((F_IN, D1)), const((1, D1)),
        const((D1, D2)), const((1, D2)),
        const((D2, D_PAD)), const((1, D_PAD)),
    ]

    w_itemsize = jnp.dtype(w1.dtype).itemsize
    flops = 2 * n * (F_IN * D1 + D1 * D2 + D2 * D_PAD)
    bytes_accessed = (
        n * F_IN * x.dtype.itemsize                         # x (no pad, no copy)
        + (F_IN * D1 + D1 * D2 + D2 * D_PAD) * w_itemsize   # weights
        + (D1 + D2 + D_PAD) * 4                             # biases (f32)
        + n * D_PAD * 4                                     # output (f32)
    )

    out_padded = pl.pallas_call(
        classifier_kernel,
        out_shape=jax.ShapeDtypeStruct((n, D_PAD), jnp.float32),
        grid_spec=pltpu.PrefetchScalarGridSpec(
            num_scalar_prefetch=0,
            grid=grid,
            in_specs=in_specs,
            out_specs=pl.BlockSpec((tb, D_PAD), lambda i: (i, 0)),
        ),
        compiler_params=pltpu.CompilerParams(
            dimension_semantics=("parallel",),
        ),
        cost_estimate=pl.CostEstimate(
            flops=flops, transcendentals=0, bytes_accessed=bytes_accessed),
    )(x, w1, b1, w2, b2, w3, b3)

    return out_padded[:, :D_OUT]


# --------------------------------------------------------------------------- #
# Deterministic synthetic parameters (torch shapes; Linear stored as (in, out)).
# --------------------------------------------------------------------------- #
def init_params(key):
    keys = jax.random.split(key, 16)

    def lin(kw, kb, fan_in, fan_out):
        bound = 1.0 / (fan_in ** 0.5)
        w = jax.random.uniform(kw, (fan_in, fan_out), jnp.float32, -bound, bound)
        b = jax.random.uniform(kb, (1, fan_out), jnp.float32, -bound, bound)
        return w, b

    def bn(kg, kb, km, kv, feat):
        gamma = 1.0 + 0.1 * jax.random.normal(kg, (1, feat), jnp.float32)
        beta = 0.1 * jax.random.normal(kb, (1, feat), jnp.float32)
        mean = 0.05 * jax.random.normal(km, (1, feat), jnp.float32)
        var = jnp.abs(1.0 + 0.1 * jax.random.normal(kv, (1, feat), jnp.float32))
        return gamma, beta, mean, var

    w1, b1 = lin(keys[0], keys[1], 1000, 512)
    g1, be1, m1, v1 = bn(keys[2], keys[3], keys[4], keys[5], 512)
    w2, b2 = lin(keys[6], keys[7], 512, 256)
    g2, be2, m2, v2 = bn(keys[8], keys[9], keys[10], keys[11], 256)
    w3, b3 = lin(keys[12], keys[13], 256, 65)

    return (w1, b1, g1, be1, m1, v1,
            w2, b2, g2, be2, m2, v2,
            w3, b3)


# --------------------------------------------------------------------------- #
# Pure-JAX references.
# --------------------------------------------------------------------------- #
def reference_forward(x, params, precision=None):
    """Unfolded eval-mode reference (Linear -> BN -> ReLU -> ... -> Linear)."""
    (w1, b1, g1, be1, m1, v1,
     w2, b2, g2, be2, m2, v2,
     w3, b3) = params
    h = jnp.dot(x, w1, precision=precision) + b1
    h = (h - m1) * lax.rsqrt(v1 + EPS) * g1 + be1
    h = jnp.maximum(h, 0.0)
    h = jnp.dot(h, w2, precision=precision) + b2
    h = (h - m2) * lax.rsqrt(v2 + EPS) * g2 + be2
    h = jnp.maximum(h, 0.0)
    return jnp.dot(h, w3, precision=precision) + b3


def reference_forward_folded(x, params, compute_dtype=jnp.float32, precision=None):
    """Reference using the same BN folding / dtype pipeline as the kernel."""
    prepared = prepare_params(params, compute_dtype)
    w1, b1, w2, b2, w3, b3 = prepared
    h = jnp.dot(x.astype(compute_dtype), w1,
                preferred_element_type=jnp.float32, precision=precision) + b1
    h = jnp.maximum(h, 0.0).astype(compute_dtype)
    h = jnp.dot(h, w2,
                preferred_element_type=jnp.float32, precision=precision) + b2
    h = jnp.maximum(h, 0.0).astype(compute_dtype)
    out = jnp.dot(h, w3,
                  preferred_element_type=jnp.float32, precision=precision) + b3
    return out[:, :D_OUT]


if __name__ == "__main__":
    key = jax.random.PRNGKey(0)
    k_x, k_p = jax.random.split(key)

    # Batch deliberately not a multiple of the chosen tile (tb=104 -> grid of 2
    # with a masked partial last tile; also gives v7x two tiles to shard).
    batch = 200
    x = jax.random.normal(k_x, (batch, F_IN), jnp.float32)
    params = init_params(k_p)

    # --- bfloat16 (default) path: one-time weight prep, then forward ---
    prepared_bf16 = jax.block_until_ready(prepare_params(params))   # model-load time
    out = classifier_forward(x, prepared_bf16)
    out = jax.block_until_ready(out)
    assert out.shape == (batch, D_OUT)
    ref_bf16 = reference_forward_folded(x, params, compute_dtype=jnp.bfloat16)
    assert jnp.allclose(out, ref_bf16, atol=2e-2, rtol=2e-2)

    # --- float32 path ---
    prepared_f32 = prepare_params(params, compute_dtype=jnp.float32)
    out_f32 = jax.block_until_ready(classifier_forward(x, prepared_f32))
    ref_f32 = reference_forward_folded(x, params, compute_dtype=jnp.float32)
    assert jnp.allclose(out_f32, ref_f32, atol=1e-3, rtol=1e-3)

    # BN-folding algebra check (pure JAX, high precision on both sides).
    ref_exact = reference_forward(x, params, precision=lax.Precision.HIGHEST)
    ref_folded_hi = reference_forward_folded(
        x, params, precision=lax.Precision.HIGHEST)
    assert jnp.allclose(ref_folded_hi, ref_exact, atol=1e-4, rtol=1e-4)

    # --- smaller odd batch: exercises a different tile / partial-tile masking ---
    x_small = jax.random.normal(k_x, (37, F_IN), jnp.float32)
    out_small = jax.block_until_ready(classifier_forward(x_small, prepared_bf16))
    ref_small = reference_forward_folded(x_small, params,
                                         compute_dtype=jnp.bfloat16)
    assert out_small.shape == (37, D_OUT)
    assert jnp.allclose(out_small, ref_small, atol=2e-2, rtol=2e-2)

    print("KERNEL_OK")
</pallas_src>

<mosaic_0001>
module attributes {stable_mosaic.version = 11 : i64} {
  func.func @classifier_kernel(%arg0: i32, %arg1: memref<104x1000xf32, #tpu.memory_space<vmem>>, %arg2: memref<1000x512xbf16, #tpu.memory_space<vmem>>, %arg3: memref<1x512xf32, #tpu.memory_space<vmem>>, %arg4: memref<512x256xbf16, #tpu.memory_space<vmem>>, %arg5: memref<1x256xf32, #tpu.memory_space<vmem>>, %arg6: memref<256x128xbf16, #tpu.memory_space<vmem>>, %arg7: memref<1x128xf32, #tpu.memory_space<vmem>>, %arg8: memref<104x128xf32, #tpu.memory_space<vmem>>) attributes {dimension_semantics = [#tpu.dimension_semantics<parallel>], iteration_bounds = array<i64: 2>, scalar_prefetch = 0 : i64, scratch_operands = 0 : i64, tpu.core_type = #tpu.core_type<tc>, window_params = [{transform_indices = @transform_0, window_bounds = array<i64: 104, 1000>}, {pipeline_mode = #tpu.pipeline_mode<synchronous>, transform_indices = @transform_1, window_bounds = array<i64: 1000, 512>}, {pipeline_mode = #tpu.pipeline_mode<synchronous>, transform_indices = @transform_2, window_bounds = array<i64: 1, 512>}, {pipeline_mode = #tpu.pipeline_mode<synchronous>, transform_indices = @transform_3, window_bounds = array<i64: 512, 256>}, {pipeline_mode = #tpu.pipeline_mode<synchronous>, transform_indices = @transform_4, window_bounds = array<i64: 1, 256>}, {pipeline_mode = #tpu.pipeline_mode<synchronous>, transform_indices = @transform_5, window_bounds = array<i64: 256, 128>}, {pipeline_mode = #tpu.pipeline_mode<synchronous>, transform_indices = @transform_6, window_bounds = array<i64: 1, 128>}, {transform_indices = @transform_7, window_bounds = array<i64: 104, 128>}]} {
    %c0 = arith.constant 0 : index
    %c0_0 = arith.constant 0 : index
    %0 = vector.load %arg1[%c0, %c0_0] : memref<104x1000xf32, #tpu.memory_space<vmem>>, vector<104x1000xf32>
    %1 = arith.truncf %0 : vector<104x1000xf32> to vector<104x1000xbf16>
    %c0_1 = arith.constant 0 : index
    %c0_2 = arith.constant 0 : index
    %2 = vector.load %arg2[%c0_1, %c0_2] : memref<1000x512xbf16, #tpu.memory_space<vmem>>, vector<1000x512xbf16>
    %cst = arith.constant dense<0.000000e+00> : vector<104x512xf32>
    %3 = tpu.matmul %1, %2, %cst {dimension_numbers = #tpu.dot_dimension_numbers<[1], [0], [0], [1], [0, 0, 1, 1], [], []>} : vector<104x1000xbf16>, vector<1000x512xbf16>, vector<104x512xf32> -> vector<104x512xf32>
    %c0_3 = arith.constant 0 : index
    %c0_4 = arith.constant 0 : index
    %4 = vector.load %arg3[%c0_3, %c0_4] : memref<1x512xf32, #tpu.memory_space<vmem>>, vector<1x512xf32>
    %5 = vector.broadcast %4 : vector<1x512xf32> to vector<104x512xf32>
    %6 = arith.addf %3, %5 : vector<104x512xf32>
    %cst_5 = arith.constant 0.000000e+00 : f32
    %7 = vector.broadcast %cst_5 : f32 to vector<104x512xf32>
    %8 = arith.maximumf %6, %7 : vector<104x512xf32>
    %9 = arith.truncf %8 : vector<104x512xf32> to vector<104x512xbf16>
    %c0_6 = arith.constant 0 : index
    %c0_7 = arith.constant 0 : index
    %10 = vector.load %arg4[%c0_6, %c0_7] : memref<512x256xbf16, #tpu.memory_space<vmem>>, vector<512x256xbf16>
    %cst_8 = arith.constant dense<0.000000e+00> : vector<104x256xf32>
    %11 = tpu.matmul %9, %10, %cst_8 {dimension_numbers = #tpu.dot_dimension_numbers<[1], [0], [0], [1], [0, 0, 1, 1], [], []>} : vector<104x512xbf16>, vector<512x256xbf16>, vector<104x256xf32> -> vector<104x256xf32>
    %c0_9 = arith.constant 0 : index
    %c0_10 = arith.constant 0 : index
    %12 = vector.load %arg5[%c0_9, %c0_10] : memref<1x256xf32, #tpu.memory_space<vmem>>, vector<1x256xf32>
    %13 = vector.broadcast %12 : vector<1x256xf32> to vector<104x256xf32>
    %14 = arith.addf %11, %13 : vector<104x256xf32>
    %cst_11 = arith.constant 0.000000e+00 : f32
    %15 = vector.broadcast %cst_11 : f32 to vector<104x256xf32>
    %16 = arith.maximumf %14, %15 : vector<104x256xf32>
    %17 = arith.truncf %16 : vector<104x256xf32> to vector<104x256xbf16>
    %c0_12 = arith.constant 0 : index
    %c0_13 = arith.constant 0 : index
    %18 = vector.load %arg6[%c0_12, %c0_13] : memref<256x128xbf16, #tpu.memory_space<vmem>>, vector<256x128xbf16>
    %cst_14 = arith.constant dense<0.000000e+00> : vector<104x128xf32>
    %19 = tpu.matmul %17, %18, %cst_14 {dimension_numbers = #tpu.dot_dimension_numbers<[1], [0], [0], [1], [0, 0, 1, 1], [], []>} : vector<104x256xbf16>, vector<256x128xbf16>, vector<104x128xf32> -> vector<104x128xf32>
    %c0_15 = arith.constant 0 : index
    %c0_16 = arith.constant 0 : index
    %20 = vector.load %arg7[%c0_15, %c0_16] : memref<1x128xf32, #tpu.memory_space<vmem>>, vector<1x128xf32>
    %21 = vector.broadcast %20 : vector<1x128xf32> to vector<104x128xf32>
    %22 = arith.addf %19, %21 : vector<104x128xf32>
    %c0_17 = arith.constant 0 : index
    %c0_18 = arith.constant 0 : index
    %23 = vector.load %arg8[%c0_17, %c0_18] : memref<104x128xf32, #tpu.memory_space<vmem>>, vector<104x128xf32>
    tpu.vector_store %arg8[%c0_17, %c0_18], %22 {strides = array<i32>} : memref<104x128xf32, #tpu.memory_space<vmem>>, vector<104x128xf32>,
    return
  }
  func.func @transform_0(%arg0: i32) -> (i32, i32) {
    %c0_i32 = arith.constant 0 : i32
    %c0_i32_0 = arith.constant 0 : i32
    return %arg0, %c0_i32 : i32, i32
  }
  func.func @transform_1(%arg0: i32) -> (i32, i32) {
    %c0_i32 = arith.constant 0 : i32
    %c0_i32_0 = arith.constant 0 : i32
    %c0_i32_1 = arith.constant 0 : i32
    return %c0_i32, %c0_i32_0 : i32, i32
  }
  func.func @transform_2(%arg0: i32) -> (i32, i32) {
    %c0_i32 = arith.constant 0 : i32
    %c0_i32_0 = arith.constant 0 : i32
    %c0_i32_1 = arith.constant 0 : i32
    return %c0_i32, %c0_i32_0 : i32, i32
  }
  func.func @transform_3(%arg0: i32) -> (i32, i32) {
    %c0_i32 = arith.constant 0 : i32
    %c0_i32_0 = arith.constant 0 : i32
    %c0_i32_1 = arith.constant 0 : i32
    return %c0_i32, %c0_i32_0 : i32, i32
  }
  func.func @transform_4(%arg0: i32) -> (i32, i32) {
    %c0_i32 = arith.constant 0 : i32
    %c0_i32_0 = arith.constant 0 : i32
    %c0_i32_1 = arith.constant 0 : i32
    return %c0_i32, %c0_i32_0 : i32, i32
  }
  func.func @transform_5(%arg0: i32) -> (i32, i32) {
    %c0_i32 = arith.constant 0 : i32
    %c0_i32_0 = arith.constant 0 : i32
    %c0_i32_1 = arith.constant 0 : i32
    return %c0_i32, %c0_i32_0 : i32, i32
  }
  func.func @transform_6(%arg0: i32) -> (i32, i32) {
    %c0_i32 = arith.constant 0 : i32
    %c0_i32_0 = arith.constant 0 : i32
    %c0_i32_1 = arith.constant 0 : i32
    return %c0_i32, %c0_i32_0 : i32, i32
  }
  func.func @transform_7(%arg0: i32) -> (i32, i32) {
    %c0_i32 = arith.constant 0 : i32
    %c0_i32_0 = arith.constant 0 : i32
    return %arg0, %c0_i32 : i32, i32
  }
}

</mosaic_0001>

<llo_original>
// kernel: tpu_custom_call.1
$region0: #{tpu_custom_call.1}
  #allocation0 [shape = 'u32[]', space=smem, size = 0x4, offset = 0x4, fixed_abs, tag = 'smem constant byte address 0x4 - core index']
  #allocation1 [shape = 'u32[144,128]{1,0:T(1,128)}', space=vmem, size = 0x12000, scoped, tag = 'internal scratch']
  %s0 = inlined_call_operand.hbm [shape: f32[200,1000], index: 0, kind: input, shape index: {}]
  %s1 = inlined_call_operand.hbm [shape: bf16[1000,512], index: 1, kind: input, shape index: {}]
  %s2 = inlined_call_operand.vmem [shape: f32[1,512], index: 2, kind: input, shape index: {}]
  %s3 = inlined_call_operand.hbm [shape: bf16[512,256], index: 3, kind: input, shape index: {}]
  %s4 = inlined_call_operand.vmem [shape: f32[1,256], index: 4, kind: input, shape index: {}]
  %s5 = inlined_call_operand.hbm [shape: bf16[256,128], index: 5, kind: input, shape index: {}]
  %s6 = inlined_call_operand.vmem [shape: f32[1,128], index: 6, kind: input, shape index: {}]
  %s7 = inlined_call_operand.hbm [shape: f32[200,128], index: 7, kind: output, shape index: {}]
  %s8 = sld [smem:[#allocation0]]
  $region77: #{tpu_custom_call.1} parent=0
    _
  %s10 = ssub.s32 1, %s8
  %s11 = scalar_select 0, %s10, %s8
  $region1: #{tpu_custom_call.1} parent=0
    #allocation2 [shape = 'u8[851968]{0}', space=vmem, size = 0xd0000, scoped, tag = 'input window, operand 0']
    #allocation3 [shape = 's32[2]{0}', space=sflag, size = 0x8, scoped, tag = 'scoped memory for tpu_custom_call.1']
    #allocation4 [shape = 's32[2]{0}', space=sflag, size = 0x8, scoped, tag = 'scoped memory for tpu_custom_call.1']
    #allocation5 [shape = 'u8[1024000]{0}', space=vmem, size = 0xfa000, scoped, tag = 'input window, operand 1, single buffered']
    #allocation6 [shape = 's32[1]{0}', space=sflag, size = 0x4, scoped, tag = 'scoped memory for tpu_custom_call.1']
    #allocation7 [shape = 'u8[262144]{0}', space=vmem, size = 0x40000, scoped, tag = 'input window, operand 3, single buffered']
    #allocation8 [shape = 'u8[65536]{0}', space=vmem, size = 0x10000, scoped, tag = 'input window, operand 5, single buffered']
    #allocation9 [shape = 's32[1]{0}', space=sflag, size = 0x4, scoped, tag = 'scoped memory for tpu_custom_call.1']
    #allocation10 [shape = 'u8[106496]{0}', space=vmem, size = 0x1a000, scoped, tag = 'output window, operand 0']
    %12 = vsyncpa [#allocation3], 0
    %s13 = scalar_lea.sflag [#allocation3], 1
    %14 = vsyncpa %s13, 0
    %15 = vsyncpa [#allocation6], 0
    %16 = vsyncpa [#allocation9], 0
    %17 = vsyncpa [#allocation4], 0
    %s18 = scalar_lea.sflag [#allocation4], 1
    %19 = vsyncpa %s18, 0
    loop: start=0, step=1, limit=4
    $region2: #{tpu_custom_call.1} parent=1 // loop_pre_header
      _
    $region3: #{tpu_custom_call.1} parent=1 // loop_header
      %s21 = sphi 0, %s25
      %p22 = scmp.ge.s32.totalorder %s21, 4
      %s31 = sphi 0, %s33
      %s34 = sphi 0, %s31
      %s35 = sphi 0, %s34
      %s51 = sphi 0, %s35
      %s55 = sphi 0, %s55
      %s57 = sphi 0, %s55
      %s58 = sphi 0, %s57
      %s72 = sphi 0, %s58
      %s76 = sphi 0, %s76
      %s78 = sphi 0, %s76
      %s79 = sphi 0, %s78
      %s93 = sphi 0, %s79
      %s97 = sphi 0, %s97
      %s99 = sphi 0, %s97
      %s100 = sphi 0, %s99
      %s114 = sphi 0, %s100
      %s118 = sphi 0, %s118
      %s120 = sphi 0, %s118
      %s121 = sphi 0, %s120
      %s135 = sphi 0, %s121
      %s139 = sphi 0, %s139
      %s141 = sphi 0, %s139
      %s142 = sphi 0, %s141
      %s156 = sphi 0, %s142
      %s160 = sphi 0, %s160
      %s162 = sphi 0, %s160
      %s163 = sphi 0, %s162
      %s177 = sphi 0, %s163
      %s183 = sphi 0, %s185
      %s186 = sphi 0, %s183
      %s187 = sphi 0, %s186
      %s203 = sphi 0, %s187
    $region4: #{tpu_custom_call.1} parent=1 // loop_header_branch
      %24 = sbr.rel (%p22) target = $region8
    $region5: #{tpu_custom_call.1} parent=1 // loop_body
      %s26 = ssub.s32 %s21, 1
      %s27 = ssub.s32 %s21, 2
      %s28 = sadd.s32 %s21, 1
      %s29 = ssub.s32 %s21, %s28
      %p30 = scmp.eq.s32.totalorder %s29, 0
      %s32 = sadd.s32 %s31, 1
      %s33 = scalar_select %p30, %s31, %s32
      %p36 = pneg %p30
      %p37 = scmp.eq.s32.totalorder %s21, 1
      %p38 = por %p36, %p37
      %p39 = scmp.ne.s32.totalorder %s31, %s34
      %p40 = scmp.eq.s32.totalorder %s21, 0
      %p41 = por %p39, %p40
      %p42 = scmp.ne.s32.totalorder %s31, %s34
      %p43 = scmp.eq.s32.totalorder %s26, 1
      %p44 = por %p42, %p43
      %p45 = scmp.ne.s32.totalorder %s34, %s35
      %p46 = scmp.eq.s32.totalorder %s26, 0
      %p47 = por %p45, %p46
      %p48 = scmp.ne.s32.totalorder %s34, %s35
      %p49 = scmp.eq.s32.totalorder %s27, 1
      %p50 = por %p48, %p49
      %p52 = scmp.ne.s32.totalorder %s35, %s51
      %p53 = scmp.eq.s32.totalorder %s27, 0
      %p54 = por %p52, %p53
      %s56 = sadd.s32 %s55, 1
      %p59 = scmp.eq.s32.totalorder %s21, 1
      %p60 = scmp.ne.s32.totalorder %s55, %s57
      %p61 = scmp.eq.s32.totalorder %s21, 0
      %p62 = por %p60, %p61
      %p63 = scmp.ne.s32.totalorder %s55, %s57
      %p64 = scmp.eq.s32.totalorder %s26, 1
      %p65 = por %p63, %p64
      %p66 = scmp.ne.s32.totalorder %s57, %s58
      %p67 = scmp.eq.s32.totalorder %s26, 0
      %p68 = por %p66, %p67
      %p69 = scmp.ne.s32.totalorder %s57, %s58
      %p70 = scmp.eq.s32.totalorder %s27, 1
      %p71 = por %p69, %p70
      %p73 = scmp.ne.s32.totalorder %s58, %s72
      %p74 = scmp.eq.s32.totalorder %s27, 0
      %p75 = por %p73, %p74
      %s77 = sadd.s32 %s76, 1
      %p80 = scmp.eq.s32.totalorder %s21, 1
      %p81 = scmp.ne.s32.totalorder %s76, %s78
      %p82 = scmp.eq.s32.totalorder %s21, 0
      %p83 = por %p81, %p82
      %p84 = scmp.ne.s32.totalorder %s76, %s78
      %p85 = scmp.eq.s32.totalorder %s26, 1
      %p86 = por %p84, %p85
      %p87 = scmp.ne.s32.totalorder %s78, %s79
      %p88 = scmp.eq.s32.totalorder %s26, 0
      %p89 = por %p87, %p88
      %p90 = scmp.ne.s32.totalorder %s78, %s79
      %p91 = scmp.eq.s32.totalorder %s27, 1
      %p92 = por %p90, %p91
      %p94 = scmp.ne.s32.totalorder %s79, %s93
      %p95 = scmp.eq.s32.totalorder %s27, 0
      %p96 = por %p94, %p95
      %s98 = sadd.s32 %s97, 1
      %p101 = scmp.eq.s32.totalorder %s21, 1
      %p102 = scmp.ne.s32.totalorder %s97, %s99
      %p103 = scmp.eq.s32.totalorder %s21, 0
      %p104 = por %p102, %p103
      %p105 = scmp.ne.s32.totalorder %s97, %s99
      %p106 = scmp.eq.s32.totalorder %s26, 1
      %p107 = por %p105, %p106
      %p108 = scmp.ne.s32.totalorder %s99, %s100
      %p109 = scmp.eq.s32.totalorder %s26, 0
      %p110 = por %p108, %p109
      %p111 = scmp.ne.s32.totalorder %s99, %s100
      %p112 = scmp.eq.s32.totalorder %s27, 1
      %p113 = por %p111, %p112
      %p115 = scmp.ne.s32.totalorder %s100, %s114
      %p116 = scmp.eq.s32.totalorder %s27, 0
      %p117 = por %p115, %p116
      %s119 = sadd.s32 %s118, 1
      %p122 = scmp.eq.s32.totalorder %s21, 1
      %p123 = scmp.ne.s32.totalorder %s118, %s120
      %p124 = scmp.eq.s32.totalorder %s21, 0
      %p125 = por %p123, %p124
      %p126 = scmp.ne.s32.totalorder %s118, %s120
      %p127 = scmp.eq.s32.totalorder %s26, 1
      %p128 = por %p126, %p127
      %p129 = scmp.ne.s32.totalorder %s120, %s121
      %p130 = scmp.eq.s32.totalorder %s26, 0
      %p131 = por %p129, %p130
      %p132 = scmp.ne.s32.totalorder %s120, %s121
      %p133 = scmp.eq.s32.totalorder %s27, 1
      %p134 = por %p132, %p133
      %p136 = scmp.ne.s32.totalorder %s121, %s135
      %p137 = scmp.eq.s32.totalorder %s27, 0
      %p138 = por %p136, %p137
      %s140 = sadd.s32 %s139, 1
      %p143 = scmp.eq.s32.totalorder %s21, 1
      %p144 = scmp.ne.s32.totalorder %s139, %s141
      %p145 = scmp.eq.s32.totalorder %s21, 0
      %p146 = por %p144, %p145
      %p147 = scmp.ne.s32.totalorder %s139, %s141
      %p148 = scmp.eq.s32.totalorder %s26, 1
      %p149 = por %p147, %p148
      %p150 = scmp.ne.s32.totalorder %s141, %s142
      %p151 = scmp.eq.s32.totalorder %s26, 0
      %p152 = por %p150, %p151
      %p153 = scmp.ne.s32.totalorder %s141, %s142
      %p154 = scmp.eq.s32.totalorder %s27, 1
      %p155 = por %p153, %p154
      %p157 = scmp.ne.s32.totalorder %s142, %s156
      %p158 = scmp.eq.s32.totalorder %s27, 0
      %p159 = por %p157, %p158
      %s161 = sadd.s32 %s160, 1
      %p164 = scmp.eq.s32.totalorder %s21, 1
      %p165 = scmp.ne.s32.totalorder %s160, %s162
      %p166 = scmp.eq.s32.totalorder %s21, 0
      %p167 = por %p165, %p166
      %p168 = scmp.ne.s32.totalorder %s160, %s162
      %p169 = scmp.eq.s32.totalorder %s26, 1
      %p170 = por %p168, %p169
      %p171 = scmp.ne.s32.totalorder %s162, %s163
      %p172 = scmp.eq.s32.totalorder %s26, 0
      %p173 = por %p171, %p172
      %p174 = scmp.ne.s32.totalorder %s162, %s163
      %p175 = scmp.eq.s32.totalorder %s27, 1
      %p176 = por %p174, %p175
      %p178 = scmp.ne.s32.totalorder %s163, %s177
      %p179 = scmp.eq.s32.totalorder %s27, 0
      %p180 = por %p178, %p179
      %s181 = ssub.s32 %s21, %s28
      %p182 = scmp.eq.s32.totalorder %s181, 0
      %s184 = sadd.s32 %s183, 1
      %s185 = scalar_select %p182, %s183, %s184
      %p188 = pneg %p182
      %p189 = scmp.eq.s32.totalorder %s21, 1
      %p190 = por %p188, %p189
      %p191 = scmp.ne.s32.totalorder %s183, %s186
      %p192 = scmp.eq.s32.totalorder %s21, 0
      %p193 = por %p191, %p192
      %p194 = scmp.ne.s32.totalorder %s183, %s186
      %p195 = scmp.eq.s32.totalorder %s26, 1
      %p196 = por %p194, %p195
      %p197 = scmp.ne.s32.totalorder %s186, %s187
      %p198 = scmp.eq.s32.totalorder %s26, 0
      %p199 = por %p197, %p198
      %p200 = scmp.ne.s32.totalorder %s186, %s187
      %p201 = scmp.eq.s32.totalorder %s27, 1
      %p202 = por %p200, %p201
      %p204 = scmp.ne.s32.totalorder %s187, %s203
      %p205 = scmp.eq.s32.totalorder %s27, 0
      %p206 = por %p204, %p205
      %p207 = scmp.le.s32.totalorder 1, %s21
      %p208 = scmp.lt.s32.totalorder %s21, 3
      %p209 = pnand %p207, %p208
      %p210 = pneg %p209
      // Predicated region
      $region9: #{tpu_custom_call.1} parent=5 // pred_check
        _
      $region10: #{tpu_custom_call.1} parent=5 // pred_check_branch
        %212 = sbr.rel (%p209) target = $region12
      $region11: #{tpu_custom_call.1} parent=5 // pred_region
        %s213 = ssub.s32 %s21, 1
        // Predicated region
        $region13: #{tpu_custom_call.1} parent=11 // pred_check
          %p214 = pneg %p68
        $region14: #{tpu_custom_call.1} parent=11 // pred_check_branch
          %216 = sbr.rel (%p214) target = $region16
        $region15: #{tpu_custom_call.1} parent=11 // pred_region
          %s218 = ssub.s32 32000, 32000
          %219 = vsyncadd [#allocation6], %s218
          %s220 = sshll.u32 [#allocation5], 4
          %s221 = int_to_ptr.vmem [resolvable:$true] %s220
          %226 = dma.hbm_to_vmem [thread:$0]  %s1, 32000, %s221, [#allocation6], 256, 256, 16
        $region16: #{tpu_custom_call.1} parent=11 // pred_fallthru
          _
        // Predicated region
        $region17: #{tpu_custom_call.1} parent=11 // pred_check
          %p227 = pneg %p89
        $region18: #{tpu_custom_call.1} parent=11 // pred_check_branch
          %229 = sbr.rel (%p227) target = $region20
        $region19: #{tpu_custom_call.1} parent=11 // pred_region
          _
        $region20: #{tpu_custom_call.1} parent=11 // pred_fallthru
          _
        // Predicated region
        $region21: #{tpu_custom_call.1} parent=11 // pred_check
          %p230 = pneg %p110
        $region22: #{tpu_custom_call.1} parent=11 // pred_check_branch
          %232 = sbr.rel (%p230) target = $region24
        $region23: #{tpu_custom_call.1} parent=11 // pred_region
          %s234 = ssub.s32 8192, 8192
          %235 = vsyncadd [#allocation6], %s234
          %s236 = sshll.u32 [#allocation7], 4
          %s237 = int_to_ptr.vmem [resolvable:$true] %s236
          %242 = dma.hbm_to_vmem [thread:$0]  %s3, 8192, %s237, [#allocation6], 128, 128, 8
        $region24: #{tpu_custom_call.1} parent=11 // pred_fallthru
          _
        // Predicated region
        $region25: #{tpu_custom_call.1} parent=11 // pred_check
          %p243 = pneg %p131
        $region26: #{tpu_custom_call.1} parent=11 // pred_check_branch
          %245 = sbr.rel (%p243) target = $region28
        $region27: #{tpu_custom_call.1} parent=11 // pred_region
          _
        $region28: #{tpu_custom_call.1} parent=11 // pred_fallthru
          _
        // Predicated region
        $region29: #{tpu_custom_call.1} parent=11 // pred_check
          %p246 = pneg %p152
        $region30: #{tpu_custom_call.1} parent=11 // pred_check_branch
          %248 = sbr.rel (%p246) target = $region32
        $region31: #{tpu_custom_call.1} parent=11 // pred_region
          %s250 = ssub.s32 2048, 2048
          %251 = vsyncadd [#allocation9], %s250
          %s252 = sshll.u32 [#allocation8], 4
          %s253 = int_to_ptr.vmem [resolvable:$true] %s252
          %258 = dma.hbm_to_vmem [thread:$0]  %s5, 2048, %s253, [#allocation9], 64, 64, 4
        $region32: #{tpu_custom_call.1} parent=11 // pred_fallthru
          _
        // Predicated region
        $region33: #{tpu_custom_call.1} parent=11 // pred_check
          %p259 = pneg %p173
        $region34: #{tpu_custom_call.1} parent=11 // pred_check_branch
          %261 = sbr.rel (%p259) target = $region36
        $region35: #{tpu_custom_call.1} parent=11 // pred_region
          _
        $region36: #{tpu_custom_call.1} parent=11 // pred_fallthru
          _
      $region12: #{tpu_custom_call.1} parent=5 // pred_fallthru
        _
      %p262 = scmp.lt.s32.totalorder %s21, 2
      // Predicated region
      $region37: #{tpu_custom_call.1} parent=5 // pred_check
        %p263 = pneg %p262
      $region38: #{tpu_custom_call.1} parent=5 // pred_check_branch
        %265 = sbr.rel (%p263) target = $region40
      $region39: #{tpu_custom_call.1} parent=5 // pred_region
        // Predicated region
        $region41: #{tpu_custom_call.1} parent=39 // pred_check
          %p266 = pneg %p41
        $region42: #{tpu_custom_call.1} parent=39 // pred_check_branch
          %268 = sbr.rel (%p266) target = $region44
        $region43: #{tpu_custom_call.1} parent=39 // pred_region
          %s269 = sand.u32 %s31, 1
          %s270 = scalar_lea.sflag [#allocation3], %s269
          %s271 = sand.u32 %s31, 1
          %s272 = smul.addr %s271, 832
          %s273 = scalar_lea.vmem [#allocation2], %s272
          %s274 = smul.u32 13, %s21
          %s275 = ssub.s32 25, %s274
          %p276 = scmp.lt.s32.totalorder %s275, 13
          %s277 = scalar_select %p276, %s275, 13
          %s278 = smul.u32 128, %s277
          %s279 = smul.u32 %s278, 8
          %s281 = ssub.s32 13312, %s279
          %282 = vsyncadd %s270, %s281
          %p283 = scmp.ne.s32.totalorder 0, %s279
          %s284 = smul.addr %s274, 8
          %s285 = smul.addr %s284, 128
          %s286 = scalar_lea.hbm %s0, %s285
          %s287 = smul.u32 64, %s277
          %s288 = sshll.u32 %s273, 4
          %s289 = int_to_ptr.vmem [resolvable:$true] %s288
          %s290 = sshll.u32 %s287, 4
          %294 = dma.hbm_to_vmem [thread:$0]  (%p283), %s286, %s290, %s289, %s270, 1024, 1024, 64
        $region44: #{tpu_custom_call.1} parent=39 // pred_fallthru
          _
      $region40: #{tpu_custom_call.1} parent=5 // pred_fallthru
        _
      %p295 = scmp.le.s32.totalorder 1, %s21
      %p296 = scmp.lt.s32.totalorder %s21, 3
      %p297 = pnand %p295, %p296
      %p298 = pneg %p297
      // Predicated region
      $region45: #{tpu_custom_call.1} parent=5 // pred_check
        _
      $region46: #{tpu_custom_call.1} parent=5 // pred_check_branch
        %300 = sbr.rel (%p297) target = $region48
      $region47: #{tpu_custom_call.1} parent=5 // pred_region
        %s301 = ssub.s32 %s21, 1
        %s302 = sand.u32 %s34, 1
        %s303 = scalar_lea.sflag [#allocation3], %s302
        %s304 = sand.u32 %s34, 1
        %s305 = smul.addr %s304, 832
        %s306 = scalar_lea.vmem [#allocation2], %s305
        // Predicated region
        $region49: #{tpu_custom_call.1} parent=47 // pred_check
          %p307 = pneg %p47
        $region50: #{tpu_custom_call.1} parent=47 // pred_check_branch
          %309 = sbr.rel (%p307) target = $region52
        $region51: #{tpu_custom_call.1} parent=47 // pred_region
          %310 = dma.done %s303, 13312
        $region52: #{tpu_custom_call.1} parent=47 // pred_fallthru
          _
        // Predicated region
        $region53: #{tpu_custom_call.1} parent=47 // pred_check
          %p311 = pneg %p68
        $region54: #{tpu_custom_call.1} parent=47 // pred_check_branch
          %313 = sbr.rel (%p311) target = $region56
        $region55: #{tpu_custom_call.1} parent=47 // pred_region
          %314 = dma.done [#allocation6], 32000
        $region56: #{tpu_custom_call.1} parent=47 // pred_fallthru
          _
        // Predicated region
        $region57: #{tpu_custom_call.1} parent=47 // pred_check
          %p315 = pneg %p110
        $region58: #{tpu_custom_call.1} parent=47 // pred_check_branch
          %317 = sbr.rel (%p315) target = $region60
        $region59: #{tpu_custom_call.1} parent=47 // pred_region
          %318 = dma.done [#allocation6], 8192
        $region60: #{tpu_custom_call.1} parent=47 // pred_fallthru
          _
        // Predicated region
        $region61: #{tpu_custom_call.1} parent=47 // pred_check
          %p319 = pneg %p152
        $region62: #{tpu_custom_call.1} parent=47 // pred_check_branch
          %321 = sbr.rel (%p319) target = $region64
        $region63: #{tpu_custom_call.1} parent=47 // pred_region
          %322 = dma.done [#allocation9], 2048
        $region64: #{tpu_custom_call.1} parent=47 // pred_fallthru
          _
        %s323 = sand.u32 %s34, 1
        %s324 = scalar_lea.sflag [#allocation3], %s323
        %s325 = sand.u32 %s34, 1
        %s326 = smul.addr %s325, 832
        %s327 = scalar_lea.vmem [#allocation2], %s326
        %p328 = pneg %p47
        %p329 = pneg %p44
        %p330 = pneg %p68
        %p331 = pneg %p65
        %p332 = pneg %p89
        %p333 = pneg %p86
        %p334 = pneg %p110
        %p335 = pneg %p107
        %p336 = pneg %p131
        %p337 = pneg %p128
        %p338 = pneg %p152
        %p339 = pneg %p149
        %p340 = pneg %p173
        %p341 = pneg %p170
        %p342 = pneg %p199
        %p343 = pneg %p196
        %s344 = sand.u32 %s186, 1
        %s345 = scalar_lea.sflag [#allocation4], %s344
        %s346 = sand.u32 %s186, 1
        %s347 = smul.addr %s346, 104
        %s348 = scalar_lea.vmem [#allocation10], %s347
        %s349 = smul.u32 13, %s26
        %s350 = ssub.s32 25, %s349
        %p351 = scmp.lt.s32.totalorder %s350, 13
        %s352 = scalar_select %p351, %s350, 13
        %s353 = smul.u32 128, %s352
        %s354 = smul.u32 %s353, 8
        %s355 = smul.u32 13, %s26
        %s356 = ssub.s32 25, %s355
        %p357 = scmp.lt.s32.totalorder %s356, 13
        %s358 = scalar_select %p357, %s356, 13
        %s359 = smul.u32 128, %s358
        %v361 = vld [vmem:[%s306] sm:$0xff]
        %v362 = vld [vmem:[%s306 + $0x8] sm:$0xff]
        %v363 = vld [vmem:[%s306 + $0x10] sm:$0xff]
        %v364 = vld [vmem:[%s306 + $0x18] sm:$0xff]
        %v365 = vld [vmem:[%s306 + $0x20] sm:$0xff]
        %v366 = vld [vmem:[%s306 + $0x28] sm:$0xff]
        %v367 = vld [vmem:[%s306 + $0x30] sm:$0xff]
        %v368 = vld [vmem:[%s306 + $0x38] sm:$0xff]
        %v369 = vld [vmem:[%s306 + $0x40] sm:$0xff]
        %v370 = vld [vmem:[%s306 + $0x48] sm:$0xff]
        %v371 = vld [vmem:[%s306 + $0x50] sm:$0xff]
        %v372 = vld [vmem:[%s306 + $0x58] sm:$0xff]
        %v373 = vld [vmem:[%s306 + $0x60] sm:$0xff]
        %v374 = vld [vmem:[%s306 + $0x68] sm:$0xff]
        %v375 = vld [vmem:[%s306 + $0x70] sm:$0xff]
        %v376 = vld [vmem:[%s306 + $0x78] sm:$0xff]
        %v377 = vld [vmem:[%s306 + $0x80] sm:$0xff]
        %v378 = vld [vmem:[%s306 + $0x88] sm:$0xff]
        %v379 = vld [vmem:[%s306 + $0x90] sm:$0xff]
        %v380 = vld [vmem:[%s306 + $0x98] sm:$0xff]
        %v381 = vld [vmem:[%s306 + $0xa0] sm:$0xff]
        %v382 = vld [vmem:[%s306 + $0xa8] sm:$0xff]
        %v383 = vld [vmem:[%s306 + $0xb0] sm:$0xff]
        %v384 = vld [vmem:[%s306 + $0xb8] sm:$0xff]
        %v385 = vld [vmem:[%s306 + $0xc0] sm:$0xff]
        %v386 = vld [vmem:[%s306 + $0xc8] sm:$0xff]
        %v387 = vld [vmem:[%s306 + $0xd0] sm:$0xff]
        %v388 = vld [vmem:[%s306 + $0xd8] sm:$0xff]
        %v389 = vld [vmem:[%s306 + $0xe0] sm:$0xff]
        %v390 = vld [vmem:[%s306 + $0xe8] sm:$0xff]
        %v391 = vld [vmem:[%s306 + $0xf0] sm:$0xff]
        %v392 = vld [vmem:[%s306 + $0xf8] sm:$0xff]
        %v393 = vld [vmem:[%s306 + $0x100] sm:$0xff]
        %v394 = vld [vmem:[%s306 + $0x108] sm:$0xff]
        %v395 = vld [vmem:[%s306 + $0x110] sm:$0xff]
        %v396 = vld [vmem:[%s306 + $0x118] sm:$0xff]
        %v397 = vld [vmem:[%s306 + $0x120] sm:$0xff]
        %v398 = vld [vmem:[%s306 + $0x128] sm:$0xff]
        %v399 = vld [vmem:[%s306 + $0x130] sm:$0xff]
        %v400 = vld [vmem:[%s306 + $0x138] sm:$0xff]
        %v401 = vld [vmem:[%s306 + $0x140] sm:$0xff]
        %v402 = vld [vmem:[%s306 + $0x148] sm:$0xff]
        %v403 = vld [vmem:[%s306 + $0x150] sm:$0xff]
        %v404 = vld [vmem:[%s306 + $0x158] sm:$0xff]
        %v405 = vld [vmem:[%s306 + $0x160] sm:$0xff]
        %v406 = vld [vmem:[%s306 + $0x168] sm:$0xff]
        %v407 = vld [vmem:[%s306 + $0x170] sm:$0xff]
        %v408 = vld [vmem:[%s306 + $0x178] sm:$0xff]
        %v409 = vld [vmem:[%s306 + $0x180] sm:$0xff]
        %v410 = vld [vmem:[%s306 + $0x188] sm:$0xff]
        %v411 = vld [vmem:[%s306 + $0x190] sm:$0xff]
        %v412 = vld [vmem:[%s306 + $0x198] sm:$0xff]
        %v413 = vld [vmem:[%s306 + $0x1a0] sm:$0xff]
        %v414 = vld [vmem:[%s306 + $0x1a8] sm:$0xff]
        %v415 = vld [vmem:[%s306 + $0x1b0] sm:$0xff]
        %v416 = vld [vmem:[%s306 + $0x1b8] sm:$0xff]
        %v417 = vld [vmem:[%s306 + $0x1c0] sm:$0xff]
        %v418 = vld [vmem:[%s306 + $0x1c8] sm:$0xff]
        %v419 = vld [vmem:[%s306 + $0x1d0] sm:$0xff]
        %v420 = vld [vmem:[%s306 + $0x1d8] sm:$0xff]
        %v421 = vld [vmem:[%s306 + $0x1e0] sm:$0xff]
        %v422 = vld [vmem:[%s306 + $0x1e8] sm:$0xff]
        %v423 = vld [vmem:[%s306 + $0x1f0] sm:$0xff]
        %v424 = vld [vmem:[%s306 + $0x1f8] sm:$0xff]
        %v425 = vld [vmem:[%s306 + $0x200] sm:$0xff]
        %v426 = vld [vmem:[%s306 + $0x208] sm:$0xff]
        %v427 = vld [vmem:[%s306 + $0x210] sm:$0xff]
        %v428 = vld [vmem:[%s306 + $0x218] sm:$0xff]
        %v429 = vld [vmem:[%s306 + $0x220] sm:$0xff]
        %v430 = vld [vmem:[%s306 + $0x228] sm:$0xff]
        %v431 = vld [vmem:[%s306 + $0x230] sm:$0xff]
        %v432 = vld [vmem:[%s306 + $0x238] sm:$0xff]
        %v433 = vld [vmem:[%s306 + $0x240] sm:$0xff]
        %v434 = vld [vmem:[%s306 + $0x248] sm:$0xff]
        %v435 = vld [vmem:[%s306 + $0x250] sm:$0xff]
        %v436 = vld [vmem:[%s306 + $0x258] sm:$0xff]
        %v437 = vld [vmem:[%s306 + $0x260] sm:$0xff]
        %v438 = vld [vmem:[%s306 + $0x268] sm:$0xff]
        %v439 = vld [vmem:[%s306 + $0x270] sm:$0xff]
        %v440 = vld [vmem:[%s306 + $0x278] sm:$0xff]
        %v441 = vld [vmem:[%s306 + $0x280] sm:$0xff]
        %v442 = vld [vmem:[%s306 + $0x288] sm:$0xff]
        %v443 = vld [vmem:[%s306 + $0x290] sm:$0xff]
        %v444 = vld [vmem:[%s306 + $0x298] sm:$0xff]
        %v445 = vld [vmem:[%s306 + $0x2a0] sm:$0xff]
        %v446 = vld [vmem:[%s306 + $0x2a8] sm:$0xff]
        %v447 = vld [vmem:[%s306 + $0x2b0] sm:$0xff]
        %v448 = vld [vmem:[%s306 + $0x2b8] sm:$0xff]
        %v449 = vld [vmem:[%s306 + $0x2c0] sm:$0xff]
        %v450 = vld [vmem:[%s306 + $0x2c8] sm:$0xff]
        %v451 = vld [vmem:[%s306 + $0x2d0] sm:$0xff]
        %v452 = vld [vmem:[%s306 + $0x2d8] sm:$0xff]
        %v453 = vld [vmem:[%s306 + $0x2e0] sm:$0xff]
        %v454 = vld [vmem:[%s306 + $0x2e8] sm:$0xff]
        %v455 = vld [vmem:[%s306 + $0x2f0] sm:$0xff]
        %v456 = vld [vmem:[%s306 + $0x2f8] sm:$0xff]
        %v457 = vld [vmem:[%s306 + $0x300] sm:$0xff]
        %v458 = vld [vmem:[%s306 + $0x308] sm:$0xff]
        %v459 = vld [vmem:[%s306 + $0x310] sm:$0xff]
        %v460 = vld [vmem:[%s306 + $0x318] sm:$0xff]
        %v461 = vld [vmem:[%s306 + $0x320] sm:$0xff]
        %v462 = vld [vmem:[%s306 + $0x328] sm:$0xff]
        %v463 = vld [vmem:[%s306 + $0x330] sm:$0xff]
        %v464 = vld [vmem:[%s306 + $0x338] sm:$0xff]
        %v465 = vpack.c.bf16 %v369, %v361
        %v466 = vpack.c.bf16 %v370, %v362
        %v467 = vpack.c.bf16 %v371, %v363
        %v468 = vpack.c.bf16 %v372, %v364
        %v469 = vpack.c.bf16 %v373, %v365
        %v470 = vpack.c.bf16 %v374, %v366
        %v471 = vpack.c.bf16 %v375, %v367
        %v472 = vpack.c.bf16 %v376, %v368
        %v473 = vpack.c.bf16 %v385, %v377
        %v474 = vpack.c.bf16 %v386, %v378
        %v475 = vpack.c.bf16 %v387, %v379
        %v476 = vpack.c.bf16 %v388, %v380
        %v477 = vpack.c.bf16 %v389, %v381
        %v478 = vpack.c.bf16 %v390, %v382
        %v479 = vpack.c.bf16 %v391, %v383
        %v480 = vpack.c.bf16 %v392, %v384
        %v481 = vpack.c.bf16 %v401, %v393
        %v482 = vpack.c.bf16 %v402, %v394
        %v483 = vpack.c.bf16 %v403, %v395
        %v484 = vpack.c.bf16 %v404, %v396
        %v485 = vpack.c.bf16 %v405, %v397
        %v486 = vpack.c.bf16 %v406, %v398
        %v487 = vpack.c.bf16 %v407, %v399
        %v488 = vpack.c.bf16 %v408, %v400
        %v489 = vpack.c.bf16 %v417, %v409
        %v490 = vpack.c.bf16 %v418, %v410
        %v491 = vpack.c.bf16 %v419, %v411
        %v492 = vpack.c.bf16 %v420, %v412
        %v493 = vpack.c.bf16 %v421, %v413
        %v494 = vpack.c.bf16 %v422, %v414
        %v495 = vpack.c.bf16 %v423, %v415
        %v496 = vpack.c.bf16 %v424, %v416
        %v497 = vpack.c.bf16 %v433, %v425
        %v498 = vpack.c.bf16 %v434, %v426
        %v499 = vpack.c.bf16 %v435, %v427
        %v500 = vpack.c.bf16 %v436, %v428
        %v501 = vpack.c.bf16 %v437, %v429
        %v502 = vpack.c.bf16 %v438, %v430
        %v503 = vpack.c.bf16 %v439, %v431
        %v504 = vpack.c.bf16 %v440, %v432
        %v505 = vpack.c.bf16 %v449, %v441
        %v506 = vpack.c.bf16 %v450, %v442
        %v507 = vpack.c.bf16 %v451, %v443
        %v508 = vpack.c.bf16 %v452, %v444
        %v509 = vpack.c.bf16 %v453, %v445
        %v510 = vpack.c.bf16 %v454, %v446
        %v511 = vpack.c.bf16 %v455, %v447
        %v512 = vpack.c.bf16 %v456, %v448
        %v513 = vpack.c.bf16 %v457, %v457
        %v514 = vpack.c.bf16 %v458, %v458
        %v515 = vpack.c.bf16 %v459, %v459
        %v516 = vpack.c.bf16 %v460, %v460
        %v517 = vpack.c.bf16 %v461, %v461
        %v518 = vpack.c.bf16 %v462, %v462
        %v519 = vpack.c.bf16 %v463, %v463
        %v520 = vpack.c.bf16 %v464, %v464
        %v521 = vld [vmem:[#allocation5] sm:$0xff]
        %v522 = vld [vmem:[#allocation5 + $0x8] sm:$0xff]
        %v523 = vld [vmem:[#allocation5 + $0x10] sm:$0xff]
        %v524 = vld [vmem:[#allocation5 + $0x18] sm:$0xff]
        %v525 = vld [vmem:[#allocation5 + $0x20] sm:$0xff]
        %v526 = vld [vmem:[#allocation5 + $0x28] sm:$0xff]
        %v527 = vld [vmem:[#allocation5 + $0x30] sm:$0xff]
        %v528 = vld [vmem:[#allocation5 + $0x38] sm:$0xff]
        %v529 = vld [vmem:[#allocation5 + $0x40] sm:$0xff]
        %v530 = vld [vmem:[#allocation5 + $0x48] sm:$0xff]
        %v531 = vld [vmem:[#allocation5 + $0x50] sm:$0xff]
        %v532 = vld [vmem:[#allocation5 + $0x58] sm:$0xff]
        %v533 = vld [vmem:[#allocation5 + $0x60] sm:$0xff]
        %v534 = vld [vmem:[#allocation5 + $0x68] sm:$0xff]
        %v535 = vld [vmem:[#allocation5 + $0x70] sm:$0xff]
        %v536 = vld [vmem:[#allocation5 + $0x78] sm:$0xff]
        %v537 = vld [vmem:[#allocation5 + $0x80] sm:$0xff]
        %v538 = vld [vmem:[#allocation5 + $0x88] sm:$0xff]
        %v539 = vld [vmem:[#allocation5 + $0x90] sm:$0xff]
        %v540 = vld [vmem:[#allocation5 + $0x98] sm:$0xff]
        %v541 = vld [vmem:[#allocation5 + $0xa0] sm:$0xff]
        %v542 = vld [vmem:[#allocation5 + $0xa8] sm:$0xff]
        %v543 = vld [vmem:[#allocation5 + $0xb0] sm:$0xff]
        %v544 = vld [vmem:[#allocation5 + $0xb8] sm:$0xff]
        %v545 = vld [vmem:[#allocation5 + $0xc0] sm:$0xff]
        %v546 = vld [vmem:[#allocation5 + $0xc8] sm:$0xff]
        %v547 = vld [vmem:[#allocation5 + $0xd0] sm:$0xff]
        %v548 = vld [vmem:[#allocation5 + $0xd8] sm:$0xff]
        %v549 = vld [vmem:[#allocation5 + $0xe0] sm:$0xff]
        %v550 = vld [vmem:[#allocation5 + $0xe8] sm:$0xff]
        %v551 = vld [vmem:[#allocation5 + $0xf0] sm:$0xff]
        %v552 = vld [vmem:[#allocation5 + $0xf8] sm:$0xff]
        %v553 = vld [vmem:[#allocation5 + $0x100] sm:$0xff]
        %v554 = vld [vmem:[#allocation5 + $0x108] sm:$0xff]
        %v555 = vld [vmem:[#allocation5 + $0x110] sm:$0xff]
        %v556 = vld [vmem:[#allocation5 + $0x118] sm:$0xff]
        %v557 = vld [vmem:[#allocation5 + $0x120] sm:$0xff]
        %v558 = vld [vmem:[#allocation5 + $0x128] sm:$0xff]
        %v559 = vld [vmem:[#allocation5 + $0x130] sm:$0xff]
        %v560 = vld [vmem:[#allocation5 + $0x138] sm:$0xff]
        %v561 = vld [vmem:[#allocation5 + $0x140] sm:$0xff]
        %v562 = vld [vmem:[#allocation5 + $0x148] sm:$0xff]
        %v563 = vld [vmem:[#allocation5 + $0x150] sm:$0xff]
        %v564 = vld [vmem:[#allocation5 + $0x158] sm:$0xff]
        %v565 = vld [vmem:[#allocation5 + $0x160] sm:$0xff]
        %v566 = vld [vmem:[#allocation5 + $0x168] sm:$0xff]
        %v567 = vld [vmem:[#allocation5 + $0x170] sm:$0xff]
        %v568 = vld [vmem:[#allocation5 + $0x178] sm:$0xff]
        %v569 = vld [vmem:[#allocation5 + $0x180] sm:$0xff]
        %v570 = vld [vmem:[#allocation5 + $0x188] sm:$0xff]
        %v571 = vld [vmem:[#allocation5 + $0x190] sm:$0xff]
        %v572 = vld [vmem:[#allocation5 + $0x198] sm:$0xff]
        %v573 = vld [vmem:[#allocation5 + $0x1a0] sm:$0xff]
        %v574 = vld [vmem:[#allocation5 + $0x1a8] sm:$0xff]
        %v575 = vld [vmem:[#allocation5 + $0x1b0] sm:$0xff]
        %v576 = vld [vmem:[#allocation5 + $0x1b8] sm:$0xff]
        %v577 = vld [vmem:[#allocation5 + $0x1c0] sm:$0xff]
        %v578 = vld [vmem:[#allocation5 + $0x1c8] sm:$0xff]
        %v579 = vld [vmem:[#allocation5 + $0x1d0] sm:$0xff]
        %v580 = vld [vmem:[#allocation5 + $0x1d8] sm:$0xff]
        %v581 = vld [vmem:[#allocation5 + $0x1e0] sm:$0xff]
        %v582 = vld [vmem:[#allocation5 + $0x1e8] sm:$0xff]
        %v583 = vld [vmem:[#allocation5 + $0x1f0] sm:$0xff]
        %v584 = vld [vmem:[#allocation5 + $0x1f8] sm:$0xff]
        %v585 = vld [vmem:[#allocation5 + $0x200] sm:$0xff]
        %v586 = vld [vmem:[#allocation5 + $0x208] sm:$0xff]
        %v587 = vld [vmem:[#allocation5 + $0x210] sm:$0xff]
        %v588 = vld [vmem:[#allocation5 + $0x218] sm:$0xff]
        %v589 = vld [vmem:[#allocation5 + $0x220] sm:$0xff]
        %v590 = vld [vmem:[#allocation5 + $0x228] sm:$0xff]
        %v591 = vld [vmem:[#allocation5 + $0x230] sm:$0xff]
        %v592 = vld [vmem:[#allocation5 + $0x238] sm:$0xff]
        %v593 = vld [vmem:[#allocation5 + $0x240] sm:$0xff]
        %v594 = vld [vmem:[#allocation5 + $0x248] sm:$0xff]
        %v595 = vld [vmem:[#allocation5 + $0x250] sm:$0xff]
        %v596 = vld [vmem:[#allocation5 + $0x258] sm:$0xff]
        %v597 = vld [vmem:[#allocation5 + $0x260] sm:$0xff]
        %v598 = vld [vmem:[#allocation5 + $0x268] sm:$0xff]
        %v599 = vld [vmem:[#allocation5 + $0x270] sm:$0xff]
        %v600 = vld [vmem:[#allocation5 + $0x278] sm:$0xff]
        %v601 = vld [vmem:[#allocation5 + $0x280] sm:$0xff]
        %v602 = vld [vmem:[#allocation5 + $0x288] sm:$0xff]
        %v603 = vld [vmem:[#allocation5 + $0x290] sm:$0xff]
        %v604 = vld [vmem:[#allocation5 + $0x298] sm:$0xff]
        %v605 = vld [vmem:[#allocation5 + $0x2a0] sm:$0xff]
        %v606 = vld [vmem:[#allocation5 + $0x2a8] sm:$0xff]
        %v607 = vld [vmem:[#allocation5 + $0x2b0] sm:$0xff]
        %v608 = vld [vmem:[#allocation5 + $0x2b8] sm:$0xff]
        %v609 = vld [vmem:[#allocation5 + $0x2c0] sm:$0xff]
        %v610 = vld [vmem:[#allocation5 + $0x2c8] sm:$0xff]
        %v611 = vld [vmem:[#allocation5 + $0x2d0] sm:$0xff]
        %v612 = vld [vmem:[#allocation5 + $0x2d8] sm:$0xff]
        %v613 = vld [vmem:[#allocation5 + $0x2e0] sm:$0xff]
        %v614 = vld [vmem:[#allocation5 + $0x2e8] sm:$0xff]
        %v615 = vld [vmem:[#allocation5 + $0x2f0] sm:$0xff]
        %v616 = vld [vmem:[#allocation5 + $0x2f8] sm:$0xff]
        %v617 = vld [vmem:[#allocation5 + $0x300] sm:$0xff]
        %v618 = vld [vmem:[#allocation5 + $0x308] sm:$0xff]
        %v619 = vld [vmem:[#allocation5 + $0x310] sm:$0xff]
        %v620 = vld [vmem:[#allocation5 + $0x318] sm:$0xff]
        %v621 = vld [vmem:[#allocation5 + $0x320] sm:$0xff]
        %v622 = vld [vmem:[#allocation5 + $0x328] sm:$0xff]
        %v623 = vld [vmem:[#allocation5 + $0x330] sm:$0xff]
        %v624 = vld [vmem:[#allocation5 + $0x338] sm:$0xff]
        %v625 = vld [vmem:[#allocation5 + $0x340] sm:$0xff]
        %v626 = vld [vmem:[#allocation5 + $0x348] sm:$0xff]
        %v627 = vld [vmem:[#allocation5 + $0x350] sm:$0xff]
        %v628 = vld [vmem:[#allocation5 + $0x358] sm:$0xff]
        %v629 = vld [vmem:[#allocation5 + $0x360] sm:$0xff]
        %v630 = vld [vmem:[#allocation5 + $0x368] sm:$0xff]
        %v631 = vld [vmem:[#allocation5 + $0x370] sm:$0xff]
        %v632 = vld [vmem:[#allocation5 + $0x378] sm:$0xff]
        %v633 = vld [vmem:[#allocation5 + $0x380] sm:$0xff]
        %v634 = vld [vmem:[#allocation5 + $0x388] sm:$0xff]
        %v635 = vld [vmem:[#allocation5 + $0x390] sm:$0xff]
        %v636 = vld [vmem:[#allocation5 + $0x398] sm:$0xff]
        %v637 = vld [vmem:[#allocation5 + $0x3a0] sm:$0xff]
        %v638 = vld [vmem:[#allocation5 + $0x3a8] sm:$0xff]
        %v639 = vld [vmem:[#allocation5 + $0x3b0] sm:$0xff]
        %v640 = vld [vmem:[#allocation5 + $0x3b8] sm:$0xff]
        %v641 = vld [vmem:[#allocation5 + $0x3c0] sm:$0xff]
        %v642 = vld [vmem:[#allocation5 + $0x3c8] sm:$0xff]
        %v643 = vld [vmem:[#allocation5 + $0x3d0] sm:$0xff]
        %v644 = vld [vmem:[#allocation5 + $0x3d8] sm:$0xff]
        %v645 = vld [vmem:[#allocation5 + $0x3e0] sm:$0xff]
        %v646 = vld [vmem:[#allocation5 + $0x3e8] sm:$0xff]
        %v647 = vld [vmem:[#allocation5 + $0x3f0] sm:$0xff]
        %v648 = vld [vmem:[#allocation5 + $0x3f8] sm:$0xff]
        %v649 = vld [vmem:[#allocation5 + $0x400] sm:$0xff]
        %v650 = vld [vmem:[#allocation5 + $0x408] sm:$0xff]
        %v651 = vld [vmem:[#allocation5 + $0x410] sm:$0xff]
        %v652 = vld [vmem:[#allocation5 + $0x418] sm:$0xff]
        %v653 = vld [vmem:[#allocation5 + $0x420] sm:$0xff]
        %v654 = vld [vmem:[#allocation5 + $0x428] sm:$0xff]
        %v655 = vld [vmem:[#allocation5 + $0x430] sm:$0xff]
        %v656 = vld [vmem:[#allocation5 + $0x438] sm:$0xff]
        %v657 = vld [vmem:[#allocation5 + $0x440] sm:$0xff]
        %v658 = vld [vmem:[#allocation5 + $0x448] sm:$0xff]
        %v659 = vld [vmem:[#allocation5 + $0x450] sm:$0xff]
        %v660 = vld [vmem:[#allocation5 + $0x458] sm:$0xff]
        %v661 = vld [vmem:[#allocation5 + $0x460] sm:$0xff]
        %v662 = vld [vmem:[#allocation5 + $0x468] sm:$0xff]
        %v663 = vld [vmem:[#allocation5 + $0x470] sm:$0xff]
        %v664 = vld [vmem:[#allocation5 + $0x478] sm:$0xff]
        %v665 = vld [vmem:[#allocation5 + $0x480] sm:$0xff]
        %v666 = vld [vmem:[#allocation5 + $0x488] sm:$0xff]
        %v667 = vld [vmem:[#allocation5 + $0x490] sm:$0xff]
        %v668 = vld [vmem:[#allocation5 + $0x498] sm:$0xff]
        %v669 = vld [vmem:[#allocation5 + $0x4a0] sm:$0xff]
        %v670 = vld [vmem:[#allocation5 + $0x4a8] sm:$0xff]
        %v671 = vld [vmem:[#allocation5 + $0x4b0] sm:$0xff]
        %v672 = vld [vmem:[#allocation5 + $0x4b8] sm:$0xff]
        %v673 = vld [vmem:[#allocation5 + $0x4c0] sm:$0xff]
        %v674 = vld [vmem:[#allocation5 + $0x4c8] sm:$0xff]
        %v675 = vld [vmem:[#allocation5 + $0x4d0] sm:$0xff]
        %v676 = vld [vmem:[#allocation5 + $0x4d8] sm:$0xff]
        %v677 = vld [vmem:[#allocation5 + $0x4e0] sm:$0xff]
        %v678 = vld [vmem:[#allocation5 + $0x4e8] sm:$0xff]
        %v679 = vld [vmem:[#allocation5 + $0x4f0] sm:$0xff]
        %v680 = vld [vmem:[#allocation5 + $0x4f8] sm:$0xff]
        %v681 = vld [vmem:[#allocation5 + $0x500] sm:$0xff]
        %v682 = vld [vmem:[#allocation5 + $0x508] sm:$0xff]
        %v683 = vld [vmem:[#allocation5 + $0x510] sm:$0xff]
        %v684 = vld [vmem:[#allocation5 + $0x518] sm:$0xff]
        %v685 = vld [vmem:[#allocation5 + $0x520] sm:$0xff]
        %v686 = vld [vmem:[#allocation5 + $0x528] sm:$0xff]
        %v687 = vld [vmem:[#allocation5 + $0x530] sm:$0xff]
        %v688 = vld [vmem:[#allocation5 + $0x538] sm:$0xff]
        %v689 = vld [vmem:[#allocation5 + $0x540] sm:$0xff]
        %v690 = vld [vmem:[#allocation5 + $0x548] sm:$0xff]
        %v691 = vld [vmem:[#allocation5 + $0x550] sm:$0xff]
        %v692 = vld [vmem:[#allocation5 + $0x558] sm:$0xff]
        %v693 = vld [vmem:[#allocation5 + $0x560] sm:$0xff]
        %v694 = vld [vmem:[#allocation5 + $0x568] sm:$0xff]
        %v695 = vld [vmem:[#allocation5 + $0x570] sm:$0xff]
        %v696 = vld [vmem:[#allocation5 + $0x578] sm:$0xff]
        %v697 = vld [vmem:[#allocation5 + $0x580] sm:$0xff]
        %v698 = vld [vmem:[#allocation5 + $0x588] sm:$0xff]
        %v699 = vld [vmem:[#allocation5 + $0x590] sm:$0xff]
        %v700 = vld [vmem:[#allocation5 + $0x598] sm:$0xff]
        %v701 = vld [vmem:[#allocation5 + $0x5a0] sm:$0xff]
        %v702 = vld [vmem:[#allocation5 + $0x5a8] sm:$0xff]
        %v703 = vld [vmem:[#allocation5 + $0x5b0] sm:$0xff]
        %v704 = vld [vmem:[#allocation5 + $0x5b8] sm:$0xff]
        %v705 = vld [vmem:[#allocation5 + $0x5c0] sm:$0xff]
        %v706 = vld [vmem:[#allocation5 + $0x5c8] sm:$0xff]
        %v707 = vld [vmem:[#allocation5 + $0x5d0] sm:$0xff]
        %v708 = vld [vmem:[#allocation5 + $0x5d8] sm:$0xff]
        %v709 = vld [vmem:[#allocation5 + $0x5e0] sm:$0xff]
        %v710 = vld [vmem:[#allocation5 + $0x5e8] sm:$0xff]
        %v711 = vld [vmem:[#allocation5 + $0x5f0] sm:$0xff]
        %v712 = vld [vmem:[#allocation5 + $0x5f8] sm:$0xff]
        %v713 = vld [vmem:[#allocation5 + $0x600] sm:$0xff]
        %v714 = vld [vmem:[#allocation5 + $0x608] sm:$0xff]
        %v715 = vld [vmem:[#allocation5 + $0x610] sm:$0xff]
        %v716 = vld [vmem:[#allocation5 + $0x618] sm:$0xff]
        %v717 = vld [vmem:[#allocation5 + $0x620] sm:$0xff]
        %v718 = vld [vmem:[#allocation5 + $0x628] sm:$0xff]
        %v719 = vld [vmem:[#allocation5 + $0x630] sm:$0xff]
        %v720 = vld [vmem:[#allocation5 + $0x638] sm:$0xff]
        %v721 = vld [vmem:[#allocation5 + $0x640] sm:$0xff]
        %v722 = vld [vmem:[#allocation5 + $0x648] sm:$0xff]
        %v723 = vld [vmem:[#allocation5 + $0x650] sm:$0xff]
        %v724 = vld [vmem:[#allocation5 + $0x658] sm:$0xff]
        %v725 = vld [vmem:[#allocation5 + $0x660] sm:$0xff]
        %v726 = vld [vmem:[#allocation5 + $0x668] sm:$0xff]
        %v727 = vld [vmem:[#allocation5 + $0x670] sm:$0xff]
        %v728 = vld [vmem:[#allocation5 + $0x678] sm:$0xff]
        %v729 = vld [vmem:[#allocation5 + $0x680] sm:$0xff]
        %v730 = vld [vmem:[#allocation5 + $0x688] sm:$0xff]
        %v731 = vld [vmem:[#allocation5 + $0x690] sm:$0xff]
        %v732 = vld [vmem:[#allocation5 + $0x698] sm:$0xff]
        %v733 = vld [vmem:[#allocation5 + $0x6a0] sm:$0xff]
        %v734 = vld [vmem:[#allocation5 + $0x6a8] sm:$0xff]
        %v735 = vld [vmem:[#allocation5 + $0x6b0] sm:$0xff]
        %v736 = vld [vmem:[#allocation5 + $0x6b8] sm:$0xff]
        %v737 = vld [vmem:[#allocation5 + $0x6c0] sm:$0xff]
        %v738 = vld [vmem:[#allocation5 + $0x6c8] sm:$0xff]
        %v739 = vld [vmem:[#allocation5 + $0x6d0] sm:$0xff]
        %v740 = vld [vmem:[#allocation5 + $0x6d8] sm:$0xff]
        %v741 = vld [vmem:[#allocation5 + $0x6e0] sm:$0xff]
        %v742 = vld [vmem:[#allocation5 + $0x6e8] sm:$0xff]
        %v743 = vld [vmem:[#allocation5 + $0x6f0] sm:$0xff]
        %v744 = vld [vmem:[#allocation5 + $0x6f8] sm:$0xff]
        %v745 = vld [vmem:[#allocation5 + $0x700] sm:$0xff]
        %v746 = vld [vmem:[#allocation5 + $0x708] sm:$0xff]
        %v747 = vld [vmem:[#allocation5 + $0x710] sm:$0xff]
        %v748 = vld [vmem:[#allocation5 + $0x718] sm:$0xff]
        %v749 = vld [vmem:[#allocation5 + $0x720] sm:$0xff]
        %v750 = vld [vmem:[#allocation5 + $0x728] sm:$0xff]
        %v751 = vld [vmem:[#allocation5 + $0x730] sm:$0xff]
        %v752 = vld [vmem:[#allocation5 + $0x738] sm:$0xff]
        %v753 = vld [vmem:[#allocation5 + $0x740] sm:$0xff]
        %v754 = vld [vmem:[#allocation5 + $0x748] sm:$0xff]
        %v755 = vld [vmem:[#allocation5 + $0x750] sm:$0xff]
        %v756 = vld [vmem:[#allocation5 + $0x758] sm:$0xff]
        %v757 = vld [vmem:[#allocation5 + $0x760] sm:$0xff]
        %v758 = vld [vmem:[#allocation5 + $0x768] sm:$0xff]
        %v759 = vld [vmem:[#allocation5 + $0x770] sm:$0xff]
        %v760 = vld [vmem:[#allocation5 + $0x778] sm:$0xff]
        %v761 = vld [vmem:[#allocation5 + $0x780] sm:$0xff]
        %v762 = vld [vmem:[#allocation5 + $0x788] sm:$0xff]
        %v763 = vld [vmem:[#allocation5 + $0x790] sm:$0xff]
        %v764 = vld [vmem:[#allocation5 + $0x798] sm:$0xff]
        %v765 = vld [vmem:[#allocation5 + $0x7a0] sm:$0xff]
        %v766 = vld [vmem:[#allocation5 + $0x7a8] sm:$0xff]
        %v767 = vld [vmem:[#allocation5 + $0x7b0] sm:$0xff]
        %v768 = vld [vmem:[#allocation5 + $0x7b8] sm:$0xff]
        %v769 = vld [vmem:[#allocation5 + $0x7c0] sm:$0xff]
        %v770 = vld [vmem:[#allocation5 + $0x7c8] sm:$0xff]
        %v771 = vld [vmem:[%s2] sm:$0xf]
        %v773 = vlaneseq
        %v774 = vshrl.u32 %v773, 7
        %v775 = vsub.s32 0, %v774
        %v776 = vrot.slane %v771, %v775
        %v777 = vlaneseq
        %v778 = vshrl.u32 %v777, 7
        %v779 = vsub.s32 1, %v778
        %v780 = vrot.slane %v771, %v779
        %v781 = vlaneseq
        %v782 = vshrl.u32 %v781, 7
        %v783 = vsub.s32 2, %v782
        %v784 = vrot.slane %v771, %v783
        %v785 = vlaneseq
        %v786 = vshrl.u32 %v785, 7
        %v787 = vsub.s32 3, %v786
        %v788 = vrot.slane %v771, %v787
        %v1043 = vunpack.c.l.b16 %v521
        %v1044 = vunpack.c.h.b16 %v521
        %v1045 = vunpack.c.l.b16 %v522
        %v1046 = vunpack.c.h.b16 %v522
        %v1047 = vunpack.c.l.b16 %v523
        %v1048 = vunpack.c.h.b16 %v523
        %v1049 = vunpack.c.l.b16 %v524
        %v1050 = vunpack.c.h.b16 %v524
        %v1051 = vunpack.c.l.b16 %v525
        %v1052 = vunpack.c.h.b16 %v525
        %v1053 = vunpack.c.l.b16 %v526
        %v1054 = vunpack.c.h.b16 %v526
        %v1055 = vunpack.c.l.b16 %v527
        %v1056 = vunpack.c.h.b16 %v527
        %v1057 = vunpack.c.l.b16 %v528
        %v1058 = vunpack.c.h.b16 %v528
        %v1059 = vunpack.c.l.b16 %v529
        %v1060 = vunpack.c.h.b16 %v529
        %v1061 = vunpack.c.l.b16 %v530
        %v1062 = vunpack.c.h.b16 %v530
        %v1063 = vunpack.c.l.b16 %v531
        %v1064 = vunpack.c.h.b16 %v531
        %v1065 = vunpack.c.l.b16 %v532
        %v1066 = vunpack.c.h.b16 %v532
        %v1067 = vunpack.c.l.b16 %v533
        %v1068 = vunpack.c.h.b16 %v533
        %v1069 = vunpack.c.l.b16 %v534
        %v1070 = vunpack.c.h.b16 %v534
        %v1071 = vunpack.c.l.b16 %v535
        %v1072 = vunpack.c.h.b16 %v535
        %v1073 = vunpack.c.l.b16 %v536
        %v1074 = vunpack.c.h.b16 %v536
        %v1075 = vunpack.c.l.b16 %v537
        %v1076 = vunpack.c.h.b16 %v537
        %v1077 = vunpack.c.l.b16 %v538
        %v1078 = vunpack.c.h.b16 %v538
        %v1079 = vunpack.c.l.b16 %v539
        %v1080 = vunpack.c.h.b16 %v539
        %v1081 = vunpack.c.l.b16 %v540
        %v1082 = vunpack.c.h.b16 %v540
        %v1083 = vunpack.c.l.b16 %v541
        %v1084 = vunpack.c.h.b16 %v541
        %v1085 = vunpack.c.l.b16 %v542
        %v1086 = vunpack.c.h.b16 %v542
        %v1087 = vunpack.c.l.b16 %v543
        %v1088 = vunpack.c.h.b16 %v543
        %v1089 = vunpack.c.l.b16 %v544
        %v1090 = vunpack.c.h.b16 %v544
        %v1091 = vunpack.c.l.b16 %v545
        %v1092 = vunpack.c.h.b16 %v545
        %v1093 = vunpack.c.l.b16 %v546
        %v1094 = vunpack.c.h.b16 %v546
        %v1095 = vunpack.c.l.b16 %v547
        %v1096 = vunpack.c.h.b16 %v547
        %v1097 = vunpack.c.l.b16 %v548
        %v1098 = vunpack.c.h.b16 %v548
        %v1099 = vunpack.c.l.b16 %v549
        %v1100 = vunpack.c.h.b16 %v549
        %v1101 = vunpack.c.l.b16 %v550
        %v1102 = vunpack.c.h.b16 %v550
        %v1103 = vunpack.c.l.b16 %v551
        %v1104 = vunpack.c.h.b16 %v551
        %v1105 = vunpack.c.l.b16 %v552
        %v1106 = vunpack.c.h.b16 %v552
        %v1107 = vunpack.c.l.b16 %v553
        %v1108 = vunpack.c.h.b16 %v553
        %v1109 = vunpack.c.l.b16 %v554
        %v1110 = vunpack.c.h.b16 %v554
        %v1111 = vunpack.c.l.b16 %v555
        %v1112 = vunpack.c.h.b16 %v555
        %v1113 = vunpack.c.l.b16 %v556
        %v1114 = vunpack.c.h.b16 %v556
        %v1115 = vunpack.c.l.b16 %v557
        %v1116 = vunpack.c.h.b16 %v557
        %v1117 = vunpack.c.l.b16 %v558
        %v1118 = vunpack.c.h.b16 %v558
        %v1119 = vunpack.c.l.b16 %v559
        %v1120 = vunpack.c.h.b16 %v559
        %v1121 = vunpack.c.l.b16 %v560
        %v1122 = vunpack.c.h.b16 %v560
        %v1123 = vunpack.c.l.b16 %v561
        %v1124 = vunpack.c.h.b16 %v561
        %v1125 = vunpack.c.l.b16 %v562
        %v1126 = vunpack.c.h.b16 %v562
        %v1127 = vunpack.c.l.b16 %v563
        %v1128 = vunpack.c.h.b16 %v563
        %v1129 = vunpack.c.l.b16 %v564
        %v1130 = vunpack.c.h.b16 %v564
        %v1131 = vunpack.c.l.b16 %v565
        %v1132 = vunpack.c.h.b16 %v565
        %v1133 = vunpack.c.l.b16 %v566
        %v1134 = vunpack.c.h.b16 %v566
        %v1135 = vunpack.c.l.b16 %v567
        %v1136 = vunpack.c.h.b16 %v567
        %v1137 = vunpack.c.l.b16 %v568
        %v1138 = vunpack.c.h.b16 %v568
        %v1139 = vunpack.c.l.b16 %v569
        %v1140 = vunpack.c.h.b16 %v569
        %v1141 = vunpack.c.l.b16 %v570
        %v1142 = vunpack.c.h.b16 %v570
        %v1143 = vunpack.c.l.b16 %v571
        %v1144 = vunpack.c.h.b16 %v571
        %v1145 = vunpack.c.l.b16 %v572
        %v1146 = vunpack.c.h.b16 %v572
        %v1147 = vunpack.c.l.b16 %v573
        %v1148 = vunpack.c.h.b16 %v573
        %v1149 = vunpack.c.l.b16 %v574
        %v1150 = vunpack.c.h.b16 %v574
        %v1151 = vunpack.c.l.b16 %v575
        %v1152 = vunpack.c.h.b16 %v575
        %v1153 = vunpack.c.l.b16 %v576
        %v1154 = vunpack.c.h.b16 %v576
        %v1155 = vunpack.c.l.b16 %v577
        %v1156 = vunpack.c.h.b16 %v577
        %v1157 = vunpack.c.l.b16 %v578
        %v1158 = vunpack.c.h.b16 %v578
        %v1159 = vunpack.c.l.b16 %v579
        %v1160 = vunpack.c.h.b16 %v579
        %v1161 = vunpack.c.l.b16 %v580
        %v1162 = vunpack.c.h.b16 %v580
        %v1163 = vunpack.c.l.b16 %v581
        %v1164 = vunpack.c.h.b16 %v581
        %v1165 = vunpack.c.l.b16 %v582
        %v1166 = vunpack.c.h.b16 %v582
        %v1167 = vunpack.c.l.b16 %v583
        %v1168 = vunpack.c.h.b16 %v583
        %v1169 = vunpack.c.l.b16 %v584
        %v1170 = vunpack.c.h.b16 %v584
        %v1171 = vunpack.c.l.b16 %v585
        %v1172 = vunpack.c.h.b16 %v585
        %v1173 = vunpack.c.l.b16 %v586
        %v1174 = vunpack.c.h.b16 %v586
        %v1175 = vunpack.c.l.b16 %v587
        %v1176 = vunpack.c.h.b16 %v587
        %v1177 = vunpack.c.l.b16 %v588
        %v1178 = vunpack.c.h.b16 %v588
        %v1179 = vunpack.c.l.b16 %v589
        %v1180 = vunpack.c.h.b16 %v589
        %v1181 = vunpack.c.l.b16 %v590
        %v1182 = vunpack.c.h.b16 %v590
        %v1183 = vunpack.c.l.b16 %v591
        %v1184 = vunpack.c.h.b16 %v591
        %v1185 = vunpack.c.l.b16 %v592
        %v1186 = vunpack.c.h.b16 %v592
        %v1187 = vunpack.c.l.b16 %v593
        %v1188 = vunpack.c.h.b16 %v593
        %v1189 = vunpack.c.l.b16 %v594
        %v1190 = vunpack.c.h.b16 %v594
        %v1191 = vunpack.c.l.b16 %v595
        %v1192 = vunpack.c.h.b16 %v595
        %v1193 = vunpack.c.l.b16 %v596
        %v1194 = vunpack.c.h.b16 %v596
        %v1195 = vunpack.c.l.b16 %v597
        %v1196 = vunpack.c.h.b16 %v597
        %v1197 = vunpack.c.l.b16 %v598
        %v1198 = vunpack.c.h.b16 %v598
        %v1199 = vunpack.c.l.b16 %v599
        %v1200 = vunpack.c.h.b16 %v599
        %v1201 = vunpack.c.l.b16 %v600
        %v1202 = vunpack.c.h.b16 %v600
        %v1203 = vunpack.c.l.b16 %v601
        %v1204 = vunpack.c.h.b16 %v601
        %v1205 = vunpack.c.l.b16 %v602
        %v1206 = vunpack.c.h.b16 %v602
        %v1207 = vunpack.c.l.b16 %v603
        %v1208 = vunpack.c.h.b16 %v603
        %v1209 = vunpack.c.l.b16 %v604
        %v1210 = vunpack.c.h.b16 %v604
        %v1211 = vunpack.c.l.b16 %v605
        %v1212 = vunpack.c.h.b16 %v605
        %v1213 = vunpack.c.l.b16 %v606
        %v1214 = vunpack.c.h.b16 %v606
        %v1215 = vunpack.c.l.b16 %v607
        %v1216 = vunpack.c.h.b16 %v607
        %v1217 = vunpack.c.l.b16 %v608
        %v1218 = vunpack.c.h.b16 %v608
        %v1219 = vunpack.c.l.b16 %v609
        %v1220 = vunpack.c.h.b16 %v609
        %v1221 = vunpack.c.l.b16 %v610
        %v1222 = vunpack.c.h.b16 %v610
        %v1223 = vunpack.c.l.b16 %v611
        %v1224 = vunpack.c.h.b16 %v611
        %v1225 = vunpack.c.l.b16 %v612
        %v1226 = vunpack.c.h.b16 %v612
        %v1227 = vunpack.c.l.b16 %v613
        %v1228 = vunpack.c.h.b16 %v613
        %v1229 = vunpack.c.l.b16 %v614
        %v1230 = vunpack.c.h.b16 %v614
        %v1231 = vunpack.c.l.b16 %v615
        %v1232 = vunpack.c.h.b16 %v615
        %v1233 = vunpack.c.l.b16 %v616
        %v1234 = vunpack.c.h.b16 %v616
        %v1235 = vunpack.c.l.b16 %v617
        %v1236 = vunpack.c.h.b16 %v617
        %v1237 = vunpack.c.l.b16 %v618
        %v1238 = vunpack.c.h.b16 %v618
        %v1239 = vunpack.c.l.b16 %v619
        %v1240 = vunpack.c.h.b16 %v619
        %v1241 = vunpack.c.l.b16 %v620
        %v1242 = vunpack.c.h.b16 %v620
        %v1243 = vunpack.c.l.b16 %v621
        %v1244 = vunpack.c.h.b16 %v621
        %v1245 = vunpack.c.l.b16 %v622
        %v1246 = vunpack.c.h.b16 %v622
        %v1247 = vunpack.c.l.b16 %v623
        %v1248 = vunpack.c.h.b16 %v623
        %v1249 = vunpack.c.l.b16 %v624
        %v1250 = vunpack.c.h.b16 %v624
        %v1251 = vunpack.c.l.b16 %v625
        %v1252 = vunpack.c.h.b16 %v625
        %v1253 = vunpack.c.l.b16 %v626
        %v1254 = vunpack.c.h.b16 %v626
        %v1255 = vunpack.c.l.b16 %v627
        %v1256 = vunpack.c.h.b16 %v627
        %v1257 = vunpack.c.l.b16 %v628
        %v1258 = vunpack.c.h.b16 %v628
        %v1259 = vunpack.c.l.b16 %v629
        %v1260 = vunpack.c.h.b16 %v629
        %v1261 = vunpack.c.l.b16 %v630
        %v1262 = vunpack.c.h.b16 %v630
        %v1263 = vunpack.c.l.b16 %v631
        %v1264 = vunpack.c.h.b16 %v631
        %v1265 = vunpack.c.l.b16 %v632
        %v1266 = vunpack.c.h.b16 %v632
        %v1267 = vunpack.c.l.b16 %v633
        %v1268 = vunpack.c.h.b16 %v633
        %v1269 = vunpack.c.l.b16 %v634
        %v1270 = vunpack.c.h.b16 %v634
        %v1271 = vunpack.c.l.b16 %v635
        %v1272 = vunpack.c.h.b16 %v635
        %v1273 = vunpack.c.l.b16 %v636
        %v1274 = vunpack.c.h.b16 %v636
        %v1275 = vunpack.c.l.b16 %v637
        %v1276 = vunpack.c.h.b16 %v637
        %v1277 = vunpack.c.l.b16 %v638
        %v1278 = vunpack.c.h.b16 %v638
        %v1279 = vunpack.c.l.b16 %v639
        %v1280 = vunpack.c.h.b16 %v639
        %v1281 = vunpack.c.l.b16 %v640
        %v1282 = vunpack.c.h.b16 %v640
        %v1283 = vunpack.c.l.b16 %v641
        %v1284 = vunpack.c.h.b16 %v641
        %v1285 = vunpack.c.l.b16 %v642
        %v1286 = vunpack.c.h.b16 %v642
        %v1287 = vunpack.c.l.b16 %v643
        %v1288 = vunpack.c.h.b16 %v643
        %v1289 = vunpack.c.l.b16 %v644
        %v1290 = vunpack.c.h.b16 %v644
        %v1291 = vunpack.c.l.b16 %v645
        %v1292 = vunpack.c.h.b16 %v645
        %v1293 = vunpack.c.l.b16 %v646
        %v1294 = vunpack.c.h.b16 %v646
        %v1295 = vunpack.c.l.b16 %v647
        %v1296 = vunpack.c.h.b16 %v647
        %v1297 = vunpack.c.l.b16 %v648
        %v1298 = vunpack.c.h.b16 %v648
        %v1299 = vunpack.c.l.b16 %v649
        %v1300 = vunpack.c.h.b16 %v649
        %v1301 = vunpack.c.l.b16 %v650
        %v1302 = vunpack.c.h.b16 %v650
        %v1303 = vunpack.c.l.b16 %v651
        %v1304 = vunpack.c.h.b16 %v651
        %v1305 = vunpack.c.l.b16 %v652
        %v1306 = vunpack.c.h.b16 %v652
        %v1307 = vunpack.c.l.b16 %v653
        %v1308 = vunpack.c.h.b16 %v653
        %v1309 = vunpack.c.l.b16 %v654
        %v1310 = vunpack.c.h.b16 %v654
        %v1311 = vunpack.c.l.b16 %v655
        %v1312 = vunpack.c.h.b16 %v655
        %v1313 = vunpack.c.l.b16 %v656
        %v1314 = vunpack.c.h.b16 %v656
        %v1315 = vunpack.c.l.b16 %v657
        %v1316 = vunpack.c.h.b16 %v657
        %v1317 = vunpack.c.l.b16 %v658
        %v1318 = vunpack.c.h.b16 %v658
        %v1319 = vunpack.c.l.b16 %v659
        %v1320 = vunpack.c.h.b16 %v659
        %v1321 = vunpack.c.l.b16 %v660
        %v1322 = vunpack.c.h.b16 %v660
        %v1323 = vunpack.c.l.b16 %v661
        %v1324 = vunpack.c.h.b16 %v661
        %v1325 = vunpack.c.l.b16 %v662
        %v1326 = vunpack.c.h.b16 %v662
        %v1327 = vunpack.c.l.b16 %v663
        %v1328 = vunpack.c.h.b16 %v663
        %v1329 = vunpack.c.l.b16 %v664
        %v1330 = vunpack.c.h.b16 %v664
        %v1331 = vunpack.c.l.b16 %v665
        %v1332 = vunpack.c.h.b16 %v665
        %v1333 = vunpack.c.l.b16 %v666
        %v1334 = vunpack.c.h.b16 %v666
        %v1335 = vunpack.c.l.b16 %v667
        %v1336 = vunpack.c.h.b16 %v667
        %v1337 = vunpack.c.l.b16 %v668
        %v1338 = vunpack.c.h.b16 %v668
        %v1339 = vunpack.c.l.b16 %v669
        %v1340 = vunpack.c.h.b16 %v669
        %v1341 = vunpack.c.l.b16 %v670
        %v1342 = vunpack.c.h.b16 %v670
        %v1343 = vunpack.c.l.b16 %v671
        %v1344 = vunpack.c.h.b16 %v671
        %v1345 = vunpack.c.l.b16 %v672
        %v1346 = vunpack.c.h.b16 %v672
        %v1347 = vunpack.c.l.b16 %v673
        %v1348 = vunpack.c.h.b16 %v673
        %v1349 = vunpack.c.l.b16 %v674
        %v1350 = vunpack.c.h.b16 %v674
        %v1351 = vunpack.c.l.b16 %v675
        %v1352 = vunpack.c.h.b16 %v675
        %v1353 = vunpack.c.l.b16 %v676
        %v1354 = vunpack.c.h.b16 %v676
        %v1355 = vunpack.c.l.b16 %v677
        %v1356 = vunpack.c.h.b16 %v677
        %v1357 = vunpack.c.l.b16 %v678
        %v1358 = vunpack.c.h.b16 %v678
        %v1359 = vunpack.c.l.b16 %v679
        %v1360 = vunpack.c.h.b16 %v679
        %v1361 = vunpack.c.l.b16 %v680
        %v1362 = vunpack.c.h.b16 %v680
        %v1363 = vunpack.c.l.b16 %v681
        %v1364 = vunpack.c.h.b16 %v681
        %v1365 = vunpack.c.l.b16 %v682
        %v1366 = vunpack.c.h.b16 %v682
        %v1367 = vunpack.c.l.b16 %v683
        %v1368 = vunpack.c.h.b16 %v683
        %v1369 = vunpack.c.l.b16 %v684
        %v1370 = vunpack.c.h.b16 %v684
        %v1371 = vunpack.c.l.b16 %v685
        %v1372 = vunpack.c.h.b16 %v685
        %v1373 = vunpack.c.l.b16 %v686
        %v1374 = vunpack.c.h.b16 %v686
        %v1375 = vunpack.c.l.b16 %v687
        %v1376 = vunpack.c.h.b16 %v687
        %v1377 = vunpack.c.l.b16 %v688
        %v1378 = vunpack.c.h.b16 %v688
        %v1379 = vunpack.c.l.b16 %v689
        %v1380 = vunpack.c.h.b16 %v689
        %v1381 = vunpack.c.l.b16 %v690
        %v1382 = vunpack.c.h.b16 %v690
        %v1383 = vunpack.c.l.b16 %v691
        %v1384 = vunpack.c.h.b16 %v691
        %v1385 = vunpack.c.l.b16 %v692
        %v1386 = vunpack.c.h.b16 %v692
        %v1387 = vunpack.c.l.b16 %v693
        %v1388 = vunpack.c.h.b16 %v693
        %v1389 = vunpack.c.l.b16 %v694
        %v1390 = vunpack.c.h.b16 %v694
        %v1391 = vunpack.c.l.b16 %v695
        %v1392 = vunpack.c.h.b16 %v695
        %v1393 = vunpack.c.l.b16 %v696
        %v1394 = vunpack.c.h.b16 %v696
        %v1395 = vunpack.c.l.b16 %v697
        %v1396 = vunpack.c.h.b16 %v697
        %v1397 = vunpack.c.l.b16 %v698
        %v1398 = vunpack.c.h.b16 %v698
        %v1399 = vunpack.c.l.b16 %v699
        %v1400 = vunpack.c.h.b16 %v699
        %v1401 = vunpack.c.l.b16 %v700
        %v1402 = vunpack.c.h.b16 %v700
        %v1403 = vunpack.c.l.b16 %v701
        %v1404 = vunpack.c.h.b16 %v701
        %v1405 = vunpack.c.l.b16 %v702
        %v1406 = vunpack.c.h.b16 %v702
        %v1407 = vunpack.c.l.b16 %v703
        %v1408 = vunpack.c.h.b16 %v703
        %v1409 = vunpack.c.l.b16 %v704
        %v1410 = vunpack.c.h.b16 %v704
        %v1411 = vunpack.c.l.b16 %v705
        %v1412 = vunpack.c.h.b16 %v705
        %v1413 = vunpack.c.l.b16 %v706
        %v1414 = vunpack.c.h.b16 %v706
        %v1415 = vunpack.c.l.b16 %v707
        %v1416 = vunpack.c.h.b16 %v707
        %v1417 = vunpack.c.l.b16 %v708
        %v1418 = vunpack.c.h.b16 %v708
        %v1419 = vunpack.c.l.b16 %v709
        %v1420 = vunpack.c.h.b16 %v709
        %v1421 = vunpack.c.l.b16 %v710
        %v1422 = vunpack.c.h.b16 %v710
        %v1423 = vunpack.c.l.b16 %v711
        %v1424 = vunpack.c.h.b16 %v711
        %v1425 = vunpack.c.l.b16 %v712
        %v1426 = vunpack.c.h.b16 %v712
        %v1427 = vunpack.c.l.b16 %v713
        %v1428 = vunpack.c.h.b16 %v713
        %v1429 = vunpack.c.l.b16 %v714
        %v1430 = vunpack.c.h.b16 %v714
        %v1431 = vunpack.c.l.b16 %v715
        %v1432 = vunpack.c.h.b16 %v715
        %v1433 = vunpack.c.l.b16 %v716
        %v1434 = vunpack.c.h.b16 %v716
        %v1435 = vunpack.c.l.b16 %v717
        %v1436 = vunpack.c.h.b16 %v717
        %v1437 = vunpack.c.l.b16 %v718
        %v1438 = vunpack.c.h.b16 %v718
        %v1439 = vunpack.c.l.b16 %v719
        %v1440 = vunpack.c.h.b16 %v719
        %v1441 = vunpack.c.l.b16 %v720
        %v1442 = vunpack.c.h.b16 %v720
        %v1443 = vunpack.c.l.b16 %v721
        %v1444 = vunpack.c.h.b16 %v721
        %v1445 = vunpack.c.l.b16 %v722
        %v1446 = vunpack.c.h.b16 %v722
        %v1447 = vunpack.c.l.b16 %v723
        %v1448 = vunpack.c.h.b16 %v723
        %v1449 = vunpack.c.l.b16 %v724
        %v1450 = vunpack.c.h.b16 %v724
        %v1451 = vunpack.c.l.b16 %v725
        %v1452 = vunpack.c.h.b16 %v725
        %v1453 = vunpack.c.l.b16 %v726
        %v1454 = vunpack.c.h.b16 %v726
        %v1455 = vunpack.c.l.b16 %v727
        %v1456 = vunpack.c.h.b16 %v727
        %v1457 = vunpack.c.l.b16 %v728
        %v1458 = vunpack.c.h.b16 %v728
        %v1459 = vunpack.c.l.b16 %v729
        %v1460 = vunpack.c.h.b16 %v729
        %v1461 = vunpack.c.l.b16 %v730
        %v1462 = vunpack.c.h.b16 %v730
        %v1463 = vunpack.c.l.b16 %v731
        %v1464 = vunpack.c.h.b16 %v731
        %v1465 = vunpack.c.l.b16 %v732
        %v1466 = vunpack.c.h.b16 %v732
        %v1467 = vunpack.c.l.b16 %v733
        %v1468 = vunpack.c.h.b16 %v733
        %v1469 = vunpack.c.l.b16 %v734
        %v1470 = vunpack.c.h.b16 %v734
        %v1471 = vunpack.c.l.b16 %v735
        %v1472 = vunpack.c.h.b16 %v735
        %v1473 = vunpack.c.l.b16 %v736
        %v1474 = vunpack.c.h.b16 %v736
        %v1475 = vunpack.c.l.b16 %v737
        %v1476 = vunpack.c.h.b16 %v737
        %v1477 = vunpack.c.l.b16 %v738
        %v1478 = vunpack.c.h.b16 %v738
        %v1479 = vunpack.c.l.b16 %v739
        %v1480 = vunpack.c.h.b16 %v739
        %v1481 = vunpack.c.l.b16 %v740
        %v1482 = vunpack.c.h.b16 %v740
        %v1483 = vunpack.c.l.b16 %v741
        %v1484 = vunpack.c.h.b16 %v741
        %v1485 = vunpack.c.l.b16 %v742
        %v1486 = vunpack.c.h.b16 %v742
        %v1487 = vunpack.c.l.b16 %v743
        %v1488 = vunpack.c.h.b16 %v743
        %v1489 = vunpack.c.l.b16 %v744
        %v1490 = vunpack.c.h.b16 %v744
        %v1491 = vunpack.c.l.b16 %v745
        %v1492 = vunpack.c.h.b16 %v745
        %v1493 = vunpack.c.l.b16 %v746
        %v1494 = vunpack.c.h.b16 %v746
        %v1495 = vunpack.c.l.b16 %v747
        %v1496 = vunpack.c.h.b16 %v747
        %v1497 = vunpack.c.l.b16 %v748
        %v1498 = vunpack.c.h.b16 %v748
        %v1499 = vunpack.c.l.b16 %v749
        %v1500 = vunpack.c.h.b16 %v749
        %v1501 = vunpack.c.l.b16 %v750
        %v1502 = vunpack.c.h.b16 %v750
        %v1503 = vunpack.c.l.b16 %v751
        %v1504 = vunpack.c.h.b16 %v751
        %v1505 = vunpack.c.l.b16 %v752
        %v1506 = vunpack.c.h.b16 %v752
        %v1507 = vunpack.c.l.b16 %v753
        %v1508 = vunpack.c.h.b16 %v753
        %v1509 = vunpack.c.l.b16 %v754
        %v1510 = vunpack.c.h.b16 %v754
        %v1511 = vunpack.c.l.b16 %v755
        %v1512 = vunpack.c.h.b16 %v755
        %v1513 = vunpack.c.l.b16 %v756
        %v1514 = vunpack.c.h.b16 %v756
        %v1515 = vunpack.c.l.b16 %v757
        %v1516 = vunpack.c.h.b16 %v757
        %v1517 = vunpack.c.l.b16 %v758
        %v1518 = vunpack.c.h.b16 %v758
        %v1519 = vunpack.c.l.b16 %v759
        %v1520 = vunpack.c.h.b16 %v759
        %v1521 = vunpack.c.l.b16 %v760
        %v1522 = vunpack.c.h.b16 %v760
        %v1523 = vunpack.c.l.b16 %v761
        %v1524 = vunpack.c.h.b16 %v761
        %v1525 = vunpack.c.l.b16 %v762
        %v1526 = vunpack.c.h.b16 %v762
        %v1527 = vunpack.c.l.b16 %v763
        %v1528 = vunpack.c.h.b16 %v763
        %v1529 = vunpack.c.l.b16 %v764
        %v1530 = vunpack.c.h.b16 %v764
        %v1531 = vunpack.c.l.b16 %v765
        %v1532 = vunpack.c.h.b16 %v765
        %v1533 = vunpack.c.l.b16 %v766
        %v1534 = vunpack.c.h.b16 %v766
        %v1535 = vunpack.c.l.b16 %v767
        %v1536 = vunpack.c.h.b16 %v767
        %v1537 = vunpack.c.l.b16 %v768
        %v1538 = vunpack.c.h.b16 %v768
        %v1539 = vunpack.c.l.b16 %v769
        %v1540 = vunpack.c.h.b16 %v769
        %v1541 = vunpack.c.l.b16 %v770
        %v1542 = vunpack.c.h.b16 %v770
        %v1543 = vpack.c.b16 %v1047, %v1043
        %v1544 = vpack.c.b16 %v1048, %v1044
        %v1545 = vpack.c.b16 %v1049, %v1045
        %v1546 = vpack.c.b16 %v1050, %v1046
        %v1547 = vpack.c.b16 %v1055, %v1051
        %v1548 = vpack.c.b16 %v1056, %v1052
        %v1549 = vpack.c.b16 %v1057, %v1053
        %v1550 = vpack.c.b16 %v1058, %v1054
        %v1551 = vpack.c.b16 %v1063, %v1059
        %v1552 = vpack.c.b16 %v1064, %v1060
        %v1553 = vpack.c.b16 %v1065, %v1061
        %v1554 = vpack.c.b16 %v1066, %v1062
        %v1555 = vpack.c.b16 %v1071, %v1067
        %v1556 = vpack.c.b16 %v1072, %v1068
        %v1557 = vpack.c.b16 %v1073, %v1069
        %v1558 = vpack.c.b16 %v1074, %v1070
        %v1559 = vpack.c.b16 %v1079, %v1075
        %v1560 = vpack.c.b16 %v1080, %v1076
        %v1561 = vpack.c.b16 %v1081, %v1077
        %v1562 = vpack.c.b16 %v1082, %v1078
        %v1563 = vpack.c.b16 %v1087, %v1083
        %v1564 = vpack.c.b16 %v1088, %v1084
        %v1565 = vpack.c.b16 %v1089, %v1085
        %v1566 = vpack.c.b16 %v1090, %v1086
        %v1567 = vpack.c.b16 %v1095, %v1091
        %v1568 = vpack.c.b16 %v1096, %v1092
        %v1569 = vpack.c.b16 %v1097, %v1093
        %v1570 = vpack.c.b16 %v1098, %v1094
        %v1571 = vpack.c.b16 %v1103, %v1099
        %v1572 = vpack.c.b16 %v1104, %v1100
        %v1573 = vpack.c.b16 %v1105, %v1101
        %v1574 = vpack.c.b16 %v1106, %v1102
        %v1575 = vpack.c.b16 %v1111, %v1107
        %v1576 = vpack.c.b16 %v1112, %v1108
        %v1577 = vpack.c.b16 %v1113, %v1109
        %v1578 = vpack.c.b16 %v1114, %v1110
        %v1579 = vpack.c.b16 %v1119, %v1115
        %v1580 = vpack.c.b16 %v1120, %v1116
        %v1581 = vpack.c.b16 %v1121, %v1117
        %v1582 = vpack.c.b16 %v1122, %v1118
        %v1583 = vpack.c.b16 %v1127, %v1123
        %v1584 = vpack.c.b16 %v1128, %v1124
        %v1585 = vpack.c.b16 %v1129, %v1125
        %v1586 = vpack.c.b16 %v1130, %v1126
        %v1587 = vpack.c.b16 %v1135, %v1131
        %v1588 = vpack.c.b16 %v1136, %v1132
        %v1589 = vpack.c.b16 %v1137, %v1133
        %v1590 = vpack.c.b16 %v1138, %v1134
        %v1591 = vpack.c.b16 %v1143, %v1139
        %v1592 = vpack.c.b16 %v1144, %v1140
        %v1593 = vpack.c.b16 %v1145, %v1141
        %v1594 = vpack.c.b16 %v1146, %v1142
        %v1595 = vpack.c.b16 %v1151, %v1147
        %v1596 = vpack.c.b16 %v1152, %v1148
        %v1597 = vpack.c.b16 %v1153, %v1149
        %v1598 = vpack.c.b16 %v1154, %v1150
        %v1599 = vpack.c.b16 %v1159, %v1155
        %v1600 = vpack.c.b16 %v1160, %v1156
        %v1601 = vpack.c.b16 %v1161, %v1157
        %v1602 = vpack.c.b16 %v1162, %v1158
        %v1603 = vpack.c.b16 %v1167, %v1163
        %v1604 = vpack.c.b16 %v1168, %v1164
        %v1605 = vpack.c.b16 %v1169, %v1165
        %v1606 = vpack.c.b16 %v1170, %v1166
        %v1607 = vpack.c.b16 %v1175, %v1171
        %v1608 = vpack.c.b16 %v1176, %v1172
        %v1609 = vpack.c.b16 %v1177, %v1173
        %v1610 = vpack.c.b16 %v1178, %v1174
        %v1611 = vpack.c.b16 %v1183, %v1179
        %v1612 = vpack.c.b16 %v1184, %v1180
        %v1613 = vpack.c.b16 %v1185, %v1181
        %v1614 = vpack.c.b16 %v1186, %v1182
        %v1615 = vpack.c.b16 %v1191, %v1187
        %v1616 = vpack.c.b16 %v1192, %v1188
        %v1617 = vpack.c.b16 %v1193, %v1189
        %v1618 = vpack.c.b16 %v1194, %v1190
        %v1619 = vpack.c.b16 %v1199, %v1195
        %v1620 = vpack.c.b16 %v1200, %v1196
        %v1621 = vpack.c.b16 %v1201, %v1197
        %v1622 = vpack.c.b16 %v1202, %v1198
        %v1623 = vpack.c.b16 %v1207, %v1203
        %v1624 = vpack.c.b16 %v1208, %v1204
        %v1625 = vpack.c.b16 %v1209, %v1205
        %v1626 = vpack.c.b16 %v1210, %v1206
        %v1627 = vpack.c.b16 %v1215, %v1211
        %v1628 = vpack.c.b16 %v1216, %v1212
        %v1629 = vpack.c.b16 %v1217, %v1213
        %v1630 = vpack.c.b16 %v1218, %v1214
        %v1631 = vpack.c.b16 %v1223, %v1219
        %v1632 = vpack.c.b16 %v1224, %v1220
        %v1633 = vpack.c.b16 %v1225, %v1221
        %v1634 = vpack.c.b16 %v1226, %v1222
        %v1635 = vpack.c.b16 %v1231, %v1227
        %v1636 = vpack.c.b16 %v1232, %v1228
        %v1637 = vpack.c.b16 %v1233, %v1229
        %v1638 = vpack.c.b16 %v1234, %v1230
        %v1639 = vpack.c.b16 %v1239, %v1235
        %v1640 = vpack.c.b16 %v1240, %v1236
        %v1641 = vpack.c.b16 %v1241, %v1237
        %v1642 = vpack.c.b16 %v1242, %v1238
        %v1643 = vpack.c.b16 %v1247, %v1243
        %v1644 = vpack.c.b16 %v1248, %v1244
        %v1645 = vpack.c.b16 %v1249, %v1245
        %v1646 = vpack.c.b16 %v1250, %v1246
        %v1647 = vpack.c.b16 %v1255, %v1251
        %v1648 = vpack.c.b16 %v1256, %v1252
        %v1649 = vpack.c.b16 %v1257, %v1253
        %v1650 = vpack.c.b16 %v1258, %v1254
        %v1651 = vpack.c.b16 %v1263, %v1259
        %v1652 = vpack.c.b16 %v1264, %v1260
        %v1653 = vpack.c.b16 %v1265, %v1261
        %v1654 = vpack.c.b16 %v1266, %v1262
        %v1655 = vpack.c.b16 %v1271, %v1267
        %v1656 = vpack.c.b16 %v1272, %v1268
        %v1657 = vpack.c.b16 %v1273, %v1269
        %v1658 = vpack.c.b16 %v1274, %v1270
        %v1659 = vpack.c.b16 %v1279, %v1275
        %v1660 = vpack.c.b16 %v1280, %v1276
        %v1661 = vpack.c.b16 %v1281, %v1277
        %v1662 = vpack.c.b16 %v1282, %v1278
        %v1663 = vpack.c.b16 %v1287, %v1283
        %v1664 = vpack.c.b16 %v1288, %v1284
        %v1665 = vpack.c.b16 %v1289, %v1285
        %v1666 = vpack.c.b16 %v1290, %v1286
        %v1667 = vpack.c.b16 %v1295, %v1291
        %v1668 = vpack.c.b16 %v1296, %v1292
        %v1669 = vpack.c.b16 %v1297, %v1293
        %v1670 = vpack.c.b16 %v1298, %v1294
        %v1671 = vpack.c.b16 %v1303, %v1299
        %v1672 = vpack.c.b16 %v1304, %v1300
        %v1673 = vpack.c.b16 %v1305, %v1301
        %v1674 = vpack.c.b16 %v1306, %v1302
        %v1675 = vpack.c.b16 %v1311, %v1307
        %v1676 = vpack.c.b16 %v1312, %v1308
        %v1677 = vpack.c.b16 %v1313, %v1309
        %v1678 = vpack.c.b16 %v1314, %v1310
        %v1679 = vpack.c.b16 %v1319, %v1315
        %v1680 = vpack.c.b16 %v1320, %v1316
        %v1681 = vpack.c.b16 %v1321, %v1317
        %v1682 = vpack.c.b16 %v1322, %v1318
        %v1683 = vpack.c.b16 %v1327, %v1323
        %v1684 = vpack.c.b16 %v1328, %v1324
        %v1685 = vpack.c.b16 %v1329, %v1325
        %v1686 = vpack.c.b16 %v1330, %v1326
        %v1687 = vpack.c.b16 %v1335, %v1331
        %v1688 = vpack.c.b16 %v1336, %v1332
        %v1689 = vpack.c.b16 %v1337, %v1333
        %v1690 = vpack.c.b16 %v1338, %v1334
        %v1691 = vpack.c.b16 %v1343, %v1339
        %v1692 = vpack.c.b16 %v1344, %v1340
        %v1693 = vpack.c.b16 %v1345, %v1341
        %v1694 = vpack.c.b16 %v1346, %v1342
        %v1695 = vpack.c.b16 %v1351, %v1347
        %v1696 = vpack.c.b16 %v1352, %v1348
        %v1697 = vpack.c.b16 %v1353, %v1349
        %v1698 = vpack.c.b16 %v1354, %v1350
        %v1699 = vpack.c.b16 %v1359, %v1355
        %v1700 = vpack.c.b16 %v1360, %v1356
        %v1701 = vpack.c.b16 %v1361, %v1357
        %v1702 = vpack.c.b16 %v1362, %v1358
        %v1703 = vpack.c.b16 %v1367, %v1363
        %v1704 = vpack.c.b16 %v1368, %v1364
        %v1705 = vpack.c.b16 %v1369, %v1365
        %v1706 = vpack.c.b16 %v1370, %v1366
        %v1707 = vpack.c.b16 %v1375, %v1371
        %v1708 = vpack.c.b16 %v1376, %v1372
        %v1709 = vpack.c.b16 %v1377, %v1373
        %v1710 = vpack.c.b16 %v1378, %v1374
        %v1711 = vpack.c.b16 %v1383, %v1379
        %v1712 = vpack.c.b16 %v1384, %v1380
        %v1713 = vpack.c.b16 %v1385, %v1381
        %v1714 = vpack.c.b16 %v1386, %v1382
        %v1715 = vpack.c.b16 %v1391, %v1387
        %v1716 = vpack.c.b16 %v1392, %v1388
        %v1717 = vpack.c.b16 %v1393, %v1389
        %v1718 = vpack.c.b16 %v1394, %v1390
        %v1719 = vpack.c.b16 %v1399, %v1395
        %v1720 = vpack.c.b16 %v1400, %v1396
        %v1721 = vpack.c.b16 %v1401, %v1397
        %v1722 = vpack.c.b16 %v1402, %v1398
        %v1723 = vpack.c.b16 %v1407, %v1403
        %v1724 = vpack.c.b16 %v1408, %v1404
        %v1725 = vpack.c.b16 %v1409, %v1405
        %v1726 = vpack.c.b16 %v1410, %v1406
        %v1727 = vpack.c.b16 %v1415, %v1411
        %v1728 = vpack.c.b16 %v1416, %v1412
        %v1729 = vpack.c.b16 %v1417, %v1413
        %v1730 = vpack.c.b16 %v1418, %v1414
        %v1731 = vpack.c.b16 %v1423, %v1419
        %v1732 = vpack.c.b16 %v1424, %v1420
        %v1733 = vpack.c.b16 %v1425, %v1421
        %v1734 = vpack.c.b16 %v1426, %v1422
        %v1735 = vpack.c.b16 %v1431, %v1427
        %v1736 = vpack.c.b16 %v1432, %v1428
        %v1737 = vpack.c.b16 %v1433, %v1429
        %v1738 = vpack.c.b16 %v1434, %v1430
        %v1739 = vpack.c.b16 %v1439, %v1435
        %v1740 = vpack.c.b16 %v1440, %v1436
        %v1741 = vpack.c.b16 %v1441, %v1437
        %v1742 = vpack.c.b16 %v1442, %v1438
        %v1743 = vpack.c.b16 %v1447, %v1443
        %v1744 = vpack.c.b16 %v1448, %v1444
        %v1745 = vpack.c.b16 %v1449, %v1445
        %v1746 = vpack.c.b16 %v1450, %v1446
        %v1747 = vpack.c.b16 %v1455, %v1451
        %v1748 = vpack.c.b16 %v1456, %v1452
        %v1749 = vpack.c.b16 %v1457, %v1453
        %v1750 = vpack.c.b16 %v1458, %v1454
        %v1751 = vpack.c.b16 %v1463, %v1459
        %v1752 = vpack.c.b16 %v1464, %v1460
        %v1753 = vpack.c.b16 %v1465, %v1461
        %v1754 = vpack.c.b16 %v1466, %v1462
        %v1755 = vpack.c.b16 %v1471, %v1467
        %v1756 = vpack.c.b16 %v1472, %v1468
        %v1757 = vpack.c.b16 %v1473, %v1469
        %v1758 = vpack.c.b16 %v1474, %v1470
        %v1759 = vpack.c.b16 %v1479, %v1475
        %v1760 = vpack.c.b16 %v1480, %v1476
        %v1761 = vpack.c.b16 %v1481, %v1477
        %v1762 = vpack.c.b16 %v1482, %v1478
        %v1763 = vpack.c.b16 %v1487, %v1483
        %v1764 = vpack.c.b16 %v1488, %v1484
        %v1765 = vpack.c.b16 %v1489, %v1485
        %v1766 = vpack.c.b16 %v1490, %v1486
        %v1767 = vpack.c.b16 %v1495, %v1491
        %v1768 = vpack.c.b16 %v1496, %v1492
        %v1769 = vpack.c.b16 %v1497, %v1493
        %v1770 = vpack.c.b16 %v1498, %v1494
        %v1771 = vpack.c.b16 %v1503, %v1499
        %v1772 = vpack.c.b16 %v1504, %v1500
        %v1773 = vpack.c.b16 %v1505, %v1501
        %v1774 = vpack.c.b16 %v1506, %v1502
        %v1775 = vpack.c.b16 %v1511, %v1507
        %v1776 = vpack.c.b16 %v1512, %v1508
        %v1777 = vpack.c.b16 %v1513, %v1509
        %v1778 = vpack.c.b16 %v1514, %v1510
        %v1779 = vpack.c.b16 %v1519, %v1515
        %v1780 = vpack.c.b16 %v1520, %v1516
        %v1781 = vpack.c.b16 %v1521, %v1517
        %v1782 = vpack.c.b16 %v1522, %v1518
        %v1783 = vpack.c.b16 %v1527, %v1523
        %v1784 = vpack.c.b16 %v1528, %v1524
        %v1785 = vpack.c.b16 %v1529, %v1525
        %v1786 = vpack.c.b16 %v1530, %v1526
        %v1787 = vpack.c.b16 %v1535, %v1531
        %v1788 = vpack.c.b16 %v1536, %v1532
        %v1789 = vpack.c.b16 %v1537, %v1533
        %v1790 = vpack.c.b16 %v1538, %v1534
        %v1791 = vpack.c.b16 %v1539, %v1539
        %v1792 = vpack.c.b16 %v1540, %v1540
        %v1793 = vpack.c.b16 %v1541, %v1541
        %v1794 = vpack.c.b16 %v1542, %v1542
        %vm2043 = vcmask 850944
        %v2045 = vsel %vm2043, %v472, 0
        %v2048 = vsel %vm2043, %v480, 0
        %v2051 = vsel %vm2043, %v488, 0
        %v2054 = vsel %vm2043, %v496, 0
        %v2057 = vsel %vm2043, %v504, 0
        %v2060 = vsel %vm2043, %v512, 0
        %v2063 = vsel %vm2043, %v520, 0
        %vm2065 = vcmask 1043456
        %v2067 = vsel %vm2065, %v1791, 0
        %v2070 = vsel %vm2065, %v1792, 0
        %v2073 = vsel %vm2065, %v1793, 0
        %v2076 = vsel %vm2065, %v1794, 0
        %2078 = vmatprep.subr.bf16.mxu0 %v1544
        %2079 = vmatpush1.bf16.msra.mxu0 %v1543
        %2080 = vmatprep.subr.bf16.mxu0 %v1548
        %2081 = vmatpush1.bf16.msra.mxu0 %v1547
        %2082 = vmatprep.subr.bf16.mxu0 %v1552
        %2083 = vmatpush1.bf16.msra.mxu0 %v1551
        %2084 = vmatprep.subr.bf16.mxu0 %v1556
        %2085 = vmatpush1.bf16.msra.mxu0 %v1555
        %2086 = vmatprep.subr.bf16.mxu0 %v1560
        %2087 = vmatpush1.bf16.msra.mxu0 %v1559
        %2088 = vmatprep.subr.bf16.mxu0 %v1564
        %2089 = vmatpush1.bf16.msra.mxu0 %v1563
        %2090 = vmatprep.subr.bf16.mxu0 %v1568
        %2091 = vmatpush1.bf16.msra.mxu0 %v1567
        %2092 = vmatprep.subr.bf16.mxu0 %v1572
        %2093 = vmatpush1.bf16.msra.mxu0 %v1571
        %2094 = vmatprep.subr.bf16.mxu0 %v1576
        %2095 = vmatpush1.bf16.msra.mxu0 %v1575
        %2096 = vmatprep.subr.bf16.mxu0 %v1580
        %2097 = vmatpush1.bf16.msra.mxu0 %v1579
        %2098 = vmatprep.subr.bf16.mxu0 %v1584
        %2099 = vmatpush1.bf16.msra.mxu0 %v1583
        %2100 = vmatprep.subr.bf16.mxu0 %v1588
        %2101 = vmatpush1.bf16.msra.mxu0 %v1587
        %2102 = vmatprep.subr.bf16.mxu0 %v1592
        %2103 = vmatpush1.bf16.msra.mxu0 %v1591
        %2104 = vmatprep.subr.bf16.mxu0 %v1596
        %2105 = vmatpush1.bf16.msra.mxu0 %v1595
        %2106 = vmatprep.subr.bf16.mxu0 %v1600
        %2107 = vmatpush1.bf16.msra.mxu0 %v1599
        %2108 = vmatprep.subr.bf16.mxu0 %v1604
        %2109 = vmatpush1.bf16.msra.mxu0 %v1603
        %2110 = vmatprep.mubr.bf16.mxu0 %v466
        %2111 = vmatmul.mubr.bf16.gmra.mrb[0].mxu0 %v465
        %v2112 = vpop.f32.mrb[0].mxu0
        %v2113 = vadd.f32 %v776, %v2112
        %v2114 = vpop.f32.mrb[0].mxu0
        %v2115 = vadd.f32 %v780, %v2114
        %v2116 = vpop.f32.mrb[0].mxu0
        %v2117 = vadd.f32 %v776, %v2116
        %v2118 = vpop.f32.mrb[0].mxu0
        %v2119 = vadd.f32 %v780, %v2118
        %2120 = vmatprep.mubr.bf16.mxu0 %v474
        %2121 = vmatmul.mubr.bf16.gmra.mrb[0].mxu0 %v473
        %v2122 = vpop.f32.mrb[0].mxu0
        %v2123 = vadd.f32 %v776, %v2122
        %v2124 = vpop.f32.mrb[0].mxu0
        %v2125 = vadd.f32 %v780, %v2124
        %v2126 = vpop.f32.mrb[0].mxu0
        %v2127 = vadd.f32 %v776, %v2126
        %v2128 = vpop.f32.mrb[0].mxu0
        %v2129 = vadd.f32 %v780, %v2128
        %2130 = vmatprep.mubr.bf16.mxu0 %v482
        %2131 = vmatmul.mubr.bf16.gmra.mrb[0].mxu0 %v481
        %v2132 = vpop.f32.mrb[0].mxu0
        %v2133 = vadd.f32 %v776, %v2132
        %v2134 = vpop.f32.mrb[0].mxu0
        %v2135 = vadd.f32 %v780, %v2134
        %v2136 = vpop.f32.mrb[0].mxu0
        %v2137 = vadd.f32 %v776, %v2136
        %v2138 = vpop.f32.mrb[0].mxu0
        %v2139 = vadd.f32 %v780, %v2138
        %2140 = vmatprep.mubr.bf16.mxu0 %v490
        %2141 = vmatmul.mubr.bf16.gmra.mrb[0].mxu0 %v489
        %v2142 = vpop.f32.mrb[0].mxu0
        %v2143 = vadd.f32 %v776, %v2142
        %v2144 = vpop.f32.mrb[0].mxu0
        %v2145 = vadd.f32 %v780, %v2144
        %v2146 = vpop.f32.mrb[0].mxu0
        %v2147 = vadd.f32 %v776, %v2146
        %v2148 = vpop.f32.mrb[0].mxu0
        %v2149 = vadd.f32 %v780, %v2148
        %2150 = vmatprep.mubr.bf16.mxu0 %v498
        %2151 = vmatmul.mubr.bf16.gmra.mrb[0].mxu0 %v497
        %v2152 = vpop.f32.mrb[0].mxu0
        %v2153 = vadd.f32 %v776, %v2152
        %v2154 = vpop.f32.mrb[0].mxu0
        %v2155 = vadd.f32 %v780, %v2154
        %v2156 = vpop.f32.mrb[0].mxu0
        %v2157 = vadd.f32 %v776, %v2156
        %v2158 = vpop.f32.mrb[0].mxu0
        %v2159 = vadd.f32 %v780, %v2158
        %2160 = vmatprep.mubr.bf16.mxu0 %v506
        %2161 = vmatmul.mubr.bf16.gmra.mrb[0].mxu0 %v505
        %v2162 = vpop.f32.mrb[0].mxu0
        %v2163 = vadd.f32 %v776, %v2162
        %v2164 = vpop.f32.mrb[0].mxu0
        %v2165 = vadd.f32 %v780, %v2164
        %v2166 = vpop.f32.mrb[0].mxu0
        %v2167 = vadd.f32 %v776, %v2166
        %v2168 = vpop.f32.mrb[0].mxu0
        %v2169 = vadd.f32 %v780, %v2168
        %2170 = vmatprep.mubr.bf16.mxu0 %v514
        %2171 = vmatmul.mubr.bf16.gmra.mrb[0].mxu0 %v513
        %v2172 = vpop.f32.mrb[0].mxu0
        %v2173 = vadd.f32 %v776, %v2172
        %v2174 = vpop.f32.mrb[0].mxu0
        %v2175 = vadd.f32 %v780, %v2174
        %v2176 = vpop.f32.mrb[0].mxu0
        %v2177 = vpop.f32.mrb[0].mxu0
        %2178 = vdwg.mxu0
        %2179 = vmatprep.subr.bf16.mxu0 %v1608
        %2180 = vmatpush1.bf16.msra.mxu0 %v1607
        %2181 = vmatprep.subr.bf16.mxu0 %v1612
        %2182 = vmatpush1.bf16.msra.mxu0 %v1611
        %2183 = vmatprep.subr.bf16.mxu0 %v1616
        %2184 = vmatpush1.bf16.msra.mxu0 %v1615
        %2185 = vmatprep.subr.bf16.mxu0 %v1620
        %2186 = vmatpush1.bf16.msra.mxu0 %v1619
        %2187 = vmatprep.subr.bf16.mxu0 %v1624
        %2188 = vmatpush1.bf16.msra.mxu0 %v1623
        %2189 = vmatprep.subr.bf16.mxu0 %v1628
        %2190 = vmatpush1.bf16.msra.mxu0 %v1627
        %2191 = vmatprep.subr.bf16.mxu0 %v1632
        %2192 = vmatpush1.bf16.msra.mxu0 %v1631
        %2193 = vmatprep.subr.bf16.mxu0 %v1636
        %2194 = vmatpush1.bf16.msra.mxu0 %v1635
        %2195 = vmatprep.subr.bf16.mxu0 %v1640
        %2196 = vmatpush1.bf16.msra.mxu0 %v1639
        %2197 = vmatprep.subr.bf16.mxu0 %v1644
        %2198 = vmatpush1.bf16.msra.mxu0 %v1643
        %2199 = vmatprep.subr.bf16.mxu0 %v1648
        %2200 = vmatpush1.bf16.msra.mxu0 %v1647
        %2201 = vmatprep.subr.bf16.mxu0 %v1652
        %2202 = vmatpush1.bf16.msra.mxu0 %v1651
        %2203 = vmatprep.subr.bf16.mxu0 %v1656
        %2204 = vmatpush1.bf16.msra.mxu0 %v1655
        %2205 = vmatprep.subr.bf16.mxu0 %v1660
        %2206 = vmatpush1.bf16.msra.mxu0 %v1659
        %2207 = vmatprep.subr.bf16.mxu0 %v1664
        %2208 = vmatpush1.bf16.msra.mxu0 %v1663
        %2209 = vmatprep.subr.bf16.mxu0 %v1668
        %2210 = vmatpush1.bf16.msra.mxu0 %v1667
        %2211 = vmatprep.mubr.bf16.mxu0 %v468
        %2212 = vmatmul.mubr.bf16.gmra.mrb[0].mxu0 %v467
        %v2213 = vpop.f32.mrb[0].mxu0
        %v2214 = vadd.f32 %v2113, %v2213
        %v2215 = vpop.f32.mrb[0].mxu0
        %v2216 = vadd.f32 %v2115, %v2215
        %v2217 = vpop.f32.mrb[0].mxu0
        %v2218 = vadd.f32 %v2117, %v2217
        %v2219 = vpop.f32.mrb[0].mxu0
        %v2220 = vadd.f32 %v2119, %v2219
        %2221 = vmatprep.mubr.bf16.mxu0 %v476
        %2222 = vmatmul.mubr.bf16.gmra.mrb[0].mxu0 %v475
        %v2223 = vpop.f32.mrb[0].mxu0
        %v2224 = vadd.f32 %v2123, %v2223
        %v2225 = vpop.f32.mrb[0].mxu0
        %v2226 = vadd.f32 %v2125, %v2225
        %v2227 = vpop.f32.mrb[0].mxu0
        %v2228 = vadd.f32 %v2127, %v2227
        %v2229 = vpop.f32.mrb[0].mxu0
        %v2230 = vadd.f32 %v2129, %v2229
        %2231 = vmatprep.mubr.bf16.mxu0 %v484
        %2232 = vmatmul.mubr.bf16.gmra.mrb[0].mxu0 %v483
        %v2233 = vpop.f32.mrb[0].mxu0
        %v2234 = vadd.f32 %v2133, %v2233
        %v2235 = vpop.f32.mrb[0].mxu0
        %v2236 = vadd.f32 %v2135, %v2235
        %v2237 = vpop.f32.mrb[0].mxu0
        %v2238 = vadd.f32 %v2137, %v2237
        %v2239 = vpop.f32.mrb[0].mxu0
        %v2240 = vadd.f32 %v2139, %v2239
        %2241 = vmatprep.mubr.bf16.mxu0 %v492
        %2242 = vmatmul.mubr.bf16.gmra.mrb[0].mxu0 %v491
        %v2243 = vpop.f32.mrb[0].mxu0
        %v2244 = vadd.f32 %v2143, %v2243
        %v2245 = vpop.f32.mrb[0].mxu0
        %v2246 = vadd.f32 %v2145, %v2245
        %v2247 = vpop.f32.mrb[0].mxu0
        %v2248 = vadd.f32 %v2147, %v2247
        %v2249 = vpop.f32.mrb[0].mxu0
        %v2250 = vadd.f32 %v2149, %v2249
        %2251 = vmatprep.mubr.bf16.mxu0 %v500
        %2252 = vmatmul.mubr.bf16.gmra.mrb[0].mxu0 %v499
        %v2253 = vpop.f32.mrb[0].mxu0
        %v2254 = vadd.f32 %v2153, %v2253
        %v2255 = vpop.f32.mrb[0].mxu0
        %v2256 = vadd.f32 %v2155, %v2255
        %v2257 = vpop.f32.mrb[0].mxu0
        %v2258 = vadd.f32 %v2157, %v2257
        %v2259 = vpop.f32.mrb[0].mxu0
        %v2260 = vadd.f32 %v2159, %v2259
        %2261 = vmatprep.mubr.bf16.mxu0 %v508
        %2262 = vmatmul.mubr.bf16.gmra.mrb[0].mxu0 %v507
        %v2263 = vpop.f32.mrb[0].mxu0
        %v2264 = vadd.f32 %v2163, %v2263
        %v2265 = vpop.f32.mrb[0].mxu0
        %v2266 = vadd.f32 %v2165, %v2265
        %v2267 = vpop.f32.mrb[0].mxu0
        %v2268 = vadd.f32 %v2167, %v2267
        %v2269 = vpop.f32.mrb[0].mxu0
        %v2270 = vadd.f32 %v2169, %v2269
        %2271 = vmatprep.mubr.bf16.mxu0 %v516
        %2272 = vmatmul.mubr.bf16.gmra.mrb[0].mxu0 %v515
        %v2273 = vpop.f32.mrb[0].mxu0
        %v2274 = vadd.f32 %v2173, %v2273
        %v2275 = vpop.f32.mrb[0].mxu0
        %v2276 = vadd.f32 %v2175, %v2275
        %v2277 = vpop.f32.mrb[0].mxu0
        %v2278 = vpop.f32.mrb[0].mxu0
        %2279 = vdwg.mxu0
        %2280 = vmatprep.subr.bf16.mxu0 %v1672
        %2281 = vmatpush1.bf16.msra.mxu0 %v1671
        %2282 = vmatprep.subr.bf16.mxu0 %v1676
        %2283 = vmatpush1.bf16.msra.mxu0 %v1675
        %2284 = vmatprep.subr.bf16.mxu0 %v1680
        %2285 = vmatpush1.bf16.msra.mxu0 %v1679
        %2286 = vmatprep.subr.bf16.mxu0 %v1684
        %2287 = vmatpush1.bf16.msra.mxu0 %v1683
        %2288 = vmatprep.subr.bf16.mxu0 %v1688
        %2289 = vmatpush1.bf16.msra.mxu0 %v1687
        %2290 = vmatprep.subr.bf16.mxu0 %v1692
        %2291 = vmatpush1.bf16.msra.mxu0 %v1691
        %2292 = vmatprep.subr.bf16.mxu0 %v1696
        %2293 = vmatpush1.bf16.msra.mxu0 %v1695
        %2294 = vmatprep.subr.bf16.mxu0 %v1700
        %2295 = vmatpush1.bf16.msra.mxu0 %v1699
        %2296 = vmatprep.subr.bf16.mxu0 %v1704
        %2297 = vmatpush1.bf16.msra.mxu0 %v1703
        %2298 = vmatprep.subr.bf16.mxu0 %v1708
        %2299 = vmatpush1.bf16.msra.mxu0 %v1707
        %2300 = vmatprep.subr.bf16.mxu0 %v1712
        %2301 = vmatpush1.bf16.msra.mxu0 %v1711
        %2302 = vmatprep.subr.bf16.mxu0 %v1716
        %2303 = vmatpush1.bf16.msra.mxu0 %v1715
        %2304 = vmatprep.subr.bf16.mxu0 %v1720
        %2305 = vmatpush1.bf16.msra.mxu0 %v1719
        %2306 = vmatprep.subr.bf16.mxu0 %v1724
        %2307 = vmatpush1.bf16.msra.mxu0 %v1723
        %2308 = vmatprep.subr.bf16.mxu0 %v1728
        %2309 = vmatpush1.bf16.msra.mxu0 %v1727
        %2310 = vmatprep.subr.bf16.mxu0 %v1732
        %2311 = vmatpush1.bf16.msra.mxu0 %v1731
        %2312 = vmatprep.mubr.bf16.mxu0 %v470
        %2313 = vmatmul.mubr.bf16.gmra.mrb[0].mxu0 %v469
        %v2314 = vpop.f32.mrb[0].mxu0
        %v2315 = vadd.f32 %v2214, %v2314
        %v2316 = vpop.f32.mrb[0].mxu0
        %v2317 = vadd.f32 %v2216, %v2316
        %v2318 = vpop.f32.mrb[0].mxu0
        %v2319 = vadd.f32 %v2218, %v2318
        %v2320 = vpop.f32.mrb[0].mxu0
        %v2321 = vadd.f32 %v2220, %v2320
        %2322 = vmatprep.mubr.bf16.mxu0 %v478
        %2323 = vmatmul.mubr.bf16.gmra.mrb[0].mxu0 %v477
        %v2324 = vpop.f32.mrb[0].mxu0
        %v2325 = vadd.f32 %v2224, %v2324
        %v2326 = vpop.f32.mrb[0].mxu0
        %v2327 = vadd.f32 %v2226, %v2326
        %v2328 = vpop.f32.mrb[0].mxu0
        %v2329 = vadd.f32 %v2228, %v2328
        %v2330 = vpop.f32.mrb[0].mxu0
        %v2331 = vadd.f32 %v2230, %v2330
        %2332 = vmatprep.mubr.bf16.mxu0 %v486
        %2333 = vmatmul.mubr.bf16.gmra.mrb[0].mxu0 %v485
        %v2334 = vpop.f32.mrb[0].mxu0
        %v2335 = vadd.f32 %v2234, %v2334
        %v2336 = vpop.f32.mrb[0].mxu0
        %v2337 = vadd.f32 %v2236, %v2336
        %v2338 = vpop.f32.mrb[0].mxu0
        %v2339 = vadd.f32 %v2238, %v2338
        %v2340 = vpop.f32.mrb[0].mxu0
        %v2341 = vadd.f32 %v2240, %v2340
        %2342 = vmatprep.mubr.bf16.mxu0 %v494
        %2343 = vmatmul.mubr.bf16.gmra.mrb[0].mxu0 %v493
        %v2344 = vpop.f32.mrb[0].mxu0
        %v2345 = vadd.f32 %v2244, %v2344
        %v2346 = vpop.f32.mrb[0].mxu0
        %v2347 = vadd.f32 %v2246, %v2346
        %v2348 = vpop.f32.mrb[0].mxu0
        %v2349 = vadd.f32 %v2248, %v2348
        %v2350 = vpop.f32.mrb[0].mxu0
        %v2351 = vadd.f32 %v2250, %v2350
        %2352 = vmatprep.mubr.bf16.mxu0 %v502
        %2353 = vmatmul.mubr.bf16.gmra.mrb[0].mxu0 %v501
        %v2354 = vpop.f32.mrb[0].mxu0
        %v2355 = vadd.f32 %v2254, %v2354
        %v2356 = vpop.f32.mrb[0].mxu0
        %v2357 = vadd.f32 %v2256, %v2356
        %v2358 = vpop.f32.mrb[0].mxu0
        %v2359 = vadd.f32 %v2258, %v2358
        %v2360 = vpop.f32.mrb[0].mxu0
        %v2361 = vadd.f32 %v2260, %v2360
        %2362 = vmatprep.mubr.bf16.mxu0 %v510
        %2363 = vmatmul.mubr.bf16.gmra.mrb[0].mxu0 %v509
        %v2364 = vpop.f32.mrb[0].mxu0
        %v2365 = vadd.f32 %v2264, %v2364
        %v2366 = vpop.f32.mrb[0].mxu0
        %v2367 = vadd.f32 %v2266, %v2366
        %v2368 = vpop.f32.mrb[0].mxu0
        %v2369 = vadd.f32 %v2268, %v2368
        %v2370 = vpop.f32.mrb[0].mxu0
        %v2371 = vadd.f32 %v2270, %v2370
        %2372 = vmatprep.mubr.bf16.mxu0 %v518
        %2373 = vmatmul.mubr.bf16.gmra.mrb[0].mxu0 %v517
        %v2374 = vpop.f32.mrb[0].mxu0
        %v2375 = vadd.f32 %v2274, %v2374
        %v2376 = vpop.f32.mrb[0].mxu0
        %v2377 = vadd.f32 %v2276, %v2376
        %v2378 = vpop.f32.mrb[0].mxu0
        %v2379 = vpop.f32.mrb[0].mxu0
        %2380 = vdwg.mxu0
        %2381 = vmatprep.subr.bf16.mxu0 %v1736
        %2382 = vmatpush1.bf16.msra.mxu0 %v1735
        %2383 = vmatprep.subr.bf16.mxu0 %v1740
        %2384 = vmatpush1.bf16.msra.mxu0 %v1739
        %2385 = vmatprep.subr.bf16.mxu0 %v1744
        %2386 = vmatpush1.bf16.msra.mxu0 %v1743
        %2387 = vmatprep.subr.bf16.mxu0 %v1748
        %2388 = vmatpush1.bf16.msra.mxu0 %v1747
        %2389 = vmatprep.subr.bf16.mxu0 %v1752
        %2390 = vmatpush1.bf16.msra.mxu0 %v1751
        %2391 = vmatprep.subr.bf16.mxu0 %v1756
        %2392 = vmatpush1.bf16.msra.mxu0 %v1755
        %2393 = vmatprep.subr.bf16.mxu0 %v1760
        %2394 = vmatpush1.bf16.msra.mxu0 %v1759
        %2395 = vmatprep.subr.bf16.mxu0 %v1764
        %2396 = vmatpush1.bf16.msra.mxu0 %v1763
        %2397 = vmatprep.subr.bf16.mxu0 %v1768
        %2398 = vmatpush1.bf16.msra.mxu0 %v1767
        %2399 = vmatprep.subr.bf16.mxu0 %v1772
        %2400 = vmatpush1.bf16.msra.mxu0 %v1771
        %2401 = vmatprep.subr.bf16.mxu0 %v1776
        %2402 = vmatpush1.bf16.msra.mxu0 %v1775
        %2403 = vmatprep.subr.bf16.mxu0 %v1780
        %2404 = vmatpush1.bf16.msra.mxu0 %v1779
        %2405 = vmatprep.subr.bf16.mxu0 %v1784
        %2406 = vmatpush1.bf16.msra.mxu0 %v1783
        %2407 = vmatprep.subr.bf16.mxu0 %v1788
        %2408 = vmatpush1.bf16.msra.mxu0 %v1787
        %2409 = vmatprep.subr.bf16.mxu0 %v2070
        %2410 = vmatpush1.bf16.msra.mxu0 %v2067
        %2411 = vmatprep.subr.bf16.mxu0 0
        %2412 = vmatpush1.bf16.msra.mxu0 0
        %2413 = vmatprep.mubr.bf16.mxu0 %v2045
        %2414 = vmatmul.mubr.bf16.gmra.mrb[0].mxu0 %v471
        %v2415 = vpop.f32.mrb[0].mxu0
        %v2416 = vadd.f32 %v2315, %v2415
        %v2417 = vpop.f32.mrb[0].mxu0
        %v2418 = vadd.f32 %v2317, %v2417
        %v2419 = vpop.f32.mrb[0].mxu0
        %v2420 = vadd.f32 %v2319, %v2419
        %v2421 = vpop.f32.mrb[0].mxu0
        %v2422 = vadd.f32 %v2321, %v2421
        %2423 = vmatprep.mubr.bf16.mxu0 %v2048
        %2424 = vmatmul.mubr.bf16.gmra.mrb[0].mxu0 %v479
        %v2425 = vpop.f32.mrb[0].mxu0
        %v2426 = vadd.f32 %v2325, %v2425
        %v2427 = vpop.f32.mrb[0].mxu0
        %v2428 = vadd.f32 %v2327, %v2427
        %v2429 = vpop.f32.mrb[0].mxu0
        %v2430 = vadd.f32 %v2329, %v2429
        %v2431 = vpop.f32.mrb[0].mxu0
        %v2432 = vadd.f32 %v2331, %v2431
        %2433 = vmatprep.mubr.bf16.mxu0 %v2051
        %2434 = vmatmul.mubr.bf16.gmra.mrb[0].mxu0 %v487
        %v2435 = vpop.f32.mrb[0].mxu0
        %v2436 = vadd.f32 %v2335, %v2435
        %v2437 = vpop.f32.mrb[0].mxu0
        %v2438 = vadd.f32 %v2337, %v2437
        %v2439 = vpop.f32.mrb[0].mxu0
        %v2440 = vadd.f32 %v2339, %v2439
        %v2441 = vpop.f32.mrb[0].mxu0
        %v2442 = vadd.f32 %v2341, %v2441
        %2443 = vmatprep.mubr.bf16.mxu0 %v2054
        %2444 = vmatmul.mubr.bf16.gmra.mrb[0].mxu0 %v495
        %v2445 = vpop.f32.mrb[0].mxu0
        %v2446 = vadd.f32 %v2345, %v2445
        %v2447 = vpop.f32.mrb[0].mxu0
        %v2448 = vadd.f32 %v2347, %v2447
        %v2449 = vpop.f32.mrb[0].mxu0
        %v2450 = vadd.f32 %v2349, %v2449
        %v2451 = vpop.f32.mrb[0].mxu0
        %v2452 = vadd.f32 %v2351, %v2451
        %2453 = vmatprep.mubr.bf16.mxu0 %v2057
        %2454 = vmatmul.mubr.bf16.gmra.mrb[0].mxu0 %v503
        %v2455 = vpop.f32.mrb[0].mxu0
        %v2456 = vadd.f32 %v2355, %v2455
        %v2457 = vpop.f32.mrb[0].mxu0
        %v2458 = vadd.f32 %v2357, %v2457
        %v2459 = vpop.f32.mrb[0].mxu0
        %v2460 = vadd.f32 %v2359, %v2459
        %v2461 = vpop.f32.mrb[0].mxu0
        %v2462 = vadd.f32 %v2361, %v2461
        %2463 = vmatprep.mubr.bf16.mxu0 %v2060
        %2464 = vmatmul.mubr.bf16.gmra.mrb[0].mxu0 %v511
        %v2465 = vpop.f32.mrb[0].mxu0
        %v2466 = vadd.f32 %v2365, %v2465
        %v2467 = vpop.f32.mrb[0].mxu0
        %v2468 = vadd.f32 %v2367, %v2467
        %v2469 = vpop.f32.mrb[0].mxu0
        %v2470 = vadd.f32 %v2369, %v2469
        %v2471 = vpop.f32.mrb[0].mxu0
        %v2472 = vadd.f32 %v2371, %v2471
        %2473 = vmatprep.mubr.bf16.mxu0 %v2063
        %2474 = vmatmul.mubr.bf16.gmra.mrb[0].mxu0 %v519
        %v2475 = vpop.f32.mrb[0].mxu0
        %v2476 = vadd.f32 %v2375, %v2475
        %v2477 = vpop.f32.mrb[0].mxu0
        %v2478 = vadd.f32 %v2377, %v2477
        %v2479 = vpop.f32.mrb[0].mxu0
        %v2480 = vpop.f32.mrb[0].mxu0
        %2481 = vdwg.mxu0
        %2482 = vmatprep.subr.bf16.mxu0 %v1546
        %2483 = vmatpush1.bf16.msra.mxu0 %v1545
        %2484 = vmatprep.subr.bf16.mxu0 %v1550
        %2485 = vmatpush1.bf16.msra.mxu0 %v1549
        %2486 = vmatprep.subr.bf16.mxu0 %v1554
        %2487 = vmatpush1.bf16.msra.mxu0 %v1553
        %2488 = vmatprep.subr.bf16.mxu0 %v1558
        %2489 = vmatpush1.bf16.msra.mxu0 %v1557
        %2490 = vmatprep.subr.bf16.mxu0 %v1562
        %2491 = vmatpush1.bf16.msra.mxu0 %v1561
        %2492 = vmatprep.subr.bf16.mxu0 %v1566
        %2493 = vmatpush1.bf16.msra.mxu0 %v1565
        %2494 = vmatprep.subr.bf16.mxu0 %v1570
        %2495 = vmatpush1.bf16.msra.mxu0 %v1569
        %2496 = vmatprep.subr.bf16.mxu0 %v1574
        %2497 = vmatpush1.bf16.msra.mxu0 %v1573
        %2498 = vmatprep.subr.bf16.mxu0 %v1578
        %2499 = vmatpush1.bf16.msra.mxu0 %v1577
        %2500 = vmatprep.subr.bf16.mxu0 %v1582
        %2501 = vmatpush1.bf16.msra.mxu0 %v1581
        %2502 = vmatprep.subr.bf16.mxu0 %v1586
        %2503 = vmatpush1.bf16.msra.mxu0 %v1585
        %2504 = vmatprep.subr.bf16.mxu0 %v1590
        %2505 = vmatpush1.bf16.msra.mxu0 %v1589
        %2506 = vmatprep.subr.bf16.mxu0 %v1594
        %2507 = vmatpush1.bf16.msra.mxu0 %v1593
        %2508 = vmatprep.subr.bf16.mxu0 %v1598
        %2509 = vmatpush1.bf16.msra.mxu0 %v1597
        %2510 = vmatprep.subr.bf16.mxu0 %v1602
        %2511 = vmatpush1.bf16.msra.mxu0 %v1601
        %2512 = vmatprep.subr.bf16.mxu0 %v1606
        %2513 = vmatpush1.bf16.msra.mxu0 %v1605
        %2514 = vmatprep.mubr.bf16.mxu0 %v466
        %2515 = vmatmul.mubr.bf16.gmra.mrb[0].mxu0 %v465
        %v2516 = vpop.f32.mrb[0].mxu0
        %v2517 = vadd.f32 %v784, %v2516
        %v2518 = vpop.f32.mrb[0].mxu0
        %v2519 = vadd.f32 %v788, %v2518
        %v2520 = vpop.f32.mrb[0].mxu0
        %v2521 = vadd.f32 %v784, %v2520
        %v2522 = vpop.f32.mrb[0].mxu0
        %v2523 = vadd.f32 %v788, %v2522
        %2524 = vmatprep.mubr.bf16.mxu0 %v474
        %2525 = vmatmul.mubr.bf16.gmra.mrb[0].mxu0 %v473
        %v2526 = vpop.f32.mrb[0].mxu0
        %v2527 = vadd.f32 %v784, %v2526
        %v2528 = vpop.f32.mrb[0].mxu0
        %v2529 = vadd.f32 %v788, %v2528
        %v2530 = vpop.f32.mrb[0].mxu0
        %v2531 = vadd.f32 %v784, %v2530
        %v2532 = vpop.f32.mrb[0].mxu0
        %v2533 = vadd.f32 %v788, %v2532
        %2534 = vmatprep.mubr.bf16.mxu0 %v482
        %2535 = vmatmul.mubr.bf16.gmra.mrb[0].mxu0 %v481
        %v2536 = vpop.f32.mrb[0].mxu0
        %v2537 = vadd.f32 %v784, %v2536
        %v2538 = vpop.f32.mrb[0].mxu0
        %v2539 = vadd.f32 %v788, %v2538
        %v2540 = vpop.f32.mrb[0].mxu0
        %v2541 = vadd.f32 %v784, %v2540
        %v2542 = vpop.f32.mrb[0].mxu0
        %v2543 = vadd.f32 %v788, %v2542
        %2544 = vmatprep.mubr.bf16.mxu0 %v490
        %2545 = vmatmul.mubr.bf16.gmra.mrb[0].mxu0 %v489
        %v2546 = vpop.f32.mrb[0].mxu0
        %v2547 = vadd.f32 %v784, %v2546
        %v2548 = vpop.f32.mrb[0].mxu0
        %v2549 = vadd.f32 %v788, %v2548
        %v2550 = vpop.f32.mrb[0].mxu0
        %v2551 = vadd.f32 %v784, %v2550
        %v2552 = vpop.f32.mrb[0].mxu0
        %v2553 = vadd.f32 %v788, %v2552
        %2554 = vmatprep.mubr.bf16.mxu0 %v498
        %2555 = vmatmul.mubr.bf16.gmra.mrb[0].mxu0 %v497
        %v2556 = vpop.f32.mrb[0].mxu0
        %v2557 = vadd.f32 %v784, %v2556
        %v2558 = vpop.f32.mrb[0].mxu0
        %v2559 = vadd.f32 %v788, %v2558
        %v2560 = vpop.f32.mrb[0].mxu0
        %v2561 = vadd.f32 %v784, %v2560
        %v2562 = vpop.f32.mrb[0].mxu0
        %v2563 = vadd.f32 %v788, %v2562
        %2564 = vmatprep.mubr.bf16.mxu0 %v506
        %2565 = vmatmul.mubr.bf16.gmra.mrb[0].mxu0 %v505
        %v2566 = vpop.f32.mrb[0].mxu0
        %v2567 = vadd.f32 %v784, %v2566
        %v2568 = vpop.f32.mrb[0].mxu0
        %v2569 = vadd.f32 %v788, %v2568
        %v2570 = vpop.f32.mrb[0].mxu0
        %v2571 = vadd.f32 %v784, %v2570
        %v2572 = vpop.f32.mrb[0].mxu0
        %v2573 = vadd.f32 %v788, %v2572
        %2574 = vmatprep.mubr.bf16.mxu0 %v514
        %2575 = vmatmul.mubr.bf16.gmra.mrb[0].mxu0 %v513
        %v2576 = vpop.f32.mrb[0].mxu0
        %v2577 = vadd.f32 %v784, %v2576
        %v2578 = vpop.f32.mrb[0].mxu0
        %v2579 = vadd.f32 %v788, %v2578
        %v2580 = vpop.f32.mrb[0].mxu0
        %v2581 = vpop.f32.mrb[0].mxu0
        %2582 = vdwg.mxu0
        %2583 = vmatprep.subr.bf16.mxu0 %v1610
        %2584 = vmatpush1.bf16.msra.mxu0 %v1609
        %2585 = vmatprep.subr.bf16.mxu0 %v1614
        %2586 = vmatpush1.bf16.msra.mxu0 %v1613
        %2587 = vmatprep.subr.bf16.mxu0 %v1618
        %2588 = vmatpush1.bf16.msra.mxu0 %v1617
        %2589 = vmatprep.subr.bf16.mxu0 %v1622
        %2590 = vmatpush1.bf16.msra.mxu0 %v1621
        %2591 = vmatprep.subr.bf16.mxu0 %v1626
        %2592 = vmatpush1.bf16.msra.mxu0 %v1625
        %2593 = vmatprep.subr.bf16.mxu0 %v1630
        %2594 = vmatpush1.bf16.msra.mxu0 %v1629
        %2595 = vmatprep.subr.bf16.mxu0 %v1634
        %2596 = vmatpush1.bf16.msra.mxu0 %v1633
        %2597 = vmatprep.subr.bf16.mxu0 %v1638
        %2598 = vmatpush1.bf16.msra.mxu0 %v1637
        %2599 = vmatprep.subr.bf16.mxu0 %v1642
        %2600 = vmatpush1.bf16.msra.mxu0 %v1641
        %2601 = vmatprep.subr.bf16.mxu0 %v1646
        %2602 = vmatpush1.bf16.msra.mxu0 %v1645
        %2603 = vmatprep.subr.bf16.mxu0 %v1650
        %2604 = vmatpush1.bf16.msra.mxu0 %v1649
        %2605 = vmatprep.subr.bf16.mxu0 %v1654
        %2606 = vmatpush1.bf16.msra.mxu0 %v1653
        %2607 = vmatprep.subr.bf16.mxu0 %v1658
        %2608 = vmatpush1.bf16.msra.mxu0 %v1657
        %2609 = vmatprep.subr.bf16.mxu0 %v1662
        %2610 = vmatpush1.bf16.msra.mxu0 %v1661
        %2611 = vmatprep.subr.bf16.mxu0 %v1666
        %2612 = vmatpush1.bf16.msra.mxu0 %v1665
        %2613 = vmatprep.subr.bf16.mxu0 %v1670
        %2614 = vmatpush1.bf16.msra.mxu0 %v1669
        %2615 = vmatprep.mubr.bf16.mxu0 %v468
        %2616 = vmatmul.mubr.bf16.gmra.mrb[0].mxu0 %v467
        %v2617 = vpop.f32.mrb[0].mxu0
        %v2618 = vadd.f32 %v2517, %v2617
        %v2619 = vpop.f32.mrb[0].mxu0
        %v2620 = vadd.f32 %v2519, %v2619
        %v2621 = vpop.f32.mrb[0].mxu0
        %v2622 = vadd.f32 %v2521, %v2621
        %v2623 = vpop.f32.mrb[0].mxu0
        %v2624 = vadd.f32 %v2523, %v2623
        %2625 = vmatprep.mubr.bf16.mxu0 %v476
        %2626 = vmatmul.mubr.bf16.gmra.mrb[0].mxu0 %v475
        %v2627 = vpop.f32.mrb[0].mxu0
        %v2628 = vadd.f32 %v2527, %v2627
        %v2629 = vpop.f32.mrb[0].mxu0
        %v2630 = vadd.f32 %v2529, %v2629
        %v2631 = vpop.f32.mrb[0].mxu0
        %v2632 = vadd.f32 %v2531, %v2631
        %v2633 = vpop.f32.mrb[0].mxu0
        %v2634 = vadd.f32 %v2533, %v2633
        %2635 = vmatprep.mubr.bf16.mxu0 %v484
        %2636 = vmatmul.mubr.bf16.gmra.mrb[0].mxu0 %v483
        %v2637 = vpop.f32.mrb[0].mxu0
        %v2638 = vadd.f32 %v2537, %v2637
        %v2639 = vpop.f32.mrb[0].mxu0
        %v2640 = vadd.f32 %v2539, %v2639
        %v2641 = vpop.f32.mrb[0].mxu0
        %v2642 = vadd.f32 %v2541, %v2641
        %v2643 = vpop.f32.mrb[0].mxu0
        %v2644 = vadd.f32 %v2543, %v2643
        %2645 = vmatprep.mubr.bf16.mxu0 %v492
        %2646 = vmatmul.mubr.bf16.gmra.mrb[0].mxu0 %v491
        %v2647 = vpop.f32.mrb[0].mxu0
        %v2648 = vadd.f32 %v2547, %v2647
        %v2649 = vpop.f32.mrb[0].mxu0
        %v2650 = vadd.f32 %v2549, %v2649
        %v2651 = vpop.f32.mrb[0].mxu0
        %v2652 = vadd.f32 %v2551, %v2651
        %v2653 = vpop.f32.mrb[0].mxu0
        %v2654 = vadd.f32 %v2553, %v2653
        %2655 = vmatprep.mubr.bf16.mxu0 %v500
        %2656 = vmatmul.mubr.bf16.gmra.mrb[0].mxu0 %v499
        %v2657 = vpop.f32.mrb[0].mxu0
        %v2658 = vadd.f32 %v2557, %v2657
        %v2659 = vpop.f32.mrb[0].mxu0
        %v2660 = vadd.f32 %v2559, %v2659
        %v2661 = vpop.f32.mrb[0].mxu0
        %v2662 = vadd.f32 %v2561, %v2661
        %v2663 = vpop.f32.mrb[0].mxu0
        %v2664 = vadd.f32 %v2563, %v2663
        %2665 = vmatprep.mubr.bf16.mxu0 %v508
        %2666 = vmatmul.mubr.bf16.gmra.mrb[0].mxu0 %v507
        %v2667 = vpop.f32.mrb[0].mxu0
        %v2668 = vadd.f32 %v2567, %v2667
        %v2669 = vpop.f32.mrb[0].mxu0
        %v2670 = vadd.f32 %v2569, %v2669
        %v2671 = vpop.f32.mrb[0].mxu0
        %v2672 = vadd.f32 %v2571, %v2671
        %v2673 = vpop.f32.mrb[0].mxu0
        %v2674 = vadd.f32 %v2573, %v2673
        %2675 = vmatprep.mubr.bf16.mxu0 %v516
        %2676 = vmatmul.mubr.bf16.gmra.mrb[0].mxu0 %v515
        %v2677 = vpop.f32.mrb[0].mxu0
        %v2678 = vadd.f32 %v2577, %v2677
        %v2679 = vpop.f32.mrb[0].mxu0
        %v2680 = vadd.f32 %v2579, %v2679
        %v2681 = vpop.f32.mrb[0].mxu0
        %v2682 = vpop.f32.mrb[0].mxu0
        %2683 = vdwg.mxu0
        %2684 = vmatprep.subr.bf16.mxu0 %v1674
        %2685 = vmatpush1.bf16.msra.mxu0 %v1673
        %2686 = vmatprep.subr.bf16.mxu0 %v1678
        %2687 = vmatpush1.bf16.msra.mxu0 %v1677
        %2688 = vmatprep.subr.bf16.mxu0 %v1682
        %2689 = vmatpush1.bf16.msra.mxu0 %v1681
        %2690 = vmatprep.subr.bf16.mxu0 %v1686
        %2691 = vmatpush1.bf16.msra.mxu0 %v1685
        %2692 = vmatprep.subr.bf16.mxu0 %v1690
        %2693 = vmatpush1.bf16.msra.mxu0 %v1689
        %2694 = vmatprep.subr.bf16.mxu0 %v1694
        %2695 = vmatpush1.bf16.msra.mxu0 %v1693
        %2696 = vmatprep.subr.bf16.mxu0 %v1698
        %2697 = vmatpush1.bf16.msra.mxu0 %v1697
        %2698 = vmatprep.subr.bf16.mxu0 %v1702
        %2699 = vmatpush1.bf16.msra.mxu0 %v1701
        %2700 = vmatprep.subr.bf16.mxu0 %v1706
        %2701 = vmatpush1.bf16.msra.mxu0 %v1705
        %2702 = vmatprep.subr.bf16.mxu0 %v1710
        %2703 = vmatpush1.bf16.msra.mxu0 %v1709
        %2704 = vmatprep.subr.bf16.mxu0 %v1714
        %2705 = vmatpush1.bf16.msra.mxu0 %v1713
        %2706 = vmatprep.subr.bf16.mxu0 %v1718
        %2707 = vmatpush1.bf16.msra.mxu0 %v1717
        %2708 = vmatprep.subr.bf16.mxu0 %v1722
        %2709 = vmatpush1.bf16.msra.mxu0 %v1721
        %2710 = vmatprep.subr.bf16.mxu0 %v1726
        %2711 = vmatpush1.bf16.msra.mxu0 %v1725
        %2712 = vmatprep.subr.bf16.mxu0 %v1730
        %2713 = vmatpush1.bf16.msra.mxu0 %v1729
        %2714 = vmatprep.subr.bf16.mxu0 %v1734
        %2715 = vmatpush1.bf16.msra.mxu0 %v1733
        %2716 = vmatprep.mubr.bf16.mxu0 %v470
        %2717 = vmatmul.mubr.bf16.gmra.mrb[0].mxu0 %v469
        %v2718 = vpop.f32.mrb[0].mxu0
        %v2719 = vadd.f32 %v2618, %v2718
        %v2720 = vpop.f32.mrb[0].mxu0
        %v2721 = vadd.f32 %v2620, %v2720
        %v2722 = vpop.f32.mrb[0].mxu0
        %v2723 = vadd.f32 %v2622, %v2722
        %v2724 = vpop.f32.mrb[0].mxu0
        %v2725 = vadd.f32 %v2624, %v2724
        %2726 = vmatprep.mubr.bf16.mxu0 %v478
        %2727 = vmatmul.mubr.bf16.gmra.mrb[0].mxu0 %v477
        %v2728 = vpop.f32.mrb[0].mxu0
        %v2729 = vadd.f32 %v2628, %v2728
        %v2730 = vpop.f32.mrb[0].mxu0
        %v2731 = vadd.f32 %v2630, %v2730
        %v2732 = vpop.f32.mrb[0].mxu0
        %v2733 = vadd.f32 %v2632, %v2732
        %v2734 = vpop.f32.mrb[0].mxu0
        %v2735 = vadd.f32 %v2634, %v2734
        %2736 = vmatprep.mubr.bf16.mxu0 %v486
        %2737 = vmatmul.mubr.bf16.gmra.mrb[0].mxu0 %v485
        %v2738 = vpop.f32.mrb[0].mxu0
        %v2739 = vadd.f32 %v2638, %v2738
        %v2740 = vpop.f32.mrb[0].mxu0
        %v2741 = vadd.f32 %v2640, %v2740
        %v2742 = vpop.f32.mrb[0].mxu0
        %v2743 = vadd.f32 %v2642, %v2742
        %v2744 = vpop.f32.mrb[0].mxu0
        %v2745 = vadd.f32 %v2644, %v2744
        %2746 = vmatprep.mubr.bf16.mxu0 %v494
        %2747 = vmatmul.mubr.bf16.gmra.mrb[0].mxu0 %v493
        %v2748 = vpop.f32.mrb[0].mxu0
        %v2749 = vadd.f32 %v2648, %v2748
        %v2750 = vpop.f32.mrb[0].mxu0
        %v2751 = vadd.f32 %v2650, %v2750
        %v2752 = vpop.f32.mrb[0].mxu0
        %v2753 = vadd.f32 %v2652, %v2752
        %v2754 = vpop.f32.mrb[0].mxu0
        %v2755 = vadd.f32 %v2654, %v2754
        %2756 = vmatprep.mubr.bf16.mxu0 %v502
        %2757 = vmatmul.mubr.bf16.gmra.mrb[0].mxu0 %v501
        %v2758 = vpop.f32.mrb[0].mxu0
        %v2759 = vadd.f32 %v2658, %v2758
        %v2760 = vpop.f32.mrb[0].mxu0
        %v2761 = vadd.f32 %v2660, %v2760
        %v2762 = vpop.f32.mrb[0].mxu0
        %v2763 = vadd.f32 %v2662, %v2762
        %v2764 = vpop.f32.mrb[0].mxu0
        %v2765 = vadd.f32 %v2664, %v2764
        %2766 = vmatprep.mubr.bf16.mxu0 %v510
        %2767 = vmatmul.mubr.bf16.gmra.mrb[0].mxu0 %v509
        %v2768 = vpop.f32.mrb[0].mxu0
        %v2769 = vadd.f32 %v2668, %v2768
        %v2770 = vpop.f32.mrb[0].mxu0
        %v2771 = vadd.f32 %v2670, %v2770
        %v2772 = vpop.f32.mrb[0].mxu0
        %v2773 = vadd.f32 %v2672, %v2772
        %v2774 = vpop.f32.mrb[0].mxu0
        %v2775 = vadd.f32 %v2674, %v2774
        %2776 = vmatprep.mubr.bf16.mxu0 %v518
        %2777 = vmatmul.mubr.bf16.gmra.mrb[0].mxu0 %v517
        %v2778 = vpop.f32.mrb[0].mxu0
        %v2779 = vadd.f32 %v2678, %v2778
        %v2780 = vpop.f32.mrb[0].mxu0
        %v2781 = vadd.f32 %v2680, %v2780
        %v2782 = vpop.f32.mrb[0].mxu0
        %v2783 = vpop.f32.mrb[0].mxu0
        %2784 = vdwg.mxu0
        %2785 = vmatprep.subr.bf16.mxu0 %v1738
        %2786 = vmatpush1.bf16.msra.mxu0 %v1737
        %2787 = vmatprep.subr.bf16.mxu0 %v1742
        %2788 = vmatpush1.bf16.msra.mxu0 %v1741
        %2789 = vmatprep.subr.bf16.mxu0 %v1746
        %2790 = vmatpush1.bf16.msra.mxu0 %v1745
        %2791 = vmatprep.subr.bf16.mxu0 %v1750
        %2792 = vmatpush1.bf16.msra.mxu0 %v1749
        %2793 = vmatprep.subr.bf16.mxu0 %v1754
        %2794 = vmatpush1.bf16.msra.mxu0 %v1753
        %2795 = vmatprep.subr.bf16.mxu0 %v1758
        %2796 = vmatpush1.bf16.msra.mxu0 %v1757
        %2797 = vmatprep.subr.bf16.mxu0 %v1762
        %2798 = vmatpush1.bf16.msra.mxu0 %v1761
        %2799 = vmatprep.subr.bf16.mxu0 %v1766
        %2800 = vmatpush1.bf16.msra.mxu0 %v1765
        %2801 = vmatprep.subr.bf16.mxu0 %v1770
        %2802 = vmatpush1.bf16.msra.mxu0 %v1769
        %2803 = vmatprep.subr.bf16.mxu0 %v1774
        %2804 = vmatpush1.bf16.msra.mxu0 %v1773
        %2805 = vmatprep.subr.bf16.mxu0 %v1778
        %2806 = vmatpush1.bf16.msra.mxu0 %v1777
        %2807 = vmatprep.subr.bf16.mxu0 %v1782
        %2808 = vmatpush1.bf16.msra.mxu0 %v1781
        %2809 = vmatprep.subr.bf16.mxu0 %v1786
        %2810 = vmatpush1.bf16.msra.mxu0 %v1785
        %2811 = vmatprep.subr.bf16.mxu0 %v1790
        %2812 = vmatpush1.bf16.msra.mxu0 %v1789
        %2813 = vmatprep.subr.bf16.mxu0 %v2076
        %2814 = vmatpush1.bf16.msra.mxu0 %v2073
        %2815 = vmatprep.subr.bf16.mxu0 0
        %2816 = vmatpush1.bf16.msra.mxu0 0
        %2817 = vmatprep.mubr.bf16.mxu0 %v2045
        %2818 = vmatmul.mubr.bf16.gmra.mrb[0].mxu0 %v471
        %v2819 = vpop.f32.mrb[0].mxu0
        %v2820 = vadd.f32 %v2719, %v2819
        %v2821 = vpop.f32.mrb[0].mxu0
        %v2822 = vadd.f32 %v2721, %v2821
        %v2823 = vpop.f32.mrb[0].mxu0
        %v2824 = vadd.f32 %v2723, %v2823
        %v2825 = vpop.f32.mrb[0].mxu0
        %v2826 = vadd.f32 %v2725, %v2825
        %2827 = vmatprep.mubr.bf16.mxu0 %v2048
        %2828 = vmatmul.mubr.bf16.gmra.mrb[0].mxu0 %v479
        %v2829 = vpop.f32.mrb[0].mxu0
        %v2830 = vadd.f32 %v2729, %v2829
        %v2831 = vpop.f32.mrb[0].mxu0
        %v2832 = vadd.f32 %v2731, %v2831
        %v2833 = vpop.f32.mrb[0].mxu0
        %v2834 = vadd.f32 %v2733, %v2833
        %v2835 = vpop.f32.mrb[0].mxu0
        %v2836 = vadd.f32 %v2735, %v2835
        %2837 = vmatprep.mubr.bf16.mxu0 %v2051
        %2838 = vmatmul.mubr.bf16.gmra.mrb[0].mxu0 %v487
        %v2839 = vpop.f32.mrb[0].mxu0
        %v2840 = vadd.f32 %v2739, %v2839
        %v2841 = vpop.f32.mrb[0].mxu0
        %v2842 = vadd.f32 %v2741, %v2841
        %v2843 = vpop.f32.mrb[0].mxu0
        %v2844 = vadd.f32 %v2743, %v2843
        %v2845 = vpop.f32.mrb[0].mxu0
        %v2846 = vadd.f32 %v2745, %v2845
        %2847 = vmatprep.mubr.bf16.mxu0 %v2054
        %2848 = vmatmul.mubr.bf16.gmra.mrb[0].mxu0 %v495
        %v2849 = vpop.f32.mrb[0].mxu0
        %v2850 = vadd.f32 %v2749, %v2849
        %v2851 = vpop.f32.mrb[0].mxu0
        %v2852 = vadd.f32 %v2751, %v2851
        %v2853 = vpop.f32.mrb[0].mxu0
        %v2854 = vadd.f32 %v2753, %v2853
        %v2855 = vpop.f32.mrb[0].mxu0
        %v2856 = vadd.f32 %v2755, %v2855
        %2857 = vmatprep.mubr.bf16.mxu0 %v2057
        %2858 = vmatmul.mubr.bf16.gmra.mrb[0].mxu0 %v503
        %v2859 = vpop.f32.mrb[0].mxu0
        %v2860 = vadd.f32 %v2759, %v2859
        %v2861 = vpop.f32.mrb[0].mxu0
        %v2862 = vadd.f32 %v2761, %v2861
        %v2863 = vpop.f32.mrb[0].mxu0
        %v2864 = vadd.f32 %v2763, %v2863
        %v2865 = vpop.f32.mrb[0].mxu0
        %v2866 = vadd.f32 %v2765, %v2865
        %2867 = vmatprep.mubr.bf16.mxu0 %v2060
        %2868 = vmatmul.mubr.bf16.gmra.mrb[0].mxu0 %v511
        %v2869 = vpop.f32.mrb[0].mxu0
        %v2870 = vadd.f32 %v2769, %v2869
        %v2871 = vpop.f32.mrb[0].mxu0
        %v2872 = vadd.f32 %v2771, %v2871
        %v2873 = vpop.f32.mrb[0].mxu0
        %v2874 = vadd.f32 %v2773, %v2873
        %v2875 = vpop.f32.mrb[0].mxu0
        %v2876 = vadd.f32 %v2775, %v2875
        %2877 = vmatprep.mubr.bf16.mxu0 %v2063
        %2878 = vmatmul.mubr.bf16.gmra.mrb[0].mxu0 %v519
        %v2879 = vpop.f32.mrb[0].mxu0
        %v2880 = vadd.f32 %v2779, %v2879
        %v2881 = vpop.f32.mrb[0].mxu0
        %v2882 = vadd.f32 %v2781, %v2881
        %v2883 = vpop.f32.mrb[0].mxu0
        %v2884 = vpop.f32.mrb[0].mxu0
        %2885 = vdwg.mxu0
        %v2886 = vmax.f32 %v2416, 0.0
        %v2887 = vmax.f32 %v2418, 0.0
        %v2888 = vmax.f32 %v2820, 0.0
        %v2889 = vmax.f32 %v2822, 0.0
        %v2890 = vmax.f32 %v2420, 0.0
        %v2891 = vmax.f32 %v2422, 0.0
        %v2892 = vmax.f32 %v2824, 0.0
        %v2893 = vmax.f32 %v2826, 0.0
        %v2894 = vmax.f32 %v2426, 0.0
        %v2895 = vmax.f32 %v2428, 0.0
        %v2896 = vmax.f32 %v2830, 0.0
        %v2897 = vmax.f32 %v2832, 0.0
        %v2898 = vmax.f32 %v2430, 0.0
        %v2899 = vmax.f32 %v2432, 0.0
        %v2900 = vmax.f32 %v2834, 0.0
        %v2901 = vmax.f32 %v2836, 0.0
        %v2902 = vmax.f32 %v2436, 0.0
        %v2903 = vmax.f32 %v2438, 0.0
        %v2904 = vmax.f32 %v2840, 0.0
        %v2905 = vmax.f32 %v2842, 0.0
        %v2906 = vmax.f32 %v2440, 0.0
        %v2907 = vmax.f32 %v2442, 0.0
        %v2908 = vmax.f32 %v2844, 0.0
        %v2909 = vmax.f32 %v2846, 0.0
        %v2910 = vmax.f32 %v2446, 0.0
        %v2911 = vmax.f32 %v2448, 0.0
        %v2912 = vmax.f32 %v2850, 0.0
        %v2913 = vmax.f32 %v2852, 0.0
        %v2914 = vmax.f32 %v2450, 0.0
        %v2915 = vmax.f32 %v2452, 0.0
        %v2916 = vmax.f32 %v2854, 0.0
        %v2917 = vmax.f32 %v2856, 0.0
        %v2918 = vmax.f32 %v2456, 0.0
        %v2919 = vmax.f32 %v2458, 0.0
        %v2920 = vmax.f32 %v2860, 0.0
        %v2921 = vmax.f32 %v2862, 0.0
        %v2922 = vmax.f32 %v2460, 0.0
        %v2923 = vmax.f32 %v2462, 0.0
        %v2924 = vmax.f32 %v2864, 0.0
        %v2925 = vmax.f32 %v2866, 0.0
        %v2926 = vmax.f32 %v2466, 0.0
        %v2927 = vmax.f32 %v2468, 0.0
        %v2928 = vmax.f32 %v2870, 0.0
        %v2929 = vmax.f32 %v2872, 0.0
        %v2930 = vmax.f32 %v2470, 0.0
        %v2931 = vmax.f32 %v2472, 0.0
        %v2932 = vmax.f32 %v2874, 0.0
        %v2933 = vmax.f32 %v2876, 0.0
        %v2934 = vmax.f32 %v2476, 0.0
        %v2935 = vmax.f32 %v2478, 0.0
        %v2936 = vmax.f32 %v2880, 0.0
        %v2937 = vmax.f32 %v2882, 0.0
        %v2938 = vpack.c.bf16 %v2890, %v2886
        %v2939 = vpack.c.bf16 %v2891, %v2887
        %v2940 = vpack.c.bf16 %v2892, %v2888
        %v2941 = vpack.c.bf16 %v2893, %v2889
        %v2942 = vpack.c.bf16 %v2898, %v2894
        %v2943 = vpack.c.bf16 %v2899, %v2895
        %v2944 = vpack.c.bf16 %v2900, %v2896
        %v2945 = vpack.c.bf16 %v2901, %v2897
        %v2946 = vpack.c.bf16 %v2906, %v2902
        %v2947 = vpack.c.bf16 %v2907, %v2903
        %v2948 = vpack.c.bf16 %v2908, %v2904
        %v2949 = vpack.c.bf16 %v2909, %v2905
        %v2950 = vpack.c.bf16 %v2914, %v2910
        %v2951 = vpack.c.bf16 %v2915, %v2911
        %v2952 = vpack.c.bf16 %v2916, %v2912
        %v2953 = vpack.c.bf16 %v2917, %v2913
        %v2954 = vpack.c.bf16 %v2922, %v2918
        %v2955 = vpack.c.bf16 %v2923, %v2919
        %v2956 = vpack.c.bf16 %v2924, %v2920
        %v2957 = vpack.c.bf16 %v2925, %v2921
        %v2958 = vpack.c.bf16 %v2930, %v2926
        %v2959 = vpack.c.bf16 %v2931, %v2927
        %v2960 = vpack.c.bf16 %v2932, %v2928
        %v2961 = vpack.c.bf16 %v2933, %v2929
        %v2962 = vpack.c.bf16 %v2934, %v2934
        %v2963 = vpack.c.bf16 %v2935, %v2935
        %v2964 = vpack.c.bf16 %v2936, %v2936
        %v2965 = vpack.c.bf16 %v2937, %v2937
        %v2966 = vld [vmem:[#allocation7] sm:$0xff]
        %v2967 = vld [vmem:[#allocation7 + $0x8] sm:$0xff]
        %v2968 = vld [vmem:[#allocation7 + $0x10] sm:$0xff]
        %v2969 = vld [vmem:[#allocation7 + $0x18] sm:$0xff]
        %v2970 = vld [vmem:[#allocation7 + $0x20] sm:$0xff]
        %v2971 = vld [vmem:[#allocation7 + $0x28] sm:$0xff]
        %v2972 = vld [vmem:[#allocation7 + $0x30] sm:$0xff]
        %v2973 = vld [vmem:[#allocation7 + $0x38] sm:$0xff]
        %v2974 = vld [vmem:[#allocation7 + $0x40] sm:$0xff]
        %v2975 = vld [vmem:[#allocation7 + $0x48] sm:$0xff]
        %v2976 = vld [vmem:[#allocation7 + $0x50] sm:$0xff]
        %v2977 = vld [vmem:[#allocation7 + $0x58] sm:$0xff]
        %v2978 = vld [vmem:[#allocation7 + $0x60] sm:$0xff]
        %v2979 = vld [vmem:[#allocation7 + $0x68] sm:$0xff]
        %v2980 = vld [vmem:[#allocation7 + $0x70] sm:$0xff]
        %v2981 = vld [vmem:[#allocation7 + $0x78] sm:$0xff]
        %v2982 = vld [vmem:[#allocation7 + $0x80] sm:$0xff]
        %v2983 = vld [vmem:[#allocation7 + $0x88] sm:$0xff]
        %v2984 = vld [vmem:[#allocation7 + $0x90] sm:$0xff]
        %v2985 = vld [vmem:[#allocation7 + $0x98] sm:$0xff]
        %v2986 = vld [vmem:[#allocation7 + $0xa0] sm:$0xff]
        %v2987 = vld [vmem:[#allocation7 + $0xa8] sm:$0xff]
        %v2988 = vld [vmem:[#allocation7 + $0xb0] sm:$0xff]
        %v2989 = vld [vmem:[#allocation7 + $0xb8] sm:$0xff]
        %v2990 = vld [vmem:[#allocation7 + $0xc0] sm:$0xff]
        %v2991 = vld [vmem:[#allocation7 + $0xc8] sm:$0xff]
        %v2992 = vld [vmem:[#allocation7 + $0xd0] sm:$0xff]
        %v2993 = vld [vmem:[#allocation7 + $0xd8] sm:$0xff]
        %v2994 = vld [vmem:[#allocation7 + $0xe0] sm:$0xff]
        %v2995 = vld [vmem:[#allocation7 + $0xe8] sm:$0xff]
        %v2996 = vld [vmem:[#allocation7 + $0xf0] sm:$0xff]
        %v2997 = vld [vmem:[#allocation7 + $0xf8] sm:$0xff]
        %v2998 = vld [vmem:[#allocation7 + $0x100] sm:$0xff]
        %v2999 = vld [vmem:[#allocation7 + $0x108] sm:$0xff]
        %v3000 = vld [vmem:[#allocation7 + $0x110] sm:$0xff]
        %v3001 = vld [vmem:[#allocation7 + $0x118] sm:$0xff]
        %v3002 = vld [vmem:[#allocation7 + $0x120] sm:$0xff]
        %v3003 = vld [vmem:[#allocation7 + $0x128] sm:$0xff]
        %v3004 = vld [vmem:[#allocation7 + $0x130] sm:$0xff]
        %v3005 = vld [vmem:[#allocation7 + $0x138] sm:$0xff]
        %v3006 = vld [vmem:[#allocation7 + $0x140] sm:$0xff]
        %v3007 = vld [vmem:[#allocation7 + $0x148] sm:$0xff]
        %v3008 = vld [vmem:[#allocation7 + $0x150] sm:$0xff]
        %v3009 = vld [vmem:[#allocation7 + $0x158] sm:$0xff]
        %v3010 = vld [vmem:[#allocation7 + $0x160] sm:$0xff]
        %v3011 = vld [vmem:[#allocation7 + $0x168] sm:$0xff]
        %v3012 = vld [vmem:[#allocation7 + $0x170] sm:$0xff]
        %v3013 = vld [vmem:[#allocation7 + $0x178] sm:$0xff]
        %v3014 = vld [vmem:[#allocation7 + $0x180] sm:$0xff]
        %v3015 = vld [vmem:[#allocation7 + $0x188] sm:$0xff]
        %v3016 = vld [vmem:[#allocation7 + $0x190] sm:$0xff]
        %v3017 = vld [vmem:[#allocation7 + $0x198] sm:$0xff]
        %v3018 = vld [vmem:[#allocation7 + $0x1a0] sm:$0xff]
        %v3019 = vld [vmem:[#allocation7 + $0x1a8] sm:$0xff]
        %v3020 = vld [vmem:[#allocation7 + $0x1b0] sm:$0xff]
        %v3021 = vld [vmem:[#allocation7 + $0x1b8] sm:$0xff]
        %v3022 = vld [vmem:[#allocation7 + $0x1c0] sm:$0xff]
        %v3023 = vld [vmem:[#allocation7 + $0x1c8] sm:$0xff]
        %v3024 = vld [vmem:[#allocation7 + $0x1d0] sm:$0xff]
        %v3025 = vld [vmem:[#allocation7 + $0x1d8] sm:$0xff]
        %v3026 = vld [vmem:[#allocation7 + $0x1e0] sm:$0xff]
        %v3027 = vld [vmem:[#allocation7 + $0x1e8] sm:$0xff]
        %v3028 = vld [vmem:[#allocation7 + $0x1f0] sm:$0xff]
        %v3029 = vld [vmem:[#allocation7 + $0x1f8] sm:$0xff]
        %v3030 = vld [vmem:[%s4] sm:$0x3]
        %v3032 = vlaneseq
        %v3033 = vshrl.u32 %v3032, 7
        %v3034 = vsub.s32 0, %v3033
        %v3035 = vrot.slane %v3030, %v3034
        %v3036 = vlaneseq
        %v3037 = vshrl.u32 %v3036, 7
        %v3038 = vsub.s32 1, %v3037
        %v3039 = vrot.slane %v3030, %v3038
        %v3106 = vunpack.c.l.b16 %v2966
        %v3107 = vunpack.c.h.b16 %v2966
        %v3108 = vunpack.c.l.b16 %v2967
        %v3109 = vunpack.c.h.b16 %v2967
        %v3110 = vunpack.c.l.b16 %v2968
        %v3111 = vunpack.c.h.b16 %v2968
        %v3112 = vunpack.c.l.b16 %v2969
        %v3113 = vunpack.c.h.b16 %v2969
        %v3114 = vunpack.c.l.b16 %v2970
        %v3115 = vunpack.c.h.b16 %v2970
        %v3116 = vunpack.c.l.b16 %v2971
        %v3117 = vunpack.c.h.b16 %v2971
        %v3118 = vunpack.c.l.b16 %v2972
        %v3119 = vunpack.c.h.b16 %v2972
        %v3120 = vunpack.c.l.b16 %v2973
        %v3121 = vunpack.c.h.b16 %v2973
        %v3122 = vunpack.c.l.b16 %v2974
        %v3123 = vunpack.c.h.b16 %v2974
        %v3124 = vunpack.c.l.b16 %v2975
        %v3125 = vunpack.c.h.b16 %v2975
        %v3126 = vunpack.c.l.b16 %v2976
        %v3127 = vunpack.c.h.b16 %v2976
        %v3128 = vunpack.c.l.b16 %v2977
        %v3129 = vunpack.c.h.b16 %v2977
        %v3130 = vunpack.c.l.b16 %v2978
        %v3131 = vunpack.c.h.b16 %v2978
        %v3132 = vunpack.c.l.b16 %v2979
        %v3133 = vunpack.c.h.b16 %v2979
        %v3134 = vunpack.c.l.b16 %v2980
        %v3135 = vunpack.c.h.b16 %v2980
        %v3136 = vunpack.c.l.b16 %v2981
        %v3137 = vunpack.c.h.b16 %v2981
        %v3138 = vunpack.c.l.b16 %v2982
        %v3139 = vunpack.c.h.b16 %v2982
        %v3140 = vunpack.c.l.b16 %v2983
        %v3141 = vunpack.c.h.b16 %v2983
        %v3142 = vunpack.c.l.b16 %v2984
        %v3143 = vunpack.c.h.b16 %v2984
        %v3144 = vunpack.c.l.b16 %v2985
        %v3145 = vunpack.c.h.b16 %v2985
        %v3146 = vunpack.c.l.b16 %v2986
        %v3147 = vunpack.c.h.b16 %v2986
        %v3148 = vunpack.c.l.b16 %v2987
        %v3149 = vunpack.c.h.b16 %v2987
        %v3150 = vunpack.c.l.b16 %v2988
        %v3151 = vunpack.c.h.b16 %v2988
        %v3152 = vunpack.c.l.b16 %v2989
        %v3153 = vunpack.c.h.b16 %v2989
        %v3154 = vunpack.c.l.b16 %v2990
        %v3155 = vunpack.c.h.b16 %v2990
        %v3156 = vunpack.c.l.b16 %v2991
        %v3157 = vunpack.c.h.b16 %v2991
        %v3158 = vunpack.c.l.b16 %v2992
        %v3159 = vunpack.c.h.b16 %v2992
        %v3160 = vunpack.c.l.b16 %v2993
        %v3161 = vunpack.c.h.b16 %v2993
        %v3162 = vunpack.c.l.b16 %v2994
        %v3163 = vunpack.c.h.b16 %v2994
        %v3164 = vunpack.c.l.b16 %v2995
        %v3165 = vunpack.c.h.b16 %v2995
        %v3166 = vunpack.c.l.b16 %v2996
        %v3167 = vunpack.c.h.b16 %v2996
        %v3168 = vunpack.c.l.b16 %v2997
        %v3169 = vunpack.c.h.b16 %v2997
        %v3170 = vunpack.c.l.b16 %v2998
        %v3171 = vunpack.c.h.b16 %v2998
        %v3172 = vunpack.c.l.b16 %v2999
        %v3173 = vunpack.c.h.b16 %v2999
        %v3174 = vunpack.c.l.b16 %v3000
        %v3175 = vunpack.c.h.b16 %v3000
        %v3176 = vunpack.c.l.b16 %v3001
        %v3177 = vunpack.c.h.b16 %v3001
        %v3178 = vunpack.c.l.b16 %v3002
        %v3179 = vunpack.c.h.b16 %v3002
        %v3180 = vunpack.c.l.b16 %v3003
        %v3181 = vunpack.c.h.b16 %v3003
        %v3182 = vunpack.c.l.b16 %v3004
        %v3183 = vunpack.c.h.b16 %v3004
        %v3184 = vunpack.c.l.b16 %v3005
        %v3185 = vunpack.c.h.b16 %v3005
        %v3186 = vunpack.c.l.b16 %v3006
        %v3187 = vunpack.c.h.b16 %v3006
        %v3188 = vunpack.c.l.b16 %v3007
        %v3189 = vunpack.c.h.b16 %v3007
        %v3190 = vunpack.c.l.b16 %v3008
        %v3191 = vunpack.c.h.b16 %v3008
        %v3192 = vunpack.c.l.b16 %v3009
        %v3193 = vunpack.c.h.b16 %v3009
        %v3194 = vunpack.c.l.b16 %v3010
        %v3195 = vunpack.c.h.b16 %v3010
        %v3196 = vunpack.c.l.b16 %v3011
        %v3197 = vunpack.c.h.b16 %v3011
        %v3198 = vunpack.c.l.b16 %v3012
        %v3199 = vunpack.c.h.b16 %v3012
        %v3200 = vunpack.c.l.b16 %v3013
        %v3201 = vunpack.c.h.b16 %v3013
        %v3202 = vunpack.c.l.b16 %v3014
        %v3203 = vunpack.c.h.b16 %v3014
        %v3204 = vunpack.c.l.b16 %v3015
        %v3205 = vunpack.c.h.b16 %v3015
        %v3206 = vunpack.c.l.b16 %v3016
        %v3207 = vunpack.c.h.b16 %v3016
        %v3208 = vunpack.c.l.b16 %v3017
        %v3209 = vunpack.c.h.b16 %v3017
        %v3210 = vunpack.c.l.b16 %v3018
        %v3211 = vunpack.c.h.b16 %v3018
        %v3212 = vunpack.c.l.b16 %v3019
        %v3213 = vunpack.c.h.b16 %v3019
        %v3214 = vunpack.c.l.b16 %v3020
        %v3215 = vunpack.c.h.b16 %v3020
        %v3216 = vunpack.c.l.b16 %v3021
        %v3217 = vunpack.c.h.b16 %v3021
        %v3218 = vunpack.c.l.b16 %v3022
        %v3219 = vunpack.c.h.b16 %v3022
        %v3220 = vunpack.c.l.b16 %v3023
        %v3221 = vunpack.c.h.b16 %v3023
        %v3222 = vunpack.c.l.b16 %v3024
        %v3223 = vunpack.c.h.b16 %v3024
        %v3224 = vunpack.c.l.b16 %v3025
        %v3225 = vunpack.c.h.b16 %v3025
        %v3226 = vunpack.c.l.b16 %v3026
        %v3227 = vunpack.c.h.b16 %v3026
        %v3228 = vunpack.c.l.b16 %v3027
        %v3229 = vunpack.c.h.b16 %v3027
        %v3230 = vunpack.c.l.b16 %v3028
        %v3231 = vunpack.c.h.b16 %v3028
        %v3232 = vunpack.c.l.b16 %v3029
        %v3233 = vunpack.c.h.b16 %v3029
        %v3234 = vpack.c.b16 %v3108, %v3106
        %v3235 = vpack.c.b16 %v3109, %v3107
        %v3236 = vpack.c.b16 %v3112, %v3110
        %v3237 = vpack.c.b16 %v3113, %v3111
        %v3238 = vpack.c.b16 %v3116, %v3114
        %v3239 = vpack.c.b16 %v3117, %v3115
        %v3240 = vpack.c.b16 %v3120, %v3118
        %v3241 = vpack.c.b16 %v3121, %v3119
        %v3242 = vpack.c.b16 %v3124, %v3122
        %v3243 = vpack.c.b16 %v3125, %v3123
        %v3244 = vpack.c.b16 %v3128, %v3126
        %v3245 = vpack.c.b16 %v3129, %v3127
        %v3246 = vpack.c.b16 %v3132, %v3130
        %v3247 = vpack.c.b16 %v3133, %v3131
        %v3248 = vpack.c.b16 %v3136, %v3134
        %v3249 = vpack.c.b16 %v3137, %v3135
        %v3250 = vpack.c.b16 %v3140, %v3138
        %v3251 = vpack.c.b16 %v3141, %v3139
        %v3252 = vpack.c.b16 %v3144, %v3142
        %v3253 = vpack.c.b16 %v3145, %v3143
        %v3254 = vpack.c.b16 %v3148, %v3146
        %v3255 = vpack.c.b16 %v3149, %v3147
        %v3256 = vpack.c.b16 %v3152, %v3150
        %v3257 = vpack.c.b16 %v3153, %v3151
        %v3258 = vpack.c.b16 %v3156, %v3154
        %v3259 = vpack.c.b16 %v3157, %v3155
        %v3260 = vpack.c.b16 %v3160, %v3158
        %v3261 = vpack.c.b16 %v3161, %v3159
        %v3262 = vpack.c.b16 %v3164, %v3162
        %v3263 = vpack.c.b16 %v3165, %v3163
        %v3264 = vpack.c.b16 %v3168, %v3166
        %v3265 = vpack.c.b16 %v3169, %v3167
        %v3266 = vpack.c.b16 %v3172, %v3170
        %v3267 = vpack.c.b16 %v3173, %v3171
        %v3268 = vpack.c.b16 %v3176, %v3174
        %v3269 = vpack.c.b16 %v3177, %v3175
        %v3270 = vpack.c.b16 %v3180, %v3178
        %v3271 = vpack.c.b16 %v3181, %v3179
        %v3272 = vpack.c.b16 %v3184, %v3182
        %v3273 = vpack.c.b16 %v3185, %v3183
        %v3274 = vpack.c.b16 %v3188, %v3186
        %v3275 = vpack.c.b16 %v3189, %v3187
        %v3276 = vpack.c.b16 %v3192, %v3190
        %v3277 = vpack.c.b16 %v3193, %v3191
        %v3278 = vpack.c.b16 %v3196, %v3194
        %v3279 = vpack.c.b16 %v3197, %v3195
        %v3280 = vpack.c.b16 %v3200, %v3198
        %v3281 = vpack.c.b16 %v3201, %v3199
        %v3282 = vpack.c.b16 %v3204, %v3202
        %v3283 = vpack.c.b16 %v3205, %v3203
        %v3284 = vpack.c.b16 %v3208, %v3206
        %v3285 = vpack.c.b16 %v3209, %v3207
        %v3286 = vpack.c.b16 %v3212, %v3210
        %v3287 = vpack.c.b16 %v3213, %v3211
        %v3288 = vpack.c.b16 %v3216, %v3214
        %v3289 = vpack.c.b16 %v3217, %v3215
        %v3290 = vpack.c.b16 %v3220, %v3218
        %v3291 = vpack.c.b16 %v3221, %v3219
        %v3292 = vpack.c.b16 %v3224, %v3222
        %v3293 = vpack.c.b16 %v3225, %v3223
        %v3294 = vpack.c.b16 %v3228, %v3226
        %v3295 = vpack.c.b16 %v3229, %v3227
        %v3296 = vpack.c.b16 %v3232, %v3230
        %v3297 = vpack.c.b16 %v3233, %v3231
        %3362 = vmatprep.subr.bf16.mxu0 %v3235
        %3363 = vmatpush1.bf16.msra.mxu0 %v3234
        %3364 = vmatprep.subr.bf16.mxu0 %v3237
        %3365 = vmatpush1.bf16.msra.mxu0 %v3236
        %3366 = vmatprep.subr.bf16.mxu0 %v3239
        %3367 = vmatpush1.bf16.msra.mxu0 %v3238
        %3368 = vmatprep.subr.bf16.mxu0 %v3241
        %3369 = vmatpush1.bf16.msra.mxu0 %v3240
        %3370 = vmatprep.subr.bf16.mxu0 %v3243
        %3371 = vmatpush1.bf16.msra.mxu0 %v3242
        %3372 = vmatprep.subr.bf16.mxu0 %v3245
        %3373 = vmatpush1.bf16.msra.mxu0 %v3244
        %3374 = vmatprep.subr.bf16.mxu0 %v3247
        %3375 = vmatpush1.bf16.msra.mxu0 %v3246
        %3376 = vmatprep.subr.bf16.mxu0 %v3249
        %3377 = vmatpush1.bf16.msra.mxu0 %v3248
        %3378 = vmatprep.subr.bf16.mxu0 %v3251
        %3379 = vmatpush1.bf16.msra.mxu0 %v3250
        %3380 = vmatprep.subr.bf16.mxu0 %v3253
        %3381 = vmatpush1.bf16.msra.mxu0 %v3252
        %3382 = vmatprep.subr.bf16.mxu0 %v3255
        %3383 = vmatpush1.bf16.msra.mxu0 %v3254
        %3384 = vmatprep.subr.bf16.mxu0 %v3257
        %3385 = vmatpush1.bf16.msra.mxu0 %v3256
        %3386 = vmatprep.subr.bf16.mxu0 %v3259
        %3387 = vmatpush1.bf16.msra.mxu0 %v3258
        %3388 = vmatprep.subr.bf16.mxu0 %v3261
        %3389 = vmatpush1.bf16.msra.mxu0 %v3260
        %3390 = vmatprep.subr.bf16.mxu0 %v3263
        %3391 = vmatpush1.bf16.msra.mxu0 %v3262
        %3392 = vmatprep.subr.bf16.mxu0 %v3265
        %3393 = vmatpush1.bf16.msra.mxu0 %v3264
        %3394 = vmatprep.mubr.bf16.mxu0 %v2939
        %3395 = vmatmul.mubr.bf16.gmra.mrb[0].mxu0 %v2938
        %v3396 = vpop.f32.mrb[0].mxu0
        %v3397 = vadd.f32 %v3035, %v3396
        %v3398 = vpop.f32.mrb[0].mxu0
        %v3399 = vadd.f32 %v3039, %v3398
        %v3400 = vpop.f32.mrb[0].mxu0
        %v3401 = vadd.f32 %v3035, %v3400
        %v3402 = vpop.f32.mrb[0].mxu0
        %v3403 = vadd.f32 %v3039, %v3402
        %3404 = vmatprep.mubr.bf16.mxu0 %v2943
        %3405 = vmatmul.mubr.bf16.gmra.mrb[0].mxu0 %v2942
        %v3406 = vpop.f32.mrb[0].mxu0
        %v3407 = vadd.f32 %v3035, %v3406
        %v3408 = vpop.f32.mrb[0].mxu0
        %v3409 = vadd.f32 %v3039, %v3408
        %v3410 = vpop.f32.mrb[0].mxu0
        %v3411 = vadd.f32 %v3035, %v3410
        %v3412 = vpop.f32.mrb[0].mxu0
        %v3413 = vadd.f32 %v3039, %v3412
        %3414 = vmatprep.mubr.bf16.mxu0 %v2947
        %3415 = vmatmul.mubr.bf16.gmra.mrb[0].mxu0 %v2946
        %v3416 = vpop.f32.mrb[0].mxu0
        %v3417 = vadd.f32 %v3035, %v3416
        %v3418 = vpop.f32.mrb[0].mxu0
        %v3419 = vadd.f32 %v3039, %v3418
        %v3420 = vpop.f32.mrb[0].mxu0
        %v3421 = vadd.f32 %v3035, %v3420
        %v3422 = vpop.f32.mrb[0].mxu0
        %v3423 = vadd.f32 %v3039, %v3422
        %3424 = vmatprep.mubr.bf16.mxu0 %v2951
        %3425 = vmatmul.mubr.bf16.gmra.mrb[0].mxu0 %v2950
        %v3426 = vpop.f32.mrb[0].mxu0
        %v3427 = vadd.f32 %v3035, %v3426
        %v3428 = vpop.f32.mrb[0].mxu0
        %v3429 = vadd.f32 %v3039, %v3428
        %v3430 = vpop.f32.mrb[0].mxu0
        %v3431 = vadd.f32 %v3035, %v3430
        %v3432 = vpop.f32.mrb[0].mxu0
        %v3433 = vadd.f32 %v3039, %v3432
        %3434 = vmatprep.mubr.bf16.mxu0 %v2955
        %3435 = vmatmul.mubr.bf16.gmra.mrb[0].mxu0 %v2954
        %v3436 = vpop.f32.mrb[0].mxu0
        %v3437 = vadd.f32 %v3035, %v3436
        %v3438 = vpop.f32.mrb[0].mxu0
        %v3439 = vadd.f32 %v3039, %v3438
        %v3440 = vpop.f32.mrb[0].mxu0
        %v3441 = vadd.f32 %v3035, %v3440
        %v3442 = vpop.f32.mrb[0].mxu0
        %v3443 = vadd.f32 %v3039, %v3442
        %3444 = vmatprep.mubr.bf16.mxu0 %v2959
        %3445 = vmatmul.mubr.bf16.gmra.mrb[0].mxu0 %v2958
        %v3446 = vpop.f32.mrb[0].mxu0
        %v3447 = vadd.f32 %v3035, %v3446
        %v3448 = vpop.f32.mrb[0].mxu0
        %v3449 = vadd.f32 %v3039, %v3448
        %v3450 = vpop.f32.mrb[0].mxu0
        %v3451 = vadd.f32 %v3035, %v3450
        %v3452 = vpop.f32.mrb[0].mxu0
        %v3453 = vadd.f32 %v3039, %v3452
        %3454 = vmatprep.mubr.bf16.mxu0 %v2963
        %3455 = vmatmul.mubr.bf16.gmra.mrb[0].mxu0 %v2962
        %v3456 = vpop.f32.mrb[0].mxu0
        %v3457 = vadd.f32 %v3035, %v3456
        %v3458 = vpop.f32.mrb[0].mxu0
        %v3459 = vadd.f32 %v3039, %v3458
        %v3460 = vpop.f32.mrb[0].mxu0
        %v3461 = vpop.f32.mrb[0].mxu0
        %3462 = vdwg.mxu0
        %3463 = vmatprep.subr.bf16.mxu0 %v3267
        %3464 = vmatpush1.bf16.msra.mxu0 %v3266
        %3465 = vmatprep.subr.bf16.mxu0 %v3269
        %3466 = vmatpush1.bf16.msra.mxu0 %v3268
        %3467 = vmatprep.subr.bf16.mxu0 %v3271
        %3468 = vmatpush1.bf16.msra.mxu0 %v3270
        %3469 = vmatprep.subr.bf16.mxu0 %v3273
        %3470 = vmatpush1.bf16.msra.mxu0 %v3272
        %3471 = vmatprep.subr.bf16.mxu0 %v3275
        %3472 = vmatpush1.bf16.msra.mxu0 %v3274
        %3473 = vmatprep.subr.bf16.mxu0 %v3277
        %3474 = vmatpush1.bf16.msra.mxu0 %v3276
        %3475 = vmatprep.subr.bf16.mxu0 %v3279
        %3476 = vmatpush1.bf16.msra.mxu0 %v3278
        %3477 = vmatprep.subr.bf16.mxu0 %v3281
        %3478 = vmatpush1.bf16.msra.mxu0 %v3280
        %3479 = vmatprep.subr.bf16.mxu0 %v3283
        %3480 = vmatpush1.bf16.msra.mxu0 %v3282
        %3481 = vmatprep.subr.bf16.mxu0 %v3285
        %3482 = vmatpush1.bf16.msra.mxu0 %v3284
        %3483 = vmatprep.subr.bf16.mxu0 %v3287
        %3484 = vmatpush1.bf16.msra.mxu0 %v3286
        %3485 = vmatprep.subr.bf16.mxu0 %v3289
        %3486 = vmatpush1.bf16.msra.mxu0 %v3288
        %3487 = vmatprep.subr.bf16.mxu0 %v3291
        %3488 = vmatpush1.bf16.msra.mxu0 %v3290
        %3489 = vmatprep.subr.bf16.mxu0 %v3293
        %3490 = vmatpush1.bf16.msra.mxu0 %v3292
        %3491 = vmatprep.subr.bf16.mxu0 %v3295
        %3492 = vmatpush1.bf16.msra.mxu0 %v3294
        %3493 = vmatprep.subr.bf16.mxu0 %v3297
        %3494 = vmatpush1.bf16.msra.mxu0 %v3296
        %3495 = vmatprep.mubr.bf16.mxu0 %v2941
        %3496 = vmatmul.mubr.bf16.gmra.mrb[0].mxu0 %v2940
        %v3497 = vpop.f32.mrb[0].mxu0
        %v3498 = vadd.f32 %v3397, %v3497
        %v3499 = vpop.f32.mrb[0].mxu0
        %v3500 = vadd.f32 %v3399, %v3499
        %v3501 = vpop.f32.mrb[0].mxu0
        %v3502 = vadd.f32 %v3401, %v3501
        %v3503 = vpop.f32.mrb[0].mxu0
        %v3504 = vadd.f32 %v3403, %v3503
        %3505 = vmatprep.mubr.bf16.mxu0 %v2945
        %3506 = vmatmul.mubr.bf16.gmra.mrb[0].mxu0 %v2944
        %v3507 = vpop.f32.mrb[0].mxu0
        %v3508 = vadd.f32 %v3407, %v3507
        %v3509 = vpop.f32.mrb[0].mxu0
        %v3510 = vadd.f32 %v3409, %v3509
        %v3511 = vpop.f32.mrb[0].mxu0
        %v3512 = vadd.f32 %v3411, %v3511
        %v3513 = vpop.f32.mrb[0].mxu0
        %v3514 = vadd.f32 %v3413, %v3513
        %3515 = vmatprep.mubr.bf16.mxu0 %v2949
        %3516 = vmatmul.mubr.bf16.gmra.mrb[0].mxu0 %v2948
        %v3517 = vpop.f32.mrb[0].mxu0
        %v3518 = vadd.f32 %v3417, %v3517
        %v3519 = vpop.f32.mrb[0].mxu0
        %v3520 = vadd.f32 %v3419, %v3519
        %v3521 = vpop.f32.mrb[0].mxu0
        %v3522 = vadd.f32 %v3421, %v3521
        %v3523 = vpop.f32.mrb[0].mxu0
        %v3524 = vadd.f32 %v3423, %v3523
        %3525 = vmatprep.mubr.bf16.mxu0 %v2953
        %3526 = vmatmul.mubr.bf16.gmra.mrb[0].mxu0 %v2952
        %v3527 = vpop.f32.mrb[0].mxu0
        %v3528 = vadd.f32 %v3427, %v3527
        %v3529 = vpop.f32.mrb[0].mxu0
        %v3530 = vadd.f32 %v3429, %v3529
        %v3531 = vpop.f32.mrb[0].mxu0
        %v3532 = vadd.f32 %v3431, %v3531
        %v3533 = vpop.f32.mrb[0].mxu0
        %v3534 = vadd.f32 %v3433, %v3533
        %3535 = vmatprep.mubr.bf16.mxu0 %v2957
        %3536 = vmatmul.mubr.bf16.gmra.mrb[0].mxu0 %v2956
        %v3537 = vpop.f32.mrb[0].mxu0
        %v3538 = vadd.f32 %v3437, %v3537
        %v3539 = vpop.f32.mrb[0].mxu0
        %v3540 = vadd.f32 %v3439, %v3539
        %v3541 = vpop.f32.mrb[0].mxu0
        %v3542 = vadd.f32 %v3441, %v3541
        %v3543 = vpop.f32.mrb[0].mxu0
        %v3544 = vadd.f32 %v3443, %v3543
        %3545 = vmatprep.mubr.bf16.mxu0 %v2961
        %3546 = vmatmul.mubr.bf16.gmra.mrb[0].mxu0 %v2960
        %v3547 = vpop.f32.mrb[0].mxu0
        %v3548 = vadd.f32 %v3447, %v3547
        %v3549 = vpop.f32.mrb[0].mxu0
        %v3550 = vadd.f32 %v3449, %v3549
        %v3551 = vpop.f32.mrb[0].mxu0
        %v3552 = vadd.f32 %v3451, %v3551
        %v3553 = vpop.f32.mrb[0].mxu0
        %v3554 = vadd.f32 %v3453, %v3553
        %3555 = vmatprep.mubr.bf16.mxu0 %v2965
        %3556 = vmatmul.mubr.bf16.gmra.mrb[0].mxu0 %v2964
        %v3557 = vpop.f32.mrb[0].mxu0
        %v3558 = vadd.f32 %v3457, %v3557
        %v3559 = vpop.f32.mrb[0].mxu0
        %v3560 = vadd.f32 %v3459, %v3559
        %v3561 = vpop.f32.mrb[0].mxu0
        %v3562 = vpop.f32.mrb[0].mxu0
        %3563 = vdwg.mxu0
        %v3564 = vmax.f32 %v3498, 0.0
        %v3565 = vmax.f32 %v3500, 0.0
        %v3566 = vmax.f32 %v3502, 0.0
        %v3567 = vmax.f32 %v3504, 0.0
        %v3568 = vmax.f32 %v3508, 0.0
        %v3569 = vmax.f32 %v3510, 0.0
        %v3570 = vmax.f32 %v3512, 0.0
        %v3571 = vmax.f32 %v3514, 0.0
        %v3572 = vmax.f32 %v3518, 0.0
        %v3573 = vmax.f32 %v3520, 0.0
        %v3574 = vmax.f32 %v3522, 0.0
        %v3575 = vmax.f32 %v3524, 0.0
        %v3576 = vmax.f32 %v3528, 0.0
        %v3577 = vmax.f32 %v3530, 0.0
        %v3578 = vmax.f32 %v3532, 0.0
        %v3579 = vmax.f32 %v3534, 0.0
        %v3580 = vmax.f32 %v3538, 0.0
        %v3581 = vmax.f32 %v3540, 0.0
        %v3582 = vmax.f32 %v3542, 0.0
        %v3583 = vmax.f32 %v3544, 0.0
        %v3584 = vmax.f32 %v3548, 0.0
        %v3585 = vmax.f32 %v3550, 0.0
        %v3586 = vmax.f32 %v3552, 0.0
        %v3587 = vmax.f32 %v3554, 0.0
        %v3588 = vmax.f32 %v3558, 0.0
        %v3589 = vmax.f32 %v3560, 0.0
        %v3590 = vpack.c.bf16 %v3566, %v3564
        %v3591 = vpack.c.bf16 %v3567, %v3565
        %v3592 = vpack.c.bf16 %v3570, %v3568
        %v3593 = vpack.c.bf16 %v3571, %v3569
        %v3594 = vpack.c.bf16 %v3574, %v3572
        %v3595 = vpack.c.bf16 %v3575, %v3573
        %v3596 = vpack.c.bf16 %v3578, %v3576
        %v3597 = vpack.c.bf16 %v3579, %v3577
        %v3598 = vpack.c.bf16 %v3582, %v3580
        %v3599 = vpack.c.bf16 %v3583, %v3581
        %v3600 = vpack.c.bf16 %v3586, %v3584
        %v3601 = vpack.c.bf16 %v3587, %v3585
        %v3602 = vpack.c.bf16 %v3588, %v3588
        %v3603 = vpack.c.bf16 %v3589, %v3589
        %v3604 = vld [vmem:[#allocation8] sm:$0xf]
        %v3605 = vld [vmem:[#allocation8 + $0x4] sm:$0xf]
        %v3606 = vld [vmem:[#allocation8 + $0x8] sm:$0xf]
        %v3607 = vld [vmem:[#allocation8 + $0xc] sm:$0xf]
        %v3608 = vld [vmem:[#allocation8 + $0x10] sm:$0xf]
        %v3609 = vld [vmem:[#allocation8 + $0x14] sm:$0xf]
        %v3610 = vld [vmem:[#allocation8 + $0x18] sm:$0xf]
        %v3611 = vld [vmem:[#allocation8 + $0x1c] sm:$0xf]
        %v3612 = vld [vmem:[#allocation8 + $0x20] sm:$0xf]
        %v3613 = vld [vmem:[#allocation8 + $0x24] sm:$0xf]
        %v3614 = vld [vmem:[#allocation8 + $0x28] sm:$0xf]
        %v3615 = vld [vmem:[#allocation8 + $0x2c] sm:$0xf]
        %v3616 = vld [vmem:[#allocation8 + $0x30] sm:$0xf]
        %v3617 = vld [vmem:[#allocation8 + $0x34] sm:$0xf]
        %v3618 = vld [vmem:[#allocation8 + $0x38] sm:$0xf]
        %v3619 = vld [vmem:[#allocation8 + $0x3c] sm:$0xf]
        %v3620 = vld [vmem:[#allocation8 + $0x40] sm:$0xf]
        %v3621 = vld [vmem:[#allocation8 + $0x44] sm:$0xf]
        %v3622 = vld [vmem:[#allocation8 + $0x48] sm:$0xf]
        %v3623 = vld [vmem:[#allocation8 + $0x4c] sm:$0xf]
        %v3624 = vld [vmem:[#allocation8 + $0x50] sm:$0xf]
        %v3625 = vld [vmem:[#allocation8 + $0x54] sm:$0xf]
        %v3626 = vld [vmem:[#allocation8 + $0x58] sm:$0xf]
        %v3627 = vld [vmem:[#allocation8 + $0x5c] sm:$0xf]
        %v3628 = vld [vmem:[#allocation8 + $0x60] sm:$0xf]
        %v3629 = vld [vmem:[#allocation8 + $0x64] sm:$0xf]
        %v3630 = vld [vmem:[#allocation8 + $0x68] sm:$0xf]
        %v3631 = vld [vmem:[#allocation8 + $0x6c] sm:$0xf]
        %v3632 = vld [vmem:[#allocation8 + $0x70] sm:$0xf]
        %v3633 = vld [vmem:[#allocation8 + $0x74] sm:$0xf]
        %v3634 = vld [vmem:[#allocation8 + $0x78] sm:$0xf]
        %v3635 = vld [vmem:[#allocation8 + $0x7c] sm:$0xf]
        %v3636 = vld [vmem:[%s6] sm:$0x1]
        %v3638 = vlaneseq
        %v3639 = vshrl.u32 %v3638, 7
        %v3640 = vsub.s32 0, %v3639
        %v3641 = vrot.slane %v3636, %v3640
        %v3675 = vunpack.c.l.b16 %v3604
        %v3676 = vunpack.c.l.b16 %v3605
        %v3677 = vunpack.c.l.b16 %v3606
        %v3678 = vunpack.c.l.b16 %v3607
        %v3679 = vunpack.c.l.b16 %v3608
        %v3680 = vunpack.c.l.b16 %v3609
        %v3681 = vunpack.c.l.b16 %v3610
        %v3682 = vunpack.c.l.b16 %v3611
        %v3683 = vunpack.c.l.b16 %v3612
        %v3684 = vunpack.c.l.b16 %v3613
        %v3685 = vunpack.c.l.b16 %v3614
        %v3686 = vunpack.c.l.b16 %v3615
        %v3687 = vunpack.c.l.b16 %v3616
        %v3688 = vunpack.c.l.b16 %v3617
        %v3689 = vunpack.c.l.b16 %v3618
        %v3690 = vunpack.c.l.b16 %v3619
        %v3691 = vunpack.c.l.b16 %v3620
        %v3692 = vunpack.c.l.b16 %v3621
        %v3693 = vunpack.c.l.b16 %v3622
        %v3694 = vunpack.c.l.b16 %v3623
        %v3695 = vunpack.c.l.b16 %v3624
        %v3696 = vunpack.c.l.b16 %v3625
        %v3697 = vunpack.c.l.b16 %v3626
        %v3698 = vunpack.c.l.b16 %v3627
        %v3699 = vunpack.c.l.b16 %v3628
        %v3700 = vunpack.c.l.b16 %v3629
        %v3701 = vunpack.c.l.b16 %v3630
        %v3702 = vunpack.c.l.b16 %v3631
        %v3703 = vunpack.c.l.b16 %v3632
        %v3704 = vunpack.c.l.b16 %v3633
        %v3705 = vunpack.c.l.b16 %v3634
        %v3706 = vunpack.c.l.b16 %v3635
        %v3707 = vpack.c.b16 %v3676, %v3675
        %v3708 = vpack.c.b16 %v3678, %v3677
        %v3709 = vpack.c.b16 %v3680, %v3679
        %v3710 = vpack.c.b16 %v3682, %v3681
        %v3711 = vpack.c.b16 %v3684, %v3683
        %v3712 = vpack.c.b16 %v3686, %v3685
        %v3713 = vpack.c.b16 %v3688, %v3687
        %v3714 = vpack.c.b16 %v3690, %v3689
        %v3715 = vpack.c.b16 %v3692, %v3691
        %v3716 = vpack.c.b16 %v3694, %v3693
        %v3717 = vpack.c.b16 %v3696, %v3695
        %v3718 = vpack.c.b16 %v3698, %v3697
        %v3719 = vpack.c.b16 %v3700, %v3699
        %v3720 = vpack.c.b16 %v3702, %v3701
        %v3721 = vpack.c.b16 %v3704, %v3703
        %v3722 = vpack.c.b16 %v3706, %v3705
        %3739 = vmatprep.subr.bf16.mxu0 0
        %3740 = vmatpush1.bf16.msra.mxu0 %v3707
        %3741 = vmatprep.subr.bf16.mxu0 0
        %3742 = vmatpush1.bf16.msra.mxu0 %v3708
        %3743 = vmatprep.subr.bf16.mxu0 0
        %3744 = vmatpush1.bf16.msra.mxu0 %v3709
        %3745 = vmatprep.subr.bf16.mxu0 0
        %3746 = vmatpush1.bf16.msra.mxu0 %v3710
        %3747 = vmatprep.subr.bf16.mxu0 0
        %3748 = vmatpush1.bf16.msra.mxu0 %v3711
        %3749 = vmatprep.subr.bf16.mxu0 0
        %3750 = vmatpush1.bf16.msra.mxu0 %v3712
        %3751 = vmatprep.subr.bf16.mxu0 0
        %3752 = vmatpush1.bf16.msra.mxu0 %v3713
        %3753 = vmatprep.subr.bf16.mxu0 0
        %3754 = vmatpush1.bf16.msra.mxu0 %v3714
        %3755 = vmatprep.subr.bf16.mxu0 0
        %3756 = vmatpush1.bf16.msra.mxu0 %v3715
        %3757 = vmatprep.subr.bf16.mxu0 0
        %3758 = vmatpush1.bf16.msra.mxu0 %v3716
        %3759 = vmatprep.subr.bf16.mxu0 0
        %3760 = vmatpush1.bf16.msra.mxu0 %v3717
        %3761 = vmatprep.subr.bf16.mxu0 0
        %3762 = vmatpush1.bf16.msra.mxu0 %v3718
        %3763 = vmatprep.subr.bf16.mxu0 0
        %3764 = vmatpush1.bf16.msra.mxu0 %v3719
        %3765 = vmatprep.subr.bf16.mxu0 0
        %3766 = vmatpush1.bf16.msra.mxu0 %v3720
        %3767 = vmatprep.subr.bf16.mxu0 0
        %3768 = vmatpush1.bf16.msra.mxu0 %v3721
        %3769 = vmatprep.subr.bf16.mxu0 0
        %3770 = vmatpush1.bf16.msra.mxu0 %v3722
        %3771 = vmatprep.mubr.bf16.mxu0 %v3591
        %3772 = vmatmul.mubr.bf16.gmra.mrb[0].mxu0 %v3590
        %v3773 = vpop.f32.mrb[0].mxu0
        %v3774 = vadd.f32 %v3641, %v3773
        %v3775 = vpop.f32.mrb[0].mxu0
        %v3776 = vpop.f32.mrb[0].mxu0
        %v3777 = vadd.f32 %v3641, %v3776
        %v3778 = vpop.f32.mrb[0].mxu0
        %3779 = vmatprep.mubr.bf16.mxu0 %v3593
        %3780 = vmatmul.mubr.bf16.gmra.mrb[0].mxu0 %v3592
        %v3781 = vpop.f32.mrb[0].mxu0
        %v3782 = vadd.f32 %v3641, %v3781
        %v3783 = vpop.f32.mrb[0].mxu0
        %v3784 = vpop.f32.mrb[0].mxu0
        %v3785 = vadd.f32 %v3641, %v3784
        %v3786 = vpop.f32.mrb[0].mxu0
        %3787 = vmatprep.mubr.bf16.mxu0 %v3595
        %3788 = vmatmul.mubr.bf16.gmra.mrb[0].mxu0 %v3594
        %v3789 = vpop.f32.mrb[0].mxu0
        %v3790 = vadd.f32 %v3641, %v3789
        %v3791 = vpop.f32.mrb[0].mxu0
        %v3792 = vpop.f32.mrb[0].mxu0
        %v3793 = vadd.f32 %v3641, %v3792
        %v3794 = vpop.f32.mrb[0].mxu0
        %3795 = vmatprep.mubr.bf16.mxu0 %v3597
        %3796 = vmatmul.mubr.bf16.gmra.mrb[0].mxu0 %v3596
        %v3797 = vpop.f32.mrb[0].mxu0
        %v3798 = vadd.f32 %v3641, %v3797
        %v3799 = vpop.f32.mrb[0].mxu0
        %v3800 = vpop.f32.mrb[0].mxu0
        %v3801 = vadd.f32 %v3641, %v3800
        %v3802 = vpop.f32.mrb[0].mxu0
        %3803 = vmatprep.mubr.bf16.mxu0 %v3599
        %3804 = vmatmul.mubr.bf16.gmra.mrb[0].mxu0 %v3598
        %v3805 = vpop.f32.mrb[0].mxu0
        %v3806 = vadd.f32 %v3641, %v3805
        %v3807 = vpop.f32.mrb[0].mxu0
        %v3808 = vpop.f32.mrb[0].mxu0
        %v3809 = vadd.f32 %v3641, %v3808
        %v3810 = vpop.f32.mrb[0].mxu0
        %3811 = vmatprep.mubr.bf16.mxu0 %v3601
        %3812 = vmatmul.mubr.bf16.gmra.mrb[0].mxu0 %v3600
        %v3813 = vpop.f32.mrb[0].mxu0
        %v3814 = vadd.f32 %v3641, %v3813
        %v3815 = vpop.f32.mrb[0].mxu0
        %v3816 = vpop.f32.mrb[0].mxu0
        %v3817 = vadd.f32 %v3641, %v3816
        %v3818 = vpop.f32.mrb[0].mxu0
        %3819 = vmatprep.mubr.bf16.mxu0 %v3603
        %3820 = vmatmul.mubr.bf16.gmra.mrb[0].mxu0 %v3602
        %v3821 = vpop.f32.mrb[0].mxu0
        %v3822 = vadd.f32 %v3641, %v3821
        %v3823 = vpop.f32.mrb[0].mxu0
        %v3824 = vpop.f32.mrb[0].mxu0
        %v3825 = vpop.f32.mrb[0].mxu0
        %3826 = vdwg.mxu0
        %3827 = vst [vmem:[%s348] sm:$0xff] %v3774
        %3828 = vst [vmem:[%s348 + $0x8] sm:$0xff] %v3777
        %3829 = vst [vmem:[%s348 + $0x10] sm:$0xff] %v3782
        %3830 = vst [vmem:[%s348 + $0x18] sm:$0xff] %v3785
        %3831 = vst [vmem:[%s348 + $0x20] sm:$0xff] %v3790
        %3832 = vst [vmem:[%s348 + $0x28] sm:$0xff] %v3793
        %3833 = vst [vmem:[%s348 + $0x30] sm:$0xff] %v3798
        %3834 = vst [vmem:[%s348 + $0x38] sm:$0xff] %v3801
        %3835 = vst [vmem:[%s348 + $0x40] sm:$0xff] %v3806
        %3836 = vst [vmem:[%s348 + $0x48] sm:$0xff] %v3809
        %3837 = vst [vmem:[%s348 + $0x50] sm:$0xff] %v3814
        %3838 = vst [vmem:[%s348 + $0x58] sm:$0xff] %v3817
        %3839 = vst [vmem:[%s348 + $0x60] sm:$0xff] %v3822
        %s3840 = sand.u32 %s186, 1
        %s3841 = scalar_lea.sflag [#allocation4], %s3840
        %s3842 = sand.u32 %s186, 1
        %s3843 = smul.addr %s3842, 104
        %s3844 = scalar_lea.vmem [#allocation10], %s3843
        // Predicated region
        $region65: #{tpu_custom_call.1} parent=47 // pred_check
          %p3845 = pneg %p196
        $region66: #{tpu_custom_call.1} parent=47 // pred_check_branch
          %3847 = sbr.rel (%p3845) target = $region68
        $region67: #{tpu_custom_call.1} parent=47 // pred_region
          %s3848 = smul.u32 13, %s26
          %s3849 = ssub.s32 25, %s3848
          %p3850 = scmp.lt.s32.totalorder %s3849, 13
          %s3851 = scalar_select %p3850, %s3849, 13
          %s3852 = smul.u32 128, %s3851
          %s3854 = ssub.s32 1664, %s3852
          %3855 = vsyncadd %s3841, %s3854
          %p3856 = scmp.ne.s32.totalorder 0, %s3852
          %s3857 = smul.addr %s3848, 128
          %s3858 = scalar_lea.hbm %s7, %s3857
          %s3859 = smul.u32 8, %s3851
          %s3860 = sshll.u32 %s3844, 4
          %s3861 = int_to_ptr.vmem [resolvable:$true] %s3860
          %s3862 = sshll.u32 %s3859, 4
          %3866 = dma.vmem_to_hbm [thread:$0]  (%p3856), %s3861, %s3862, %s3858, %s3841, 128, 128, 8
        $region68: #{tpu_custom_call.1} parent=47 // pred_fallthru
          _
      $region48: #{tpu_custom_call.1} parent=5 // pred_fallthru
        _
      %p3867 = scmp.le.s32.totalorder 2, %s21
      // Predicated region
      $region69: #{tpu_custom_call.1} parent=5 // pred_check
        %p3868 = pneg %p3867
      $region70: #{tpu_custom_call.1} parent=5 // pred_check_branch
        %3870 = sbr.rel (%p3868) target = $region72
      $region71: #{tpu_custom_call.1} parent=5 // pred_region
        %s3871 = ssub.s32 %s21, 2
        // Predicated region
        $region73: #{tpu_custom_call.1} parent=71 // pred_check
          %p3872 = pneg %p202
        $region74: #{tpu_custom_call.1} parent=71 // pred_check_branch
          %3874 = sbr.rel (%p3872) target = $region76
        $region75: #{tpu_custom_call.1} parent=71 // pred_region
          %s3875 = sand.u32 %s187, 1
          %s3876 = scalar_lea.sflag [#allocation4], %s3875
          %s3877 = sand.u32 %s187, 1
          %s3878 = smul.addr %s3877, 104
          %s3879 = scalar_lea.vmem [#allocation10], %s3878
          %3880 = dma.done %s3876, 1664
        $region76: #{tpu_custom_call.1} parent=71 // pred_fallthru
          _
      $region72: #{tpu_custom_call.1} parent=5 // pred_fallthru
        _
    $region6: #{tpu_custom_call.1} parent=1 // loop_footer
      %s25 = sadd.s32 1, %s21
    $region7: #{tpu_custom_call.1} parent=1 // loop_footer_branch
      %20 = sbr.rel target = $region3
    $region8: #{tpu_custom_call.1} parent=1 // loop_exit
      _
    %3881 = vsyncpa [#allocation3], 1
    %s3882 = scalar_lea.sflag [#allocation3], 1
    %3883 = vsyncpa %s3882, 1
    %3884 = vsyncpa [#allocation6], 1
    %3885 = vsyncpa [#allocation9], 1
    %3886 = vsyncpa [#allocation4], 1
    %s3887 = scalar_lea.sflag [#allocation4], 1
    %3888 = vsyncpa %s3887, 1

</llo_original>
